<compile_context>
chip_gen: v5e
topology: v5e:2x2
jax: 0.10.0
libtpu: 0.0.40
codegen_flags: <defaults>
</compile_context>

<pallas_src>
import math
from typing import Dict, Optional

import jax
import jax.numpy as jnp
from jax import lax
from jax.experimental import pallas as pl
from jax.experimental.pallas import tpu as pltpu


# ----------------------------------------------------------------------------
# Tiling plan
# ----------------------------------------------------------------------------
_RUN = 8                              # ids per coalescing chunk (one (8, D) DMA when consecutive)
_ISSUE_UNROLL = 4                     # chunks unrolled per issue-loop iteration
_GROUP_ALIGN = _RUN * _ISSUE_UNROLL   # 32: rows-per-step is always a multiple of this
_MAX_GROUP = 1024                     # gathered rows per grid step
_NUM_SLOTS = 3                        # staging depth (prefetch distance = _NUM_SLOTS - 1)
_STAGE_BUDGET_BYTES = 8 * 1024 * 1024
_MAX_IDS_PER_CALL = 32768             # keep the scalar-prefetched id array inside SMEM budget


def _round_up(x: int, m: int) -> int:
    return (x + m - 1) // m * m


def _num_tensorcores() -> int:
    """Best-effort TensorCore count (v7x: 2); default 1 (v5e/v6e) when unknown."""
    try:
        info = pltpu.get_tpu_info()
    except Exception:
        return 1
    for name in ("num_cores", "core_count", "num_tensorcores", "tensorcore_count"):
        v = getattr(info, name, None)
        if isinstance(v, int) and not isinstance(v, bool) and v >= 1:
            return max(1, min(2, v))
    return 1


def _plan(n: int, in_row_bytes: int, out_row_bytes: int):
    """Rows-per-step g (multiple of _GROUP_ALIGN) and a (P, Q) grid; padded ids = P*Q*g."""
    per_row = _NUM_SLOTS * in_row_bytes + 2 * out_row_bytes  # staging slots + pipelined out block
    cap = (_STAGE_BUDGET_BYTES // max(per_row, 1)) // _GROUP_ALIGN * _GROUP_ALIGN
    cap = max(_GROUP_ALIGN, cap)
    g = min(_MAX_GROUP, cap, _round_up(max(n, 1), _GROUP_ALIGN))
    assert g % _GROUP_ALIGN == 0
    num_groups = -(-n // g)
    ncores = _num_tensorcores()
    grid_p = ncores if (ncores > 1 and num_groups >= 2 * ncores) else 1
    grid_q = -(-num_groups // grid_p)
    return g, grid_p, grid_q


# ----------------------------------------------------------------------------
# In-kernel gather machinery
# ----------------------------------------------------------------------------
def _issue_group(nid_ref, table_hbm, buf, sems, *, g, group_idx, slot):
    """Issue the DMAs gathering group `group_idx`'s g rows into staging slot `slot`.

    Ids are processed in chunks of _RUN; a chunk of consecutive ids is coalesced into a
    single (_RUN, D) copy, otherwise _RUN per-row copies are issued.  All copies signal
    sems[slot]; the total signalled bytes are g * D * itemsize either way, so one
    aggregate wait per slot is sufficient.
    """
    id_base = group_idx * g
    dst_base = slot * g

    def chunk(c, carry):
        i0 = id_base + c * _RUN
        d0 = dst_base + c * _RUN
        ids_k = [nid_ref[i0 + k] for k in range(_RUN)]     # SMEM scalar loads, reused below
        run = ids_k[1] == ids_k[0] + 1
        for k in range(2, _RUN):
            run = jnp.logical_and(run, ids_k[k] == ids_k[0] + k)

        @pl.when(run)
        def _():  # coalesced: one (_RUN, D) copy
            pltpu.make_async_copy(
                table_hbm.at[pl.ds(ids_k[0], _RUN), :],
                buf.at[pl.ds(d0, _RUN), :],
                sems.at[slot],
            ).start()

        @pl.when(jnp.logical_not(run))
        def _():  # fallback: per-row copies
            for k in range(_RUN):
                pltpu.make_async_copy(
                    table_hbm.at[pl.ds(ids_k[k], 1), :],
                    buf.at[pl.ds(d0 + k, 1), :],
                    sems.at[slot],
                ).start()

        return carry

    lax.fori_loop(0, g // _RUN, chunk, 0, unroll=_ISSUE_UNROLL)


def _gather_tile(nid_ref, table_hbm, buf, sems, *, g, grid_q):
    """Gather the current grid step's g rows into the staging buffer (cross-step
    prefetched, _NUM_SLOTS deep) and return the staging-row offset of the tile."""
    pi = pl.program_id(0)
    qi = pl.program_id(1)
    depth = _NUM_SLOTS

    # Prime: the first inner step of every outer ("parallel") chunk issues its first
    # depth-1 tiles, so the prefetch never crosses an outer-chunk boundary.
    @pl.when(qi == 0)
    def _():
        for s in range(min(depth - 1, grid_q)):
            _issue_group(nid_ref, table_hbm, buf, sems,
                         g=g, group_idx=pi * grid_q + s, slot=s)

    # Steady state: prefetch tile (qi + depth - 1) of the same outer chunk.
    if grid_q > depth - 1:
        @pl.when(qi + (depth - 1) < grid_q)
        def _():
            _issue_group(nid_ref, table_hbm, buf, sems,
                         g=g,
                         group_idx=pi * grid_q + qi + (depth - 1),
                         slot=(qi + (depth - 1)) % depth)

    # ONE aggregate wait for the current slot: the descriptor's byte count equals the sum
    # of that slot's issued copies (g * D * itemsize), however they were chunked.
    slot = qi % depth
    base = pl.multiple_of(slot * g, _RUN)
    cur = buf.at[pl.ds(base, g), :]
    pltpu.make_async_copy(cur, cur, sems.at[slot]).wait()
    return base


def _make_gather_kernel(g, grid_q):
    def kernel(nid_ref, table_hbm, out_ref, buf, sems):
        base = _gather_tile(nid_ref, table_hbm, buf, sems, g=g, grid_q=grid_q)
        # TODO(synk): for feat_dim < 128 this staging->out copy uses partial-lane stores;
        # it is a tiny fraction of the descriptor-bound step, so the lane-dense restaging
        # suggested by the review is left out to keep the copy (and prefetch) simple.
        out_ref[...] = buf[pl.ds(base, g), :]
    return kernel


def _make_gather_project_kernel(g, grid_q):
    def kernel(nid_ref, feat_hbm, w_ref, out_ref, buf, sems):
        base = _gather_tile(nid_ref, feat_hbm, buf, sems, g=g, grid_q=grid_q)
        rows = buf[pl.ds(base, g), :]
        # TODO(synk): on v6e/v7x a bf16 cast of rows/w (keeping the f32 accumulate) would
        # raise MXU rate; kept f32 to preserve the reference module's numerics (kernel is
        # gather-bound anyway).
        out_ref[...] = jnp.dot(
            rows, w_ref[...], preferred_element_type=jnp.float32
        ).astype(out_ref.dtype)
    return kernel


# ----------------------------------------------------------------------------
# pallas_call wrappers
# ----------------------------------------------------------------------------
def _compiler_params():
    return pltpu.CompilerParams(
        dimension_semantics=("parallel", "arbitrary"),
        vmem_limit_bytes=32 * 1024 * 1024,
    )


def _pad_ids(nids, padded_n):
    ids = jnp.zeros((padded_n,), jnp.int32)
    return ids.at[: nids.shape[0]].set(nids.astype(jnp.int32))


def _gather_rows_call(table: jax.Array, nids: jax.Array) -> jax.Array:
    n = int(nids.shape[0])
    feat_dim = int(table.shape[1])
    itemsize = table.dtype.itemsize
    g, grid_p, grid_q = _plan(n, feat_dim * itemsize, feat_dim * itemsize)
    padded_n = grid_p * grid_q * g
    ids = _pad_ids(nids, padded_n)

    out = pl.pallas_call(
        _make_gather_kernel(g, grid_q),
        out_shape=jax.ShapeDtypeStruct((padded_n, feat_dim), table.dtype),
        grid_spec=pltpu.PrefetchScalarGridSpec(
            num_scalar_prefetch=1,
            grid=(grid_p, grid_q),
            in_specs=[pl.BlockSpec(memory_space=pl.ANY)],          # table stays in HBM
            out_specs=pl.BlockSpec(
                (g, feat_dim), lambda pi, qi, ids_ref: (pi * grid_q + qi, 0)),
            scratch_shapes=[
                pltpu.VMEM((_NUM_SLOTS * g, feat_dim), table.dtype),
                pltpu.SemaphoreType.DMA((_NUM_SLOTS,)),
            ],
        ),
        compiler_params=_compiler_params(),
    )(ids, table)
    return out[:n]


def _gather_project_call(feats: jax.Array, nids: jax.Array, w: jax.Array) -> jax.Array:
    n = int(nids.shape[0])
    d_in = int(feats.shape[1])
    emb_size = int(w.shape[1])
    itemsize = feats.dtype.itemsize
    g, grid_p, grid_q = _plan(n, d_in * itemsize, emb_size * itemsize)
    padded_n = grid_p * grid_q * g
    ids = _pad_ids(nids, padded_n)

    out = pl.pallas_call(
        _make_gather_project_kernel(g, grid_q),
        out_shape=jax.ShapeDtypeStruct((padded_n, emb_size), feats.dtype),
        grid_spec=pltpu.PrefetchScalarGridSpec(
            num_scalar_prefetch=1,
            grid=(grid_p, grid_q),
            in_specs=[
                pl.BlockSpec(memory_space=pl.ANY),                               # feats in HBM
                pl.BlockSpec((d_in, emb_size), lambda pi, qi, ids_ref: (0, 0)),  # W resident
            ],
            out_specs=pl.BlockSpec(
                (g, emb_size), lambda pi, qi, ids_ref: (pi * grid_q + qi, 0)),
            scratch_shapes=[
                pltpu.VMEM((_NUM_SLOTS * g, d_in), feats.dtype),
                pltpu.SemaphoreType.DMA((_NUM_SLOTS,)),
            ],
        ),
        compiler_params=_compiler_params(),
    )(ids, feats, w)
    return out[:n]


def gather_rows(table: jax.Array, nids: jax.Array) -> jax.Array:
    """Pallas equivalent of table[nids] (embedding lookup / raw feature slice)."""
    n = int(nids.shape[0])
    if n == 0:
        return jnp.zeros((0, table.shape[1]), table.dtype)
    pieces = [_gather_rows_call(table, nids[s: s + _MAX_IDS_PER_CALL])
              for s in range(0, n, _MAX_IDS_PER_CALL)]
    return pieces[0] if len(pieces) == 1 else jnp.concatenate(pieces, axis=0)


def gather_project(feats: jax.Array, nids: jax.Array, w: jax.Array) -> jax.Array:
    """Pallas equivalent of feats[nids] @ w (feature projection path)."""
    n = int(nids.shape[0])
    if n == 0:
        return jnp.zeros((0, w.shape[1]), feats.dtype)
    pieces = [_gather_project_call(feats, nids[s: s + _MAX_IDS_PER_CALL], w)
              for s in range(0, n, _MAX_IDS_PER_CALL)]
    return pieces[0] if len(pieces) == 1 else jnp.concatenate(pieces, axis=0)


# ----------------------------------------------------------------------------
# Module wrapper (parameter setup is plain JAX "glue")
# ----------------------------------------------------------------------------
class RelGraphEmbedding:
    def __init__(
        self,
        embedding_size: int,
        num_nodes: Dict[str, int],
        node_feats: Dict[str, Optional[jax.Array]],
        node_feats_projection: bool = False,
        seed: int = 0,
    ):
        self._embedding_size = embedding_size
        self._node_feats = node_feats
        self._node_feats_projection = node_feats_projection
        self.node_embeddings: Dict[str, jax.Array] = {}
        self.embeddings: Dict[str, jax.Array] = {}

        # Fused embedding table: all "no input feature" node types share embedding_size,
        # so per-type lookups become one kernel launch over a concatenated table.
        self._emb_offsets: Dict[str, int] = {}
        emb_tables = []
        offset = 0

        key = jax.random.PRNGKey(seed)
        for ntype in sorted(num_nodes.keys()):
            key, sub = jax.random.split(key)
            if node_feats.get(ntype) is None:
                # nn.Embedding(num_nodes, embedding_size) with uniform_(-1, 1)
                table = jax.random.uniform(
                    sub, (num_nodes[ntype], embedding_size), jnp.float32, -1.0, 1.0
                )
                self.node_embeddings[ntype] = table
                self._emb_offsets[ntype] = offset
                offset += num_nodes[ntype]
                emb_tables.append(table)
            elif node_feats_projection:
                # nn.Parameter(input_size, embedding_size) with xavier_uniform_
                d_in = node_feats[ntype].shape[-1]
                limit = math.sqrt(6.0 / (d_in + embedding_size))
                self.embeddings[ntype] = jax.random.uniform(
                    sub, (d_in, embedding_size), jnp.float32, -limit, limit
                )
        self._emb_fused = jnp.concatenate(emb_tables, axis=0) if emb_tables else None
        # TODO(synk): bf16 tables would halve HBM traffic once the gather is BW-bound
        # (post-coalescing, mainly helps v5e); kept f32 to preserve reference numerics.

    def forward(self, in_nodes: Dict[str, jax.Array]) -> Dict[str, jax.Array]:
        # TODO(synk): the in_nodes=None fallback (all nodes of the DGL hetero graph) needs
        # the graph object and has no Pallas-relevant content; only the in_nodes path is done.
        x: Dict[str, jax.Array] = {}

        # Fused single-launch gather for all embedding-only node types.
        emb_types = [nt for nt in in_nodes if self._node_feats.get(nt) is None]
        if emb_types:
            ids = jnp.concatenate(
                [in_nodes[nt].astype(jnp.int32) + self._emb_offsets[nt] for nt in emb_types]
            )
            fused = gather_rows(self._emb_fused, ids)
            start = 0
            for nt in emb_types:
                cnt = int(in_nodes[nt].shape[0])
                x[nt] = fused[start:start + cnt]
                start += cnt

        # Node types with input features.
        for nt, nid in in_nodes.items():
            if self._node_feats.get(nt) is None:
                continue
            if self._node_feats_projection:
                x[nt] = gather_project(self._node_feats[nt], nid, self.embeddings[nt])
            else:
                x[nt] = gather_rows(self._node_feats[nt], nid)
        return x


# ----------------------------------------------------------------------------
# Demo / self-check
# ----------------------------------------------------------------------------
if __name__ == "__main__":
    key = jax.random.PRNGKey(0)
    embedding_size = 32

    # ogbn-mag-like hetero graph: "paper" has input features, the rest don't.
    num_nodes = {"paper": 64, "author": 48, "institution": 16, "field_of_study": 40}

    key, kf = jax.random.split(key)
    node_feats = {
        "paper": jax.random.normal(kf, (num_nodes["paper"], 16), jnp.float32),
        "author": None,
        "institution": None,
        "field_of_study": None,
    }

    model = RelGraphEmbedding(
        embedding_size=embedding_size,
        num_nodes=num_nodes,
        node_feats=node_feats,
        node_feats_projection=True,
        seed=0,
    )

    def reference(nid_dict):
        ref = {}
        for nt, nid in nid_dict.items():
            if node_feats[nt] is None:
                ref[nt] = model.node_embeddings[nt][nid]
            else:
                ref[nt] = jnp.dot(node_feats[nt][nid], model.embeddings[nt],
                                  precision=jax.lax.Precision.HIGHEST)
        return ref

    def check(out_dict, nid_dict):
        ok = True
        ref = reference(nid_dict)
        for nt, nid in nid_dict.items():
            assert out_dict[nt].shape == (nid.shape[0], embedding_size)
            assert out_dict[nt].dtype == jnp.float32
            if node_feats[nt] is None:
                ok &= bool(jnp.array_equal(out_dict[nt], ref[nt]))      # gathers are bit-exact
            else:
                err = jnp.linalg.norm(out_dict[nt] - ref[nt]) / jnp.maximum(
                    jnp.linalg.norm(ref[nt]), 1e-6)
                ok &= bool(err < 1e-2)                                   # matmul: precision-robust
        return ok

    # 1) random ids -> exercises the per-row DMA fallback path.
    in_nodes_rand = {}
    for ntype in sorted(num_nodes.keys()):
        key, ki = jax.random.split(key)
        in_nodes_rand[ntype] = jax.random.randint(ki, (8,), 0, num_nodes[ntype], jnp.int32)
    out_rand = model.forward(in_nodes_rand)
    out_rand = jax.tree_util.tree_map(jax.block_until_ready, out_rand)

    # 2) consecutive ids -> exercises the coalesced (8, D) DMA path.
    in_nodes_seq = {nt: jnp.arange(8, dtype=jnp.int32) % num_nodes[nt] for nt in num_nodes}
    out_seq = model.forward(in_nodes_seq)
    out_seq = jax.tree_util.tree_map(jax.block_until_ready, out_seq)

    if check(out_rand, in_nodes_rand) and check(out_seq, in_nodes_seq):
        print("KERNEL_OK")
</pallas_src>

<mosaic_0001>
module attributes {stable_mosaic.version = 11 : i64} {
  func.func @kernel(%arg0: i32, %arg1: i32, %arg2: memref<32xi32, #tpu.memory_space<smem>>, %arg3: memref<104x32xf32, #tpu.memory_space<any>>, %arg4: memref<32x32xf32, #tpu.memory_space<vmem>>, %arg5: memref<96x32xf32, #tpu.memory_space<vmem>>, %arg6: memref<3x!tpu.dma_semaphore, #tpu.memory_space<semaphore_mem>>) attributes {dimension_semantics = [#tpu.dimension_semantics<parallel>, #tpu.dimension_semantics<arbitrary>], iteration_bounds = array<i64: 1, 1>, scalar_prefetch = 1 : i64, scratch_operands = 2 : i64, tpu.core_type = #tpu.core_type<tc>, window_params = [{}, {transform_indices = @transform_1, window_bounds = array<i64: 32, 32>}]} {
    %c0_i32 = arith.constant 0 : i32
    %0 = arith.cmpi eq, %arg1, %c0_i32 : i32
    %1 = arith.extui %0 : i1 to i32
    %c0_i32_0 = arith.constant 0 : i32
    %2 = arith.cmpi ne, %1, %c0_i32_0 : i32
    scf.if %2 {
      %c1_i32_9 = arith.constant 1 : i32
      %22 = arith.muli %arg0, %c1_i32_9 : i32
      %c0_i32_10 = arith.constant 0 : i32
      %23 = arith.addi %22, %c0_i32_10 : i32
      %c32_i32_11 = arith.constant 32 : i32
      %24 = arith.muli %23, %c32_i32_11 : i32
      %c0_i32_12 = arith.constant 0 : i32
      %c8_i32 = arith.constant 8 : i32
      %25 = arith.muli %c0_i32_12, %c8_i32 : i32
      %26 = arith.addi %24, %25 : i32
      %c8_i32_13 = arith.constant 8 : i32
      %27 = arith.muli %c0_i32_12, %c8_i32_13 : i32
      %c0_i32_14 = arith.constant 0 : i32
      %28 = arith.addi %c0_i32_14, %27 : i32
      %c0_i32_15 = arith.constant 0 : i32
      %29 = arith.addi %26, %c0_i32_15 : i32
      %30 = arith.index_cast %29 : i32 to index
      %31 = memref.load %arg2[%30] : memref<32xi32, #tpu.memory_space<smem>>
      %c1_i32_16 = arith.constant 1 : i32
      %32 = arith.addi %26, %c1_i32_16 : i32
      %33 = arith.index_cast %32 : i32 to index
      %34 = memref.load %arg2[%33] : memref<32xi32, #tpu.memory_space<smem>>
      %c2_i32 = arith.constant 2 : i32
      %35 = arith.addi %26, %c2_i32 : i32
      %36 = arith.index_cast %35 : i32 to index
      %37 = memref.load %arg2[%36] : memref<32xi32, #tpu.memory_space<smem>>
      %c3_i32_17 = arith.constant 3 : i32
      %38 = arith.addi %26, %c3_i32_17 : i32
      %39 = arith.index_cast %38 : i32 to index
      %40 = memref.load %arg2[%39] : memref<32xi32, #tpu.memory_space<smem>>
      %c4_i32 = arith.constant 4 : i32
      %41 = arith.addi %26, %c4_i32 : i32
      %42 = arith.index_cast %41 : i32 to index
      %43 = memref.load %arg2[%42] : memref<32xi32, #tpu.memory_space<smem>>
      %c5_i32 = arith.constant 5 : i32
      %44 = arith.addi %26, %c5_i32 : i32
      %45 = arith.index_cast %44 : i32 to index
      %46 = memref.load %arg2[%45] : memref<32xi32, #tpu.memory_space<smem>>
      %c6_i32 = arith.constant 6 : i32
      %47 = arith.addi %26, %c6_i32 : i32
      %48 = arith.index_cast %47 : i32 to index
      %49 = memref.load %arg2[%48] : memref<32xi32, #tpu.memory_space<smem>>
      %c7_i32 = arith.constant 7 : i32
      %50 = arith.addi %26, %c7_i32 : i32
      %51 = arith.index_cast %50 : i32 to index
      %52 = memref.load %arg2[%51] : memref<32xi32, #tpu.memory_space<smem>>
      %c1_i32_18 = arith.constant 1 : i32
      %53 = arith.addi %31, %c1_i32_18 : i32
      %54 = arith.cmpi eq, %34, %53 : i32
      %c2_i32_19 = arith.constant 2 : i32
      %55 = arith.addi %31, %c2_i32_19 : i32
      %56 = arith.cmpi eq, %37, %55 : i32
      %57 = arith.andi %54, %56 : i1
      %c3_i32_20 = arith.constant 3 : i32
      %58 = arith.addi %31, %c3_i32_20 : i32
      %59 = arith.cmpi eq, %40, %58 : i32
      %60 = arith.andi %57, %59 : i1
      %c4_i32_21 = arith.constant 4 : i32
      %61 = arith.addi %31, %c4_i32_21 : i32
      %62 = arith.cmpi eq, %43, %61 : i32
      %63 = arith.andi %60, %62 : i1
      %c5_i32_22 = arith.constant 5 : i32
      %64 = arith.addi %31, %c5_i32_22 : i32
      %65 = arith.cmpi eq, %46, %64 : i32
      %66 = arith.andi %63, %65 : i1
      %c6_i32_23 = arith.constant 6 : i32
      %67 = arith.addi %31, %c6_i32_23 : i32
      %68 = arith.cmpi eq, %49, %67 : i32
      %69 = arith.andi %66, %68 : i1
      %c7_i32_24 = arith.constant 7 : i32
      %70 = arith.addi %31, %c7_i32_24 : i32
      %71 = arith.cmpi eq, %52, %70 : i32
      %72 = arith.andi %69, %71 : i1
      %73 = arith.extui %72 : i1 to i32
      %c0_i32_25 = arith.constant 0 : i32
      %74 = arith.cmpi ne, %73, %c0_i32_25 : i32
      scf.if %74 {
        %c0_i32_94 = arith.constant 0 : i32
        %c0_i32_95 = arith.constant 0 : i32
        %237 = tpu.memref_slice %arg3[%31, %c0_i32_95] : memref<104x32xf32, #tpu.memory_space<any>> -> memref<8x32xf32, #tpu.memory_space<any>>
        %c0_i32_96 = arith.constant 0 : i32
        %238 = tpu.memref_slice %arg5[%28, %c0_i32_96] : memref<96x32xf32, #tpu.memory_space<vmem>> -> memref<8x32xf32, #tpu.memory_space<vmem>>
        %239 = tpu.memref_slice %arg6[%c0_i32_94] : memref<3x!tpu.dma_semaphore, #tpu.memory_space<semaphore_mem>> -> memref<1x!tpu.dma_semaphore, #tpu.memory_space<semaphore_mem>>
        %240 = tpu.memref_squeeze %239 : memref<1x!tpu.dma_semaphore, #tpu.memory_space<semaphore_mem>> -> memref<!tpu.dma_semaphore, #tpu.memory_space<semaphore_mem>>
        tpu.enqueue_dma source(%237 : memref<8x32xf32, #tpu.memory_space<any>>) target(%238 : memref<8x32xf32, #tpu.memory_space<vmem>>) target_semaphore(%240 : memref<!tpu.dma_semaphore, #tpu.memory_space<semaphore_mem>>)
      } else {
      }
      %true = arith.constant true
      %75 = arith.xori %72, %true : i1
      %76 = arith.extui %75 : i1 to i32
      %c0_i32_26 = arith.constant 0 : i32
      %77 = arith.cmpi ne, %76, %c0_i32_26 : i32
      scf.if %77 {
        %c0_i32_94 = arith.constant 0 : i32
        %237 = arith.addi %28, %c0_i32_94 : i32
        %c0_i32_95 = arith.constant 0 : i32
        %c0_i32_96 = arith.constant 0 : i32
        %238 = tpu.memref_slice %arg3[%31, %c0_i32_96] : memref<104x32xf32, #tpu.memory_space<any>> -> memref<1x32xf32, #tpu.memory_space<any>>
        %c0_i32_97 = arith.constant 0 : i32
        %239 = tpu.memref_slice %arg5[%237, %c0_i32_97] : memref<96x32xf32, #tpu.memory_space<vmem>> -> memref<1x32xf32, #tpu.memory_space<vmem>>
        %240 = tpu.memref_slice %arg6[%c0_i32_95] : memref<3x!tpu.dma_semaphore, #tpu.memory_space<semaphore_mem>> -> memref<1x!tpu.dma_semaphore, #tpu.memory_space<semaphore_mem>>
        %241 = tpu.memref_squeeze %240 : memref<1x!tpu.dma_semaphore, #tpu.memory_space<semaphore_mem>> -> memref<!tpu.dma_semaphore, #tpu.memory_space<semaphore_mem>>
        tpu.enqueue_dma source(%238 : memref<1x32xf32, #tpu.memory_space<any>>) target(%239 : memref<1x32xf32, #tpu.memory_space<vmem>>) target_semaphore(%241 : memref<!tpu.dma_semaphore, #tpu.memory_space<semaphore_mem>>)
        %c1_i32_98 = arith.constant 1 : i32
        %242 = arith.addi %28, %c1_i32_98 : i32
        %c0_i32_99 = arith.constant 0 : i32
        %c0_i32_100 = arith.constant 0 : i32
        %243 = tpu.memref_slice %arg3[%34, %c0_i32_100] : memref<104x32xf32, #tpu.memory_space<any>> -> memref<1x32xf32, #tpu.memory_space<any>>
        %c0_i32_101 = arith.constant 0 : i32
        %244 = tpu.memref_slice %arg5[%242, %c0_i32_101] : memref<96x32xf32, #tpu.memory_space<vmem>> -> memref<1x32xf32, #tpu.memory_space<vmem>>
        %245 = tpu.memref_slice %arg6[%c0_i32_99] : memref<3x!tpu.dma_semaphore, #tpu.memory_space<semaphore_mem>> -> memref<1x!tpu.dma_semaphore, #tpu.memory_space<semaphore_mem>>
        %246 = tpu.memref_squeeze %245 : memref<1x!tpu.dma_semaphore, #tpu.memory_space<semaphore_mem>> -> memref<!tpu.dma_semaphore, #tpu.memory_space<semaphore_mem>>
        tpu.enqueue_dma source(%243 : memref<1x32xf32, #tpu.memory_space<any>>) target(%244 : memref<1x32xf32, #tpu.memory_space<vmem>>) target_semaphore(%246 : memref<!tpu.dma_semaphore, #tpu.memory_space<semaphore_mem>>)
        %c2_i32_102 = arith.constant 2 : i32
        %247 = arith.addi %28, %c2_i32_102 : i32
        %c0_i32_103 = arith.constant 0 : i32
        %c0_i32_104 = arith.constant 0 : i32
        %248 = tpu.memref_slice %arg3[%37, %c0_i32_104] : memref<104x32xf32, #tpu.memory_space<any>> -> memref<1x32xf32, #tpu.memory_space<any>>
        %c0_i32_105 = arith.constant 0 : i32
        %249 = tpu.memref_slice %arg5[%247, %c0_i32_105] : memref<96x32xf32, #tpu.memory_space<vmem>> -> memref<1x32xf32, #tpu.memory_space<vmem>>
        %250 = tpu.memref_slice %arg6[%c0_i32_103] : memref<3x!tpu.dma_semaphore, #tpu.memory_space<semaphore_mem>> -> memref<1x!tpu.dma_semaphore, #tpu.memory_space<semaphore_mem>>
        %251 = tpu.memref_squeeze %250 : memref<1x!tpu.dma_semaphore, #tpu.memory_space<semaphore_mem>> -> memref<!tpu.dma_semaphore, #tpu.memory_space<semaphore_mem>>
        tpu.enqueue_dma source(%248 : memref<1x32xf32, #tpu.memory_space<any>>) target(%249 : memref<1x32xf32, #tpu.memory_space<vmem>>) target_semaphore(%251 : memref<!tpu.dma_semaphore, #tpu.memory_space<semaphore_mem>>)
        %c3_i32_106 = arith.constant 3 : i32
        %252 = arith.addi %28, %c3_i32_106 : i32
        %c0_i32_107 = arith.constant 0 : i32
        %c0_i32_108 = arith.constant 0 : i32
        %253 = tpu.memref_slice %arg3[%40, %c0_i32_108] : memref<104x32xf32, #tpu.memory_space<any>> -> memref<1x32xf32, #tpu.memory_space<any>>
        %c0_i32_109 = arith.constant 0 : i32
        %254 = tpu.memref_slice %arg5[%252, %c0_i32_109] : memref<96x32xf32, #tpu.memory_space<vmem>> -> memref<1x32xf32, #tpu.memory_space<vmem>>
        %255 = tpu.memref_slice %arg6[%c0_i32_107] : memref<3x!tpu.dma_semaphore, #tpu.memory_space<semaphore_mem>> -> memref<1x!tpu.dma_semaphore, #tpu.memory_space<semaphore_mem>>
        %256 = tpu.memref_squeeze %255 : memref<1x!tpu.dma_semaphore, #tpu.memory_space<semaphore_mem>> -> memref<!tpu.dma_semaphore, #tpu.memory_space<semaphore_mem>>
        tpu.enqueue_dma source(%253 : memref<1x32xf32, #tpu.memory_space<any>>) target(%254 : memref<1x32xf32, #tpu.memory_space<vmem>>) target_semaphore(%256 : memref<!tpu.dma_semaphore, #tpu.memory_space<semaphore_mem>>)
        %c4_i32_110 = arith.constant 4 : i32
        %257 = arith.addi %28, %c4_i32_110 : i32
        %c0_i32_111 = arith.constant 0 : i32
        %c0_i32_112 = arith.constant 0 : i32
        %258 = tpu.memref_slice %arg3[%43, %c0_i32_112] : memref<104x32xf32, #tpu.memory_space<any>> -> memref<1x32xf32, #tpu.memory_space<any>>
        %c0_i32_113 = arith.constant 0 : i32
        %259 = tpu.memref_slice %arg5[%257, %c0_i32_113] : memref<96x32xf32, #tpu.memory_space<vmem>> -> memref<1x32xf32, #tpu.memory_space<vmem>>
        %260 = tpu.memref_slice %arg6[%c0_i32_111] : memref<3x!tpu.dma_semaphore, #tpu.memory_space<semaphore_mem>> -> memref<1x!tpu.dma_semaphore, #tpu.memory_space<semaphore_mem>>
        %261 = tpu.memref_squeeze %260 : memref<1x!tpu.dma_semaphore, #tpu.memory_space<semaphore_mem>> -> memref<!tpu.dma_semaphore, #tpu.memory_space<semaphore_mem>>
        tpu.enqueue_dma source(%258 : memref<1x32xf32, #tpu.memory_space<any>>) target(%259 : memref<1x32xf32, #tpu.memory_space<vmem>>) target_semaphore(%261 : memref<!tpu.dma_semaphore, #tpu.memory_space<semaphore_mem>>)
        %c5_i32_114 = arith.constant 5 : i32
        %262 = arith.addi %28, %c5_i32_114 : i32
        %c0_i32_115 = arith.constant 0 : i32
        %c0_i32_116 = arith.constant 0 : i32
        %263 = tpu.memref_slice %arg3[%46, %c0_i32_116] : memref<104x32xf32, #tpu.memory_space<any>> -> memref<1x32xf32, #tpu.memory_space<any>>
        %c0_i32_117 = arith.constant 0 : i32
        %264 = tpu.memref_slice %arg5[%262, %c0_i32_117] : memref<96x32xf32, #tpu.memory_space<vmem>> -> memref<1x32xf32, #tpu.memory_space<vmem>>
        %265 = tpu.memref_slice %arg6[%c0_i32_115] : memref<3x!tpu.dma_semaphore, #tpu.memory_space<semaphore_mem>> -> memref<1x!tpu.dma_semaphore, #tpu.memory_space<semaphore_mem>>
        %266 = tpu.memref_squeeze %265 : memref<1x!tpu.dma_semaphore, #tpu.memory_space<semaphore_mem>> -> memref<!tpu.dma_semaphore, #tpu.memory_space<semaphore_mem>>
        tpu.enqueue_dma source(%263 : memref<1x32xf32, #tpu.memory_space<any>>) target(%264 : memref<1x32xf32, #tpu.memory_space<vmem>>) target_semaphore(%266 : memref<!tpu.dma_semaphore, #tpu.memory_space<semaphore_mem>>)
        %c6_i32_118 = arith.constant 6 : i32
        %267 = arith.addi %28, %c6_i32_118 : i32
        %c0_i32_119 = arith.constant 0 : i32
        %c0_i32_120 = arith.constant 0 : i32
        %268 = tpu.memref_slice %arg3[%49, %c0_i32_120] : memref<104x32xf32, #tpu.memory_space<any>> -> memref<1x32xf32, #tpu.memory_space<any>>
        %c0_i32_121 = arith.constant 0 : i32
        %269 = tpu.memref_slice %arg5[%267, %c0_i32_121] : memref<96x32xf32, #tpu.memory_space<vmem>> -> memref<1x32xf32, #tpu.memory_space<vmem>>
        %270 = tpu.memref_slice %arg6[%c0_i32_119] : memref<3x!tpu.dma_semaphore, #tpu.memory_space<semaphore_mem>> -> memref<1x!tpu.dma_semaphore, #tpu.memory_space<semaphore_mem>>
        %271 = tpu.memref_squeeze %270 : memref<1x!tpu.dma_semaphore, #tpu.memory_space<semaphore_mem>> -> memref<!tpu.dma_semaphore, #tpu.memory_space<semaphore_mem>>
        tpu.enqueue_dma source(%268 : memref<1x32xf32, #tpu.memory_space<any>>) target(%269 : memref<1x32xf32, #tpu.memory_space<vmem>>) target_semaphore(%271 : memref<!tpu.dma_semaphore, #tpu.memory_space<semaphore_mem>>)
        %c7_i32_122 = arith.constant 7 : i32
        %272 = arith.addi %28, %c7_i32_122 : i32
        %c0_i32_123 = arith.constant 0 : i32
        %c0_i32_124 = arith.constant 0 : i32
        %273 = tpu.memref_slice %arg3[%52, %c0_i32_124] : memref<104x32xf32, #tpu.memory_space<any>> -> memref<1x32xf32, #tpu.memory_space<any>>
        %c0_i32_125 = arith.constant 0 : i32
        %274 = tpu.memref_slice %arg5[%272, %c0_i32_125] : memref<96x32xf32, #tpu.memory_space<vmem>> -> memref<1x32xf32, #tpu.memory_space<vmem>>
        %275 = tpu.memref_slice %arg6[%c0_i32_123] : memref<3x!tpu.dma_semaphore, #tpu.memory_space<semaphore_mem>> -> memref<1x!tpu.dma_semaphore, #tpu.memory_space<semaphore_mem>>
        %276 = tpu.memref_squeeze %275 : memref<1x!tpu.dma_semaphore, #tpu.memory_space<semaphore_mem>> -> memref<!tpu.dma_semaphore, #tpu.memory_space<semaphore_mem>>
        tpu.enqueue_dma source(%273 : memref<1x32xf32, #tpu.memory_space<any>>) target(%274 : memref<1x32xf32, #tpu.memory_space<vmem>>) target_semaphore(%276 : memref<!tpu.dma_semaphore, #tpu.memory_space<semaphore_mem>>)
      } else {
      }
      %c1_i32_27 = arith.constant 1 : i32
      %c8_i32_28 = arith.constant 8 : i32
      %78 = arith.muli %c1_i32_27, %c8_i32_28 : i32
      %79 = arith.addi %24, %78 : i32
      %c8_i32_29 = arith.constant 8 : i32
      %80 = arith.muli %c1_i32_27, %c8_i32_29 : i32
      %c0_i32_30 = arith.constant 0 : i32
      %81 = arith.addi %c0_i32_30, %80 : i32
      %c0_i32_31 = arith.constant 0 : i32
      %82 = arith.addi %79, %c0_i32_31 : i32
      %83 = arith.index_cast %82 : i32 to index
      %84 = memref.load %arg2[%83] : memref<32xi32, #tpu.memory_space<smem>>
      %c1_i32_32 = arith.constant 1 : i32
      %85 = arith.addi %79, %c1_i32_32 : i32
      %86 = arith.index_cast %85 : i32 to index
      %87 = memref.load %arg2[%86] : memref<32xi32, #tpu.memory_space<smem>>
      %c2_i32_33 = arith.constant 2 : i32
      %88 = arith.addi %79, %c2_i32_33 : i32
      %89 = arith.index_cast %88 : i32 to index
      %90 = memref.load %arg2[%89] : memref<32xi32, #tpu.memory_space<smem>>
      %c3_i32_34 = arith.constant 3 : i32
      %91 = arith.addi %79, %c3_i32_34 : i32
      %92 = arith.index_cast %91 : i32 to index
      %93 = memref.load %arg2[%92] : memref<32xi32, #tpu.memory_space<smem>>
      %c4_i32_35 = arith.constant 4 : i32
      %94 = arith.addi %79, %c4_i32_35 : i32
      %95 = arith.index_cast %94 : i32 to index
      %96 = memref.load %arg2[%95] : memref<32xi32, #tpu.memory_space<smem>>
      %c5_i32_36 = arith.constant 5 : i32
      %97 = arith.addi %79, %c5_i32_36 : i32
      %98 = arith.index_cast %97 : i32 to index
      %99 = memref.load %arg2[%98] : memref<32xi32, #tpu.memory_space<smem>>
      %c6_i32_37 = arith.constant 6 : i32
      %100 = arith.addi %79, %c6_i32_37 : i32
      %101 = arith.index_cast %100 : i32 to index
      %102 = memref.load %arg2[%101] : memref<32xi32, #tpu.memory_space<smem>>
      %c7_i32_38 = arith.constant 7 : i32
      %103 = arith.addi %79, %c7_i32_38 : i32
      %104 = arith.index_cast %103 : i32 to index
      %105 = memref.load %arg2[%104] : memref<32xi32, #tpu.memory_space<smem>>
      %c1_i32_39 = arith.constant 1 : i32
      %106 = arith.addi %84, %c1_i32_39 : i32
      %107 = arith.cmpi eq, %87, %106 : i32
      %c2_i32_40 = arith.constant 2 : i32
      %108 = arith.addi %84, %c2_i32_40 : i32
      %109 = arith.cmpi eq, %90, %108 : i32
      %110 = arith.andi %107, %109 : i1
      %c3_i32_41 = arith.constant 3 : i32
      %111 = arith.addi %84, %c3_i32_41 : i32
      %112 = arith.cmpi eq, %93, %111 : i32
      %113 = arith.andi %110, %112 : i1
      %c4_i32_42 = arith.constant 4 : i32
      %114 = arith.addi %84, %c4_i32_42 : i32
      %115 = arith.cmpi eq, %96, %114 : i32
      %116 = arith.andi %113, %115 : i1
      %c5_i32_43 = arith.constant 5 : i32
      %117 = arith.addi %84, %c5_i32_43 : i32
      %118 = arith.cmpi eq, %99, %117 : i32
      %119 = arith.andi %116, %118 : i1
      %c6_i32_44 = arith.constant 6 : i32
      %120 = arith.addi %84, %c6_i32_44 : i32
      %121 = arith.cmpi eq, %102, %120 : i32
      %122 = arith.andi %119, %121 : i1
      %c7_i32_45 = arith.constant 7 : i32
      %123 = arith.addi %84, %c7_i32_45 : i32
      %124 = arith.cmpi eq, %105, %123 : i32
      %125 = arith.andi %122, %124 : i1
      %126 = arith.extui %125 : i1 to i32
      %c0_i32_46 = arith.constant 0 : i32
      %127 = arith.cmpi ne, %126, %c0_i32_46 : i32
      scf.if %127 {
        %c0_i32_94 = arith.constant 0 : i32
        %c0_i32_95 = arith.constant 0 : i32
        %237 = tpu.memref_slice %arg3[%84, %c0_i32_95] : memref<104x32xf32, #tpu.memory_space<any>> -> memref<8x32xf32, #tpu.memory_space<any>>
        %c0_i32_96 = arith.constant 0 : i32
        %238 = tpu.memref_slice %arg5[%81, %c0_i32_96] : memref<96x32xf32, #tpu.memory_space<vmem>> -> memref<8x32xf32, #tpu.memory_space<vmem>>
        %239 = tpu.memref_slice %arg6[%c0_i32_94] : memref<3x!tpu.dma_semaphore, #tpu.memory_space<semaphore_mem>> -> memref<1x!tpu.dma_semaphore, #tpu.memory_space<semaphore_mem>>
        %240 = tpu.memref_squeeze %239 : memref<1x!tpu.dma_semaphore, #tpu.memory_space<semaphore_mem>> -> memref<!tpu.dma_semaphore, #tpu.memory_space<semaphore_mem>>
        tpu.enqueue_dma source(%237 : memref<8x32xf32, #tpu.memory_space<any>>) target(%238 : memref<8x32xf32, #tpu.memory_space<vmem>>) target_semaphore(%240 : memref<!tpu.dma_semaphore, #tpu.memory_space<semaphore_mem>>)
      } else {
      }
      %true_47 = arith.constant true
      %128 = arith.xori %125, %true_47 : i1
      %129 = arith.extui %128 : i1 to i32
      %c0_i32_48 = arith.constant 0 : i32
      %130 = arith.cmpi ne, %129, %c0_i32_48 : i32
      scf.if %130 {
        %c0_i32_94 = arith.constant 0 : i32
        %237 = arith.addi %81, %c0_i32_94 : i32
        %c0_i32_95 = arith.constant 0 : i32
        %c0_i32_96 = arith.constant 0 : i32
        %238 = tpu.memref_slice %arg3[%84, %c0_i32_96] : memref<104x32xf32, #tpu.memory_space<any>> -> memref<1x32xf32, #tpu.memory_space<any>>
        %c0_i32_97 = arith.constant 0 : i32
        %239 = tpu.memref_slice %arg5[%237, %c0_i32_97] : memref<96x32xf32, #tpu.memory_space<vmem>> -> memref<1x32xf32, #tpu.memory_space<vmem>>
        %240 = tpu.memref_slice %arg6[%c0_i32_95] : memref<3x!tpu.dma_semaphore, #tpu.memory_space<semaphore_mem>> -> memref<1x!tpu.dma_semaphore, #tpu.memory_space<semaphore_mem>>
        %241 = tpu.memref_squeeze %240 : memref<1x!tpu.dma_semaphore, #tpu.memory_space<semaphore_mem>> -> memref<!tpu.dma_semaphore, #tpu.memory_space<semaphore_mem>>
        tpu.enqueue_dma source(%238 : memref<1x32xf32, #tpu.memory_space<any>>) target(%239 : memref<1x32xf32, #tpu.memory_space<vmem>>) target_semaphore(%241 : memref<!tpu.dma_semaphore, #tpu.memory_space<semaphore_mem>>)
        %c1_i32_98 = arith.constant 1 : i32
        %242 = arith.addi %81, %c1_i32_98 : i32
        %c0_i32_99 = arith.constant 0 : i32
        %c0_i32_100 = arith.constant 0 : i32
        %243 = tpu.memref_slice %arg3[%87, %c0_i32_100] : memref<104x32xf32, #tpu.memory_space<any>> -> memref<1x32xf32, #tpu.memory_space<any>>
        %c0_i32_101 = arith.constant 0 : i32
        %244 = tpu.memref_slice %arg5[%242, %c0_i32_101] : memref<96x32xf32, #tpu.memory_space<vmem>> -> memref<1x32xf32, #tpu.memory_space<vmem>>
        %245 = tpu.memref_slice %arg6[%c0_i32_99] : memref<3x!tpu.dma_semaphore, #tpu.memory_space<semaphore_mem>> -> memref<1x!tpu.dma_semaphore, #tpu.memory_space<semaphore_mem>>
        %246 = tpu.memref_squeeze %245 : memref<1x!tpu.dma_semaphore, #tpu.memory_space<semaphore_mem>> -> memref<!tpu.dma_semaphore, #tpu.memory_space<semaphore_mem>>
        tpu.enqueue_dma source(%243 : memref<1x32xf32, #tpu.memory_space<any>>) target(%244 : memref<1x32xf32, #tpu.memory_space<vmem>>) target_semaphore(%246 : memref<!tpu.dma_semaphore, #tpu.memory_space<semaphore_mem>>)
        %c2_i32_102 = arith.constant 2 : i32
        %247 = arith.addi %81, %c2_i32_102 : i32
        %c0_i32_103 = arith.constant 0 : i32
        %c0_i32_104 = arith.constant 0 : i32
        %248 = tpu.memref_slice %arg3[%90, %c0_i32_104] : memref<104x32xf32, #tpu.memory_space<any>> -> memref<1x32xf32, #tpu.memory_space<any>>
        %c0_i32_105 = arith.constant 0 : i32
        %249 = tpu.memref_slice %arg5[%247, %c0_i32_105] : memref<96x32xf32, #tpu.memory_space<vmem>> -> memref<1x32xf32, #tpu.memory_space<vmem>>
        %250 = tpu.memref_slice %arg6[%c0_i32_103] : memref<3x!tpu.dma_semaphore, #tpu.memory_space<semaphore_mem>> -> memref<1x!tpu.dma_semaphore, #tpu.memory_space<semaphore_mem>>
        %251 = tpu.memref_squeeze %250 : memref<1x!tpu.dma_semaphore, #tpu.memory_space<semaphore_mem>> -> memref<!tpu.dma_semaphore, #tpu.memory_space<semaphore_mem>>
        tpu.enqueue_dma source(%248 : memref<1x32xf32, #tpu.memory_space<any>>) target(%249 : memref<1x32xf32, #tpu.memory_space<vmem>>) target_semaphore(%251 : memref<!tpu.dma_semaphore, #tpu.memory_space<semaphore_mem>>)
        %c3_i32_106 = arith.constant 3 : i32
        %252 = arith.addi %81, %c3_i32_106 : i32
        %c0_i32_107 = arith.constant 0 : i32
        %c0_i32_108 = arith.constant 0 : i32
        %253 = tpu.memref_slice %arg3[%93, %c0_i32_108] : memref<104x32xf32, #tpu.memory_space<any>> -> memref<1x32xf32, #tpu.memory_space<any>>
        %c0_i32_109 = arith.constant 0 : i32
        %254 = tpu.memref_slice %arg5[%252, %c0_i32_109] : memref<96x32xf32, #tpu.memory_space<vmem>> -> memref<1x32xf32, #tpu.memory_space<vmem>>
        %255 = tpu.memref_slice %arg6[%c0_i32_107] : memref<3x!tpu.dma_semaphore, #tpu.memory_space<semaphore_mem>> -> memref<1x!tpu.dma_semaphore, #tpu.memory_space<semaphore_mem>>
        %256 = tpu.memref_squeeze %255 : memref<1x!tpu.dma_semaphore, #tpu.memory_space<semaphore_mem>> -> memref<!tpu.dma_semaphore, #tpu.memory_space<semaphore_mem>>
        tpu.enqueue_dma source(%253 : memref<1x32xf32, #tpu.memory_space<any>>) target(%254 : memref<1x32xf32, #tpu.memory_space<vmem>>) target_semaphore(%256 : memref<!tpu.dma_semaphore, #tpu.memory_space<semaphore_mem>>)
        %c4_i32_110 = arith.constant 4 : i32
        %257 = arith.addi %81, %c4_i32_110 : i32
        %c0_i32_111 = arith.constant 0 : i32
        %c0_i32_112 = arith.constant 0 : i32
        %258 = tpu.memref_slice %arg3[%96, %c0_i32_112] : memref<104x32xf32, #tpu.memory_space<any>> -> memref<1x32xf32, #tpu.memory_space<any>>
        %c0_i32_113 = arith.constant 0 : i32
        %259 = tpu.memref_slice %arg5[%257, %c0_i32_113] : memref<96x32xf32, #tpu.memory_space<vmem>> -> memref<1x32xf32, #tpu.memory_space<vmem>>
        %260 = tpu.memref_slice %arg6[%c0_i32_111] : memref<3x!tpu.dma_semaphore, #tpu.memory_space<semaphore_mem>> -> memref<1x!tpu.dma_semaphore, #tpu.memory_space<semaphore_mem>>
        %261 = tpu.memref_squeeze %260 : memref<1x!tpu.dma_semaphore, #tpu.memory_space<semaphore_mem>> -> memref<!tpu.dma_semaphore, #tpu.memory_space<semaphore_mem>>
        tpu.enqueue_dma source(%258 : memref<1x32xf32, #tpu.memory_space<any>>) target(%259 : memref<1x32xf32, #tpu.memory_space<vmem>>) target_semaphore(%261 : memref<!tpu.dma_semaphore, #tpu.memory_space<semaphore_mem>>)
        %c5_i32_114 = arith.constant 5 : i32
        %262 = arith.addi %81, %c5_i32_114 : i32
        %c0_i32_115 = arith.constant 0 : i32
        %c0_i32_116 = arith.constant 0 : i32
        %263 = tpu.memref_slice %arg3[%99, %c0_i32_116] : memref<104x32xf32, #tpu.memory_space<any>> -> memref<1x32xf32, #tpu.memory_space<any>>
        %c0_i32_117 = arith.constant 0 : i32
        %264 = tpu.memref_slice %arg5[%262, %c0_i32_117] : memref<96x32xf32, #tpu.memory_space<vmem>> -> memref<1x32xf32, #tpu.memory_space<vmem>>
        %265 = tpu.memref_slice %arg6[%c0_i32_115] : memref<3x!tpu.dma_semaphore, #tpu.memory_space<semaphore_mem>> -> memref<1x!tpu.dma_semaphore, #tpu.memory_space<semaphore_mem>>
        %266 = tpu.memref_squeeze %265 : memref<1x!tpu.dma_semaphore, #tpu.memory_space<semaphore_mem>> -> memref<!tpu.dma_semaphore, #tpu.memory_space<semaphore_mem>>
        tpu.enqueue_dma source(%263 : memref<1x32xf32, #tpu.memory_space<any>>) target(%264 : memref<1x32xf32, #tpu.memory_space<vmem>>) target_semaphore(%266 : memref<!tpu.dma_semaphore, #tpu.memory_space<semaphore_mem>>)
        %c6_i32_118 = arith.constant 6 : i32
        %267 = arith.addi %81, %c6_i32_118 : i32
        %c0_i32_119 = arith.constant 0 : i32
        %c0_i32_120 = arith.constant 0 : i32
        %268 = tpu.memref_slice %arg3[%102, %c0_i32_120] : memref<104x32xf32, #tpu.memory_space<any>> -> memref<1x32xf32, #tpu.memory_space<any>>
        %c0_i32_121 = arith.constant 0 : i32
        %269 = tpu.memref_slice %arg5[%267, %c0_i32_121] : memref<96x32xf32, #tpu.memory_space<vmem>> -> memref<1x32xf32, #tpu.memory_space<vmem>>
        %270 = tpu.memref_slice %arg6[%c0_i32_119] : memref<3x!tpu.dma_semaphore, #tpu.memory_space<semaphore_mem>> -> memref<1x!tpu.dma_semaphore, #tpu.memory_space<semaphore_mem>>
        %271 = tpu.memref_squeeze %270 : memref<1x!tpu.dma_semaphore, #tpu.memory_space<semaphore_mem>> -> memref<!tpu.dma_semaphore, #tpu.memory_space<semaphore_mem>>
        tpu.enqueue_dma source(%268 : memref<1x32xf32, #tpu.memory_space<any>>) target(%269 : memref<1x32xf32, #tpu.memory_space<vmem>>) target_semaphore(%271 : memref<!tpu.dma_semaphore, #tpu.memory_space<semaphore_mem>>)
        %c7_i32_122 = arith.constant 7 : i32
        %272 = arith.addi %81, %c7_i32_122 : i32
        %c0_i32_123 = arith.constant 0 : i32
        %c0_i32_124 = arith.constant 0 : i32
        %273 = tpu.memref_slice %arg3[%105, %c0_i32_124] : memref<104x32xf32, #tpu.memory_space<any>> -> memref<1x32xf32, #tpu.memory_space<any>>
        %c0_i32_125 = arith.constant 0 : i32
        %274 = tpu.memref_slice %arg5[%272, %c0_i32_125] : memref<96x32xf32, #tpu.memory_space<vmem>> -> memref<1x32xf32, #tpu.memory_space<vmem>>
        %275 = tpu.memref_slice %arg6[%c0_i32_123] : memref<3x!tpu.dma_semaphore, #tpu.memory_space<semaphore_mem>> -> memref<1x!tpu.dma_semaphore, #tpu.memory_space<semaphore_mem>>
        %276 = tpu.memref_squeeze %275 : memref<1x!tpu.dma_semaphore, #tpu.memory_space<semaphore_mem>> -> memref<!tpu.dma_semaphore, #tpu.memory_space<semaphore_mem>>
        tpu.enqueue_dma source(%273 : memref<1x32xf32, #tpu.memory_space<any>>) target(%274 : memref<1x32xf32, #tpu.memory_space<vmem>>) target_semaphore(%276 : memref<!tpu.dma_semaphore, #tpu.memory_space<semaphore_mem>>)
      } else {
      }
      %c2_i32_49 = arith.constant 2 : i32
      %c8_i32_50 = arith.constant 8 : i32
      %131 = arith.muli %c2_i32_49, %c8_i32_50 : i32
      %132 = arith.addi %24, %131 : i32
      %c8_i32_51 = arith.constant 8 : i32
      %133 = arith.muli %c2_i32_49, %c8_i32_51 : i32
      %c0_i32_52 = arith.constant 0 : i32
      %134 = arith.addi %c0_i32_52, %133 : i32
      %c0_i32_53 = arith.constant 0 : i32
      %135 = arith.addi %132, %c0_i32_53 : i32
      %136 = arith.index_cast %135 : i32 to index
      %137 = memref.load %arg2[%136] : memref<32xi32, #tpu.memory_space<smem>>
      %c1_i32_54 = arith.constant 1 : i32
      %138 = arith.addi %132, %c1_i32_54 : i32
      %139 = arith.index_cast %138 : i32 to index
      %140 = memref.load %arg2[%139] : memref<32xi32, #tpu.memory_space<smem>>
      %c2_i32_55 = arith.constant 2 : i32
      %141 = arith.addi %132, %c2_i32_55 : i32
      %142 = arith.index_cast %141 : i32 to index
      %143 = memref.load %arg2[%142] : memref<32xi32, #tpu.memory_space<smem>>
      %c3_i32_56 = arith.constant 3 : i32
      %144 = arith.addi %132, %c3_i32_56 : i32
      %145 = arith.index_cast %144 : i32 to index
      %146 = memref.load %arg2[%145] : memref<32xi32, #tpu.memory_space<smem>>
      %c4_i32_57 = arith.constant 4 : i32
      %147 = arith.addi %132, %c4_i32_57 : i32
      %148 = arith.index_cast %147 : i32 to index
      %149 = memref.load %arg2[%148] : memref<32xi32, #tpu.memory_space<smem>>
      %c5_i32_58 = arith.constant 5 : i32
      %150 = arith.addi %132, %c5_i32_58 : i32
      %151 = arith.index_cast %150 : i32 to index
      %152 = memref.load %arg2[%151] : memref<32xi32, #tpu.memory_space<smem>>
      %c6_i32_59 = arith.constant 6 : i32
      %153 = arith.addi %132, %c6_i32_59 : i32
      %154 = arith.index_cast %153 : i32 to index
      %155 = memref.load %arg2[%154] : memref<32xi32, #tpu.memory_space<smem>>
      %c7_i32_60 = arith.constant 7 : i32
      %156 = arith.addi %132, %c7_i32_60 : i32
      %157 = arith.index_cast %156 : i32 to index
      %158 = memref.load %arg2[%157] : memref<32xi32, #tpu.memory_space<smem>>
      %c1_i32_61 = arith.constant 1 : i32
      %159 = arith.addi %137, %c1_i32_61 : i32
      %160 = arith.cmpi eq, %140, %159 : i32
      %c2_i32_62 = arith.constant 2 : i32
      %161 = arith.addi %137, %c2_i32_62 : i32
      %162 = arith.cmpi eq, %143, %161 : i32
      %163 = arith.andi %160, %162 : i1
      %c3_i32_63 = arith.constant 3 : i32
      %164 = arith.addi %137, %c3_i32_63 : i32
      %165 = arith.cmpi eq, %146, %164 : i32
      %166 = arith.andi %163, %165 : i1
      %c4_i32_64 = arith.constant 4 : i32
      %167 = arith.addi %137, %c4_i32_64 : i32
      %168 = arith.cmpi eq, %149, %167 : i32
      %169 = arith.andi %166, %168 : i1
      %c5_i32_65 = arith.constant 5 : i32
      %170 = arith.addi %137, %c5_i32_65 : i32
      %171 = arith.cmpi eq, %152, %170 : i32
      %172 = arith.andi %169, %171 : i1
      %c6_i32_66 = arith.constant 6 : i32
      %173 = arith.addi %137, %c6_i32_66 : i32
      %174 = arith.cmpi eq, %155, %173 : i32
      %175 = arith.andi %172, %174 : i1
      %c7_i32_67 = arith.constant 7 : i32
      %176 = arith.addi %137, %c7_i32_67 : i32
      %177 = arith.cmpi eq, %158, %176 : i32
      %178 = arith.andi %175, %177 : i1
      %179 = arith.extui %178 : i1 to i32
      %c0_i32_68 = arith.constant 0 : i32
      %180 = arith.cmpi ne, %179, %c0_i32_68 : i32
      scf.if %180 {
        %c0_i32_94 = arith.constant 0 : i32
        %c0_i32_95 = arith.constant 0 : i32
        %237 = tpu.memref_slice %arg3[%137, %c0_i32_95] : memref<104x32xf32, #tpu.memory_space<any>> -> memref<8x32xf32, #tpu.memory_space<any>>
        %c0_i32_96 = arith.constant 0 : i32
        %238 = tpu.memref_slice %arg5[%134, %c0_i32_96] : memref<96x32xf32, #tpu.memory_space<vmem>> -> memref<8x32xf32, #tpu.memory_space<vmem>>
        %239 = tpu.memref_slice %arg6[%c0_i32_94] : memref<3x!tpu.dma_semaphore, #tpu.memory_space<semaphore_mem>> -> memref<1x!tpu.dma_semaphore, #tpu.memory_space<semaphore_mem>>
        %240 = tpu.memref_squeeze %239 : memref<1x!tpu.dma_semaphore, #tpu.memory_space<semaphore_mem>> -> memref<!tpu.dma_semaphore, #tpu.memory_space<semaphore_mem>>
        tpu.enqueue_dma source(%237 : memref<8x32xf32, #tpu.memory_space<any>>) target(%238 : memref<8x32xf32, #tpu.memory_space<vmem>>) target_semaphore(%240 : memref<!tpu.dma_semaphore, #tpu.memory_space<semaphore_mem>>)
      } else {
      }
      %true_69 = arith.constant true
      %181 = arith.xori %178, %true_69 : i1
      %182 = arith.extui %181 : i1 to i32
      %c0_i32_70 = arith.constant 0 : i32
      %183 = arith.cmpi ne, %182, %c0_i32_70 : i32
      scf.if %183 {
        %c0_i32_94 = arith.constant 0 : i32
        %237 = arith.addi %134, %c0_i32_94 : i32
        %c0_i32_95 = arith.constant 0 : i32
        %c0_i32_96 = arith.constant 0 : i32
        %238 = tpu.memref_slice %arg3[%137, %c0_i32_96] : memref<104x32xf32, #tpu.memory_space<any>> -> memref<1x32xf32, #tpu.memory_space<any>>
        %c0_i32_97 = arith.constant 0 : i32
        %239 = tpu.memref_slice %arg5[%237, %c0_i32_97] : memref<96x32xf32, #tpu.memory_space<vmem>> -> memref<1x32xf32, #tpu.memory_space<vmem>>
        %240 = tpu.memref_slice %arg6[%c0_i32_95] : memref<3x!tpu.dma_semaphore, #tpu.memory_space<semaphore_mem>> -> memref<1x!tpu.dma_semaphore, #tpu.memory_space<semaphore_mem>>
        %241 = tpu.memref_squeeze %240 : memref<1x!tpu.dma_semaphore, #tpu.memory_space<semaphore_mem>> -> memref<!tpu.dma_semaphore, #tpu.memory_space<semaphore_mem>>
        tpu.enqueue_dma source(%238 : memref<1x32xf32, #tpu.memory_space<any>>) target(%239 : memref<1x32xf32, #tpu.memory_space<vmem>>) target_semaphore(%241 : memref<!tpu.dma_semaphore, #tpu.memory_space<semaphore_mem>>)
        %c1_i32_98 = arith.constant 1 : i32
        %242 = arith.addi %134, %c1_i32_98 : i32
        %c0_i32_99 = arith.constant 0 : i32
        %c0_i32_100 = arith.constant 0 : i32
        %243 = tpu.memref_slice %arg3[%140, %c0_i32_100] : memref<104x32xf32, #tpu.memory_space<any>> -> memref<1x32xf32, #tpu.memory_space<any>>
        %c0_i32_101 = arith.constant 0 : i32
        %244 = tpu.memref_slice %arg5[%242, %c0_i32_101] : memref<96x32xf32, #tpu.memory_space<vmem>> -> memref<1x32xf32, #tpu.memory_space<vmem>>
        %245 = tpu.memref_slice %arg6[%c0_i32_99] : memref<3x!tpu.dma_semaphore, #tpu.memory_space<semaphore_mem>> -> memref<1x!tpu.dma_semaphore, #tpu.memory_space<semaphore_mem>>
        %246 = tpu.memref_squeeze %245 : memref<1x!tpu.dma_semaphore, #tpu.memory_space<semaphore_mem>> -> memref<!tpu.dma_semaphore, #tpu.memory_space<semaphore_mem>>
        tpu.enqueue_dma source(%243 : memref<1x32xf32, #tpu.memory_space<any>>) target(%244 : memref<1x32xf32, #tpu.memory_space<vmem>>) target_semaphore(%246 : memref<!tpu.dma_semaphore, #tpu.memory_space<semaphore_mem>>)
        %c2_i32_102 = arith.constant 2 : i32
        %247 = arith.addi %134, %c2_i32_102 : i32
        %c0_i32_103 = arith.constant 0 : i32
        %c0_i32_104 = arith.constant 0 : i32
        %248 = tpu.memref_slice %arg3[%143, %c0_i32_104] : memref<104x32xf32, #tpu.memory_space<any>> -> memref<1x32xf32, #tpu.memory_space<any>>
        %c0_i32_105 = arith.constant 0 : i32
        %249 = tpu.memref_slice %arg5[%247, %c0_i32_105] : memref<96x32xf32, #tpu.memory_space<vmem>> -> memref<1x32xf32, #tpu.memory_space<vmem>>
        %250 = tpu.memref_slice %arg6[%c0_i32_103] : memref<3x!tpu.dma_semaphore, #tpu.memory_space<semaphore_mem>> -> memref<1x!tpu.dma_semaphore, #tpu.memory_space<semaphore_mem>>
        %251 = tpu.memref_squeeze %250 : memref<1x!tpu.dma_semaphore, #tpu.memory_space<semaphore_mem>> -> memref<!tpu.dma_semaphore, #tpu.memory_space<semaphore_mem>>
        tpu.enqueue_dma source(%248 : memref<1x32xf32, #tpu.memory_space<any>>) target(%249 : memref<1x32xf32, #tpu.memory_space<vmem>>) target_semaphore(%251 : memref<!tpu.dma_semaphore, #tpu.memory_space<semaphore_mem>>)
        %c3_i32_106 = arith.constant 3 : i32
        %252 = arith.addi %134, %c3_i32_106 : i32
        %c0_i32_107 = arith.constant 0 : i32
        %c0_i32_108 = arith.constant 0 : i32
        %253 = tpu.memref_slice %arg3[%146, %c0_i32_108] : memref<104x32xf32, #tpu.memory_space<any>> -> memref<1x32xf32, #tpu.memory_space<any>>
        %c0_i32_109 = arith.constant 0 : i32
        %254 = tpu.memref_slice %arg5[%252, %c0_i32_109] : memref<96x32xf32, #tpu.memory_space<vmem>> -> memref<1x32xf32, #tpu.memory_space<vmem>>
        %255 = tpu.memref_slice %arg6[%c0_i32_107] : memref<3x!tpu.dma_semaphore, #tpu.memory_space<semaphore_mem>> -> memref<1x!tpu.dma_semaphore, #tpu.memory_space<semaphore_mem>>
        %256 = tpu.memref_squeeze %255 : memref<1x!tpu.dma_semaphore, #tpu.memory_space<semaphore_mem>> -> memref<!tpu.dma_semaphore, #tpu.memory_space<semaphore_mem>>
        tpu.enqueue_dma source(%253 : memref<1x32xf32, #tpu.memory_space<any>>) target(%254 : memref<1x32xf32, #tpu.memory_space<vmem>>) target_semaphore(%256 : memref<!tpu.dma_semaphore, #tpu.memory_space<semaphore_mem>>)
        %c4_i32_110 = arith.constant 4 : i32
        %257 = arith.addi %134, %c4_i32_110 : i32
        %c0_i32_111 = arith.constant 0 : i32
        %c0_i32_112 = arith.constant 0 : i32
        %258 = tpu.memref_slice %arg3[%149, %c0_i32_112] : memref<104x32xf32, #tpu.memory_space<any>> -> memref<1x32xf32, #tpu.memory_space<any>>
        %c0_i32_113 = arith.constant 0 : i32
        %259 = tpu.memref_slice %arg5[%257, %c0_i32_113] : memref<96x32xf32, #tpu.memory_space<vmem>> -> memref<1x32xf32, #tpu.memory_space<vmem>>
        %260 = tpu.memref_slice %arg6[%c0_i32_111] : memref<3x!tpu.dma_semaphore, #tpu.memory_space<semaphore_mem>> -> memref<1x!tpu.dma_semaphore, #tpu.memory_space<semaphore_mem>>
        %261 = tpu.memref_squeeze %260 : memref<1x!tpu.dma_semaphore, #tpu.memory_space<semaphore_mem>> -> memref<!tpu.dma_semaphore, #tpu.memory_space<semaphore_mem>>
        tpu.enqueue_dma source(%258 : memref<1x32xf32, #tpu.memory_space<any>>) target(%259 : memref<1x32xf32, #tpu.memory_space<vmem>>) target_semaphore(%261 : memref<!tpu.dma_semaphore, #tpu.memory_space<semaphore_mem>>)
        %c5_i32_114 = arith.constant 5 : i32
        %262 = arith.addi %134, %c5_i32_114 : i32
        %c0_i32_115 = arith.constant 0 : i32
        %c0_i32_116 = arith.constant 0 : i32
        %263 = tpu.memref_slice %arg3[%152, %c0_i32_116] : memref<104x32xf32, #tpu.memory_space<any>> -> memref<1x32xf32, #tpu.memory_space<any>>
        %c0_i32_117 = arith.constant 0 : i32
        %264 = tpu.memref_slice %arg5[%262, %c0_i32_117] : memref<96x32xf32, #tpu.memory_space<vmem>> -> memref<1x32xf32, #tpu.memory_space<vmem>>
        %265 = tpu.memref_slice %arg6[%c0_i32_115] : memref<3x!tpu.dma_semaphore, #tpu.memory_space<semaphore_mem>> -> memref<1x!tpu.dma_semaphore, #tpu.memory_space<semaphore_mem>>
        %266 = tpu.memref_squeeze %265 : memref<1x!tpu.dma_semaphore, #tpu.memory_space<semaphore_mem>> -> memref<!tpu.dma_semaphore, #tpu.memory_space<semaphore_mem>>
        tpu.enqueue_dma source(%263 : memref<1x32xf32, #tpu.memory_space<any>>) target(%264 : memref<1x32xf32, #tpu.memory_space<vmem>>) target_semaphore(%266 : memref<!tpu.dma_semaphore, #tpu.memory_space<semaphore_mem>>)
        %c6_i32_118 = arith.constant 6 : i32
        %267 = arith.addi %134, %c6_i32_118 : i32
        %c0_i32_119 = arith.constant 0 : i32
        %c0_i32_120 = arith.constant 0 : i32
        %268 = tpu.memref_slice %arg3[%155, %c0_i32_120] : memref<104x32xf32, #tpu.memory_space<any>> -> memref<1x32xf32, #tpu.memory_space<any>>
        %c0_i32_121 = arith.constant 0 : i32
        %269 = tpu.memref_slice %arg5[%267, %c0_i32_121] : memref<96x32xf32, #tpu.memory_space<vmem>> -> memref<1x32xf32, #tpu.memory_space<vmem>>
        %270 = tpu.memref_slice %arg6[%c0_i32_119] : memref<3x!tpu.dma_semaphore, #tpu.memory_space<semaphore_mem>> -> memref<1x!tpu.dma_semaphore, #tpu.memory_space<semaphore_mem>>
        %271 = tpu.memref_squeeze %270 : memref<1x!tpu.dma_semaphore, #tpu.memory_space<semaphore_mem>> -> memref<!tpu.dma_semaphore, #tpu.memory_space<semaphore_mem>>
        tpu.enqueue_dma source(%268 : memref<1x32xf32, #tpu.memory_space<any>>) target(%269 : memref<1x32xf32, #tpu.memory_space<vmem>>) target_semaphore(%271 : memref<!tpu.dma_semaphore, #tpu.memory_space<semaphore_mem>>)
        %c7_i32_122 = arith.constant 7 : i32
        %272 = arith.addi %134, %c7_i32_122 : i32
        %c0_i32_123 = arith.constant 0 : i32
        %c0_i32_124 = arith.constant 0 : i32
        %273 = tpu.memref_slice %arg3[%158, %c0_i32_124] : memref<104x32xf32, #tpu.memory_space<any>> -> memref<1x32xf32, #tpu.memory_space<any>>
        %c0_i32_125 = arith.constant 0 : i32
        %274 = tpu.memref_slice %arg5[%272, %c0_i32_125] : memref<96x32xf32, #tpu.memory_space<vmem>> -> memref<1x32xf32, #tpu.memory_space<vmem>>
        %275 = tpu.memref_slice %arg6[%c0_i32_123] : memref<3x!tpu.dma_semaphore, #tpu.memory_space<semaphore_mem>> -> memref<1x!tpu.dma_semaphore, #tpu.memory_space<semaphore_mem>>
        %276 = tpu.memref_squeeze %275 : memref<1x!tpu.dma_semaphore, #tpu.memory_space<semaphore_mem>> -> memref<!tpu.dma_semaphore, #tpu.memory_space<semaphore_mem>>
        tpu.enqueue_dma source(%273 : memref<1x32xf32, #tpu.memory_space<any>>) target(%274 : memref<1x32xf32, #tpu.memory_space<vmem>>) target_semaphore(%276 : memref<!tpu.dma_semaphore, #tpu.memory_space<semaphore_mem>>)
      } else {
      }
      %c3_i32_71 = arith.constant 3 : i32
      %c8_i32_72 = arith.constant 8 : i32
      %184 = arith.muli %c3_i32_71, %c8_i32_72 : i32
      %185 = arith.addi %24, %184 : i32
      %c8_i32_73 = arith.constant 8 : i32
      %186 = arith.muli %c3_i32_71, %c8_i32_73 : i32
      %c0_i32_74 = arith.constant 0 : i32
      %187 = arith.addi %c0_i32_74, %186 : i32
      %c0_i32_75 = arith.constant 0 : i32
      %188 = arith.addi %185, %c0_i32_75 : i32
      %189 = arith.index_cast %188 : i32 to index
      %190 = memref.load %arg2[%189] : memref<32xi32, #tpu.memory_space<smem>>
      %c1_i32_76 = arith.constant 1 : i32
      %191 = arith.addi %185, %c1_i32_76 : i32
      %192 = arith.index_cast %191 : i32 to index
      %193 = memref.load %arg2[%192] : memref<32xi32, #tpu.memory_space<smem>>
      %c2_i32_77 = arith.constant 2 : i32
      %194 = arith.addi %185, %c2_i32_77 : i32
      %195 = arith.index_cast %194 : i32 to index
      %196 = memref.load %arg2[%195] : memref<32xi32, #tpu.memory_space<smem>>
      %c3_i32_78 = arith.constant 3 : i32
      %197 = arith.addi %185, %c3_i32_78 : i32
      %198 = arith.index_cast %197 : i32 to index
      %199 = memref.load %arg2[%198] : memref<32xi32, #tpu.memory_space<smem>>
      %c4_i32_79 = arith.constant 4 : i32
      %200 = arith.addi %185, %c4_i32_79 : i32
      %201 = arith.index_cast %200 : i32 to index
      %202 = memref.load %arg2[%201] : memref<32xi32, #tpu.memory_space<smem>>
      %c5_i32_80 = arith.constant 5 : i32
      %203 = arith.addi %185, %c5_i32_80 : i32
      %204 = arith.index_cast %203 : i32 to index
      %205 = memref.load %arg2[%204] : memref<32xi32, #tpu.memory_space<smem>>
      %c6_i32_81 = arith.constant 6 : i32
      %206 = arith.addi %185, %c6_i32_81 : i32
      %207 = arith.index_cast %206 : i32 to index
      %208 = memref.load %arg2[%207] : memref<32xi32, #tpu.memory_space<smem>>
      %c7_i32_82 = arith.constant 7 : i32
      %209 = arith.addi %185, %c7_i32_82 : i32
      %210 = arith.index_cast %209 : i32 to index
      %211 = memref.load %arg2[%210] : memref<32xi32, #tpu.memory_space<smem>>
      %c1_i32_83 = arith.constant 1 : i32
      %212 = arith.addi %190, %c1_i32_83 : i32
      %213 = arith.cmpi eq, %193, %212 : i32
      %c2_i32_84 = arith.constant 2 : i32
      %214 = arith.addi %190, %c2_i32_84 : i32
      %215 = arith.cmpi eq, %196, %214 : i32
      %216 = arith.andi %213, %215 : i1
      %c3_i32_85 = arith.constant 3 : i32
      %217 = arith.addi %190, %c3_i32_85 : i32
      %218 = arith.cmpi eq, %199, %217 : i32
      %219 = arith.andi %216, %218 : i1
      %c4_i32_86 = arith.constant 4 : i32
      %220 = arith.addi %190, %c4_i32_86 : i32
      %221 = arith.cmpi eq, %202, %220 : i32
      %222 = arith.andi %219, %221 : i1
      %c5_i32_87 = arith.constant 5 : i32
      %223 = arith.addi %190, %c5_i32_87 : i32
      %224 = arith.cmpi eq, %205, %223 : i32
      %225 = arith.andi %222, %224 : i1
      %c6_i32_88 = arith.constant 6 : i32
      %226 = arith.addi %190, %c6_i32_88 : i32
      %227 = arith.cmpi eq, %208, %226 : i32
      %228 = arith.andi %225, %227 : i1
      %c7_i32_89 = arith.constant 7 : i32
      %229 = arith.addi %190, %c7_i32_89 : i32
      %230 = arith.cmpi eq, %211, %229 : i32
      %231 = arith.andi %228, %230 : i1
      %232 = arith.extui %231 : i1 to i32
      %c0_i32_90 = arith.constant 0 : i32
      %233 = arith.cmpi ne, %232, %c0_i32_90 : i32
      scf.if %233 {
        %c0_i32_94 = arith.constant 0 : i32
        %c0_i32_95 = arith.constant 0 : i32
        %237 = tpu.memref_slice %arg3[%190, %c0_i32_95] : memref<104x32xf32, #tpu.memory_space<any>> -> memref<8x32xf32, #tpu.memory_space<any>>
        %c0_i32_96 = arith.constant 0 : i32
        %238 = tpu.memref_slice %arg5[%187, %c0_i32_96] : memref<96x32xf32, #tpu.memory_space<vmem>> -> memref<8x32xf32, #tpu.memory_space<vmem>>
        %239 = tpu.memref_slice %arg6[%c0_i32_94] : memref<3x!tpu.dma_semaphore, #tpu.memory_space<semaphore_mem>> -> memref<1x!tpu.dma_semaphore, #tpu.memory_space<semaphore_mem>>
        %240 = tpu.memref_squeeze %239 : memref<1x!tpu.dma_semaphore, #tpu.memory_space<semaphore_mem>> -> memref<!tpu.dma_semaphore, #tpu.memory_space<semaphore_mem>>
        tpu.enqueue_dma source(%237 : memref<8x32xf32, #tpu.memory_space<any>>) target(%238 : memref<8x32xf32, #tpu.memory_space<vmem>>) target_semaphore(%240 : memref<!tpu.dma_semaphore, #tpu.memory_space<semaphore_mem>>)
      } else {
      }
      %true_91 = arith.constant true
      %234 = arith.xori %231, %true_91 : i1
      %235 = arith.extui %234 : i1 to i32
      %c0_i32_92 = arith.constant 0 : i32
      %236 = arith.cmpi ne, %235, %c0_i32_92 : i32
      scf.if %236 {
        %c0_i32_94 = arith.constant 0 : i32
        %237 = arith.addi %187, %c0_i32_94 : i32
        %c0_i32_95 = arith.constant 0 : i32
        %c0_i32_96 = arith.constant 0 : i32
        %238 = tpu.memref_slice %arg3[%190, %c0_i32_96] : memref<104x32xf32, #tpu.memory_space<any>> -> memref<1x32xf32, #tpu.memory_space<any>>
        %c0_i32_97 = arith.constant 0 : i32
        %239 = tpu.memref_slice %arg5[%237, %c0_i32_97] : memref<96x32xf32, #tpu.memory_space<vmem>> -> memref<1x32xf32, #tpu.memory_space<vmem>>
        %240 = tpu.memref_slice %arg6[%c0_i32_95] : memref<3x!tpu.dma_semaphore, #tpu.memory_space<semaphore_mem>> -> memref<1x!tpu.dma_semaphore, #tpu.memory_space<semaphore_mem>>
        %241 = tpu.memref_squeeze %240 : memref<1x!tpu.dma_semaphore, #tpu.memory_space<semaphore_mem>> -> memref<!tpu.dma_semaphore, #tpu.memory_space<semaphore_mem>>
        tpu.enqueue_dma source(%238 : memref<1x32xf32, #tpu.memory_space<any>>) target(%239 : memref<1x32xf32, #tpu.memory_space<vmem>>) target_semaphore(%241 : memref<!tpu.dma_semaphore, #tpu.memory_space<semaphore_mem>>)
        %c1_i32_98 = arith.constant 1 : i32
        %242 = arith.addi %187, %c1_i32_98 : i32
        %c0_i32_99 = arith.constant 0 : i32
        %c0_i32_100 = arith.constant 0 : i32
        %243 = tpu.memref_slice %arg3[%193, %c0_i32_100] : memref<104x32xf32, #tpu.memory_space<any>> -> memref<1x32xf32, #tpu.memory_space<any>>
        %c0_i32_101 = arith.constant 0 : i32
        %244 = tpu.memref_slice %arg5[%242, %c0_i32_101] : memref<96x32xf32, #tpu.memory_space<vmem>> -> memref<1x32xf32, #tpu.memory_space<vmem>>
        %245 = tpu.memref_slice %arg6[%c0_i32_99] : memref<3x!tpu.dma_semaphore, #tpu.memory_space<semaphore_mem>> -> memref<1x!tpu.dma_semaphore, #tpu.memory_space<semaphore_mem>>
        %246 = tpu.memref_squeeze %245 : memref<1x!tpu.dma_semaphore, #tpu.memory_space<semaphore_mem>> -> memref<!tpu.dma_semaphore, #tpu.memory_space<semaphore_mem>>
        tpu.enqueue_dma source(%243 : memref<1x32xf32, #tpu.memory_space<any>>) target(%244 : memref<1x32xf32, #tpu.memory_space<vmem>>) target_semaphore(%246 : memref<!tpu.dma_semaphore, #tpu.memory_space<semaphore_mem>>)
        %c2_i32_102 = arith.constant 2 : i32
        %247 = arith.addi %187, %c2_i32_102 : i32
        %c0_i32_103 = arith.constant 0 : i32
        %c0_i32_104 = arith.constant 0 : i32
        %248 = tpu.memref_slice %arg3[%196, %c0_i32_104] : memref<104x32xf32, #tpu.memory_space<any>> -> memref<1x32xf32, #tpu.memory_space<any>>
        %c0_i32_105 = arith.constant 0 : i32
        %249 = tpu.memref_slice %arg5[%247, %c0_i32_105] : memref<96x32xf32, #tpu.memory_space<vmem>> -> memref<1x32xf32, #tpu.memory_space<vmem>>
        %250 = tpu.memref_slice %arg6[%c0_i32_103] : memref<3x!tpu.dma_semaphore, #tpu.memory_space<semaphore_mem>> -> memref<1x!tpu.dma_semaphore, #tpu.memory_space<semaphore_mem>>
        %251 = tpu.memref_squeeze %250 : memref<1x!tpu.dma_semaphore, #tpu.memory_space<semaphore_mem>> -> memref<!tpu.dma_semaphore, #tpu.memory_space<semaphore_mem>>
        tpu.enqueue_dma source(%248 : memref<1x32xf32, #tpu.memory_space<any>>) target(%249 : memref<1x32xf32, #tpu.memory_space<vmem>>) target_semaphore(%251 : memref<!tpu.dma_semaphore, #tpu.memory_space<semaphore_mem>>)
        %c3_i32_106 = arith.constant 3 : i32
        %252 = arith.addi %187, %c3_i32_106 : i32
        %c0_i32_107 = arith.constant 0 : i32
        %c0_i32_108 = arith.constant 0 : i32
        %253 = tpu.memref_slice %arg3[%199, %c0_i32_108] : memref<104x32xf32, #tpu.memory_space<any>> -> memref<1x32xf32, #tpu.memory_space<any>>
        %c0_i32_109 = arith.constant 0 : i32
        %254 = tpu.memref_slice %arg5[%252, %c0_i32_109] : memref<96x32xf32, #tpu.memory_space<vmem>> -> memref<1x32xf32, #tpu.memory_space<vmem>>
        %255 = tpu.memref_slice %arg6[%c0_i32_107] : memref<3x!tpu.dma_semaphore, #tpu.memory_space<semaphore_mem>> -> memref<1x!tpu.dma_semaphore, #tpu.memory_space<semaphore_mem>>
        %256 = tpu.memref_squeeze %255 : memref<1x!tpu.dma_semaphore, #tpu.memory_space<semaphore_mem>> -> memref<!tpu.dma_semaphore, #tpu.memory_space<semaphore_mem>>
        tpu.enqueue_dma source(%253 : memref<1x32xf32, #tpu.memory_space<any>>) target(%254 : memref<1x32xf32, #tpu.memory_space<vmem>>) target_semaphore(%256 : memref<!tpu.dma_semaphore, #tpu.memory_space<semaphore_mem>>)
        %c4_i32_110 = arith.constant 4 : i32
        %257 = arith.addi %187, %c4_i32_110 : i32
        %c0_i32_111 = arith.constant 0 : i32
        %c0_i32_112 = arith.constant 0 : i32
        %258 = tpu.memref_slice %arg3[%202, %c0_i32_112] : memref<104x32xf32, #tpu.memory_space<any>> -> memref<1x32xf32, #tpu.memory_space<any>>
        %c0_i32_113 = arith.constant 0 : i32
        %259 = tpu.memref_slice %arg5[%257, %c0_i32_113] : memref<96x32xf32, #tpu.memory_space<vmem>> -> memref<1x32xf32, #tpu.memory_space<vmem>>
        %260 = tpu.memref_slice %arg6[%c0_i32_111] : memref<3x!tpu.dma_semaphore, #tpu.memory_space<semaphore_mem>> -> memref<1x!tpu.dma_semaphore, #tpu.memory_space<semaphore_mem>>
        %261 = tpu.memref_squeeze %260 : memref<1x!tpu.dma_semaphore, #tpu.memory_space<semaphore_mem>> -> memref<!tpu.dma_semaphore, #tpu.memory_space<semaphore_mem>>
        tpu.enqueue_dma source(%258 : memref<1x32xf32, #tpu.memory_space<any>>) target(%259 : memref<1x32xf32, #tpu.memory_space<vmem>>) target_semaphore(%261 : memref<!tpu.dma_semaphore, #tpu.memory_space<semaphore_mem>>)
        %c5_i32_114 = arith.constant 5 : i32
        %262 = arith.addi %187, %c5_i32_114 : i32
        %c0_i32_115 = arith.constant 0 : i32
        %c0_i32_116 = arith.constant 0 : i32
        %263 = tpu.memref_slice %arg3[%205, %c0_i32_116] : memref<104x32xf32, #tpu.memory_space<any>> -> memref<1x32xf32, #tpu.memory_space<any>>
        %c0_i32_117 = arith.constant 0 : i32
        %264 = tpu.memref_slice %arg5[%262, %c0_i32_117] : memref<96x32xf32, #tpu.memory_space<vmem>> -> memref<1x32xf32, #tpu.memory_space<vmem>>
        %265 = tpu.memref_slice %arg6[%c0_i32_115] : memref<3x!tpu.dma_semaphore, #tpu.memory_space<semaphore_mem>> -> memref<1x!tpu.dma_semaphore, #tpu.memory_space<semaphore_mem>>
        %266 = tpu.memref_squeeze %265 : memref<1x!tpu.dma_semaphore, #tpu.memory_space<semaphore_mem>> -> memref<!tpu.dma_semaphore, #tpu.memory_space<semaphore_mem>>
        tpu.enqueue_dma source(%263 : memref<1x32xf32, #tpu.memory_space<any>>) target(%264 : memref<1x32xf32, #tpu.memory_space<vmem>>) target_semaphore(%266 : memref<!tpu.dma_semaphore, #tpu.memory_space<semaphore_mem>>)
        %c6_i32_118 = arith.constant 6 : i32
        %267 = arith.addi %187, %c6_i32_118 : i32
        %c0_i32_119 = arith.constant 0 : i32
        %c0_i32_120 = arith.constant 0 : i32
        %268 = tpu.memref_slice %arg3[%208, %c0_i32_120] : memref<104x32xf32, #tpu.memory_space<any>> -> memref<1x32xf32, #tpu.memory_space<any>>
        %c0_i32_121 = arith.constant 0 : i32
        %269 = tpu.memref_slice %arg5[%267, %c0_i32_121] : memref<96x32xf32, #tpu.memory_space<vmem>> -> memref<1x32xf32, #tpu.memory_space<vmem>>
        %270 = tpu.memref_slice %arg6[%c0_i32_119] : memref<3x!tpu.dma_semaphore, #tpu.memory_space<semaphore_mem>> -> memref<1x!tpu.dma_semaphore, #tpu.memory_space<semaphore_mem>>
        %271 = tpu.memref_squeeze %270 : memref<1x!tpu.dma_semaphore, #tpu.memory_space<semaphore_mem>> -> memref<!tpu.dma_semaphore, #tpu.memory_space<semaphore_mem>>
        tpu.enqueue_dma source(%268 : memref<1x32xf32, #tpu.memory_space<any>>) target(%269 : memref<1x32xf32, #tpu.memory_space<vmem>>) target_semaphore(%271 : memref<!tpu.dma_semaphore, #tpu.memory_space<semaphore_mem>>)
        %c7_i32_122 = arith.constant 7 : i32
        %272 = arith.addi %187, %c7_i32_122 : i32
        %c0_i32_123 = arith.constant 0 : i32
        %c0_i32_124 = arith.constant 0 : i32
        %273 = tpu.memref_slice %arg3[%211, %c0_i32_124] : memref<104x32xf32, #tpu.memory_space<any>> -> memref<1x32xf32, #tpu.memory_space<any>>
        %c0_i32_125 = arith.constant 0 : i32
        %274 = tpu.memref_slice %arg5[%272, %c0_i32_125] : memref<96x32xf32, #tpu.memory_space<vmem>> -> memref<1x32xf32, #tpu.memory_space<vmem>>
        %275 = tpu.memref_slice %arg6[%c0_i32_123] : memref<3x!tpu.dma_semaphore, #tpu.memory_space<semaphore_mem>> -> memref<1x!tpu.dma_semaphore, #tpu.memory_space<semaphore_mem>>
        %276 = tpu.memref_squeeze %275 : memref<1x!tpu.dma_semaphore, #tpu.memory_space<semaphore_mem>> -> memref<!tpu.dma_semaphore, #tpu.memory_space<semaphore_mem>>
        tpu.enqueue_dma source(%273 : memref<1x32xf32, #tpu.memory_space<any>>) target(%274 : memref<1x32xf32, #tpu.memory_space<vmem>>) target_semaphore(%276 : memref<!tpu.dma_semaphore, #tpu.memory_space<semaphore_mem>>)
      } else {
      }
      %c4_i32_93 = arith.constant 4 : i32
    } else {
    }
    %c3_i32 = arith.constant 3 : i32
    %c0_i32_1 = arith.constant 0 : i32
    %3 = arith.cmpi eq, %c3_i32, %c0_i32_1 : i32
    %c1_i32 = arith.constant 1 : i32
    %4 = arith.select %3, %c1_i32, %c3_i32 : i32
    %5 = arith.remsi %arg1, %4 : i32
    %c0_i32_2 = arith.constant 0 : i32
    %6 = arith.cmpi ne, %5, %c0_i32_2 : i32
    %c0_i32_3 = arith.constant 0 : i32
    %7 = arith.cmpi slt, %5, %c0_i32_3 : i32
    %c0_i32_4 = arith.constant 0 : i32
    %8 = arith.cmpi slt, %4, %c0_i32_4 : i32
    %9 = arith.xori %7, %8 : i1
    %10 = arith.andi %9, %6 : i1
    %11 = arith.addi %5, %4 : i32
    %12 = arith.select %10, %11, %5 : i32
    %c32_i32 = arith.constant 32 : i32
    %13 = arith.muli %12, %c32_i32 : i32
    %14 = tpu.assume_multiple %13, 8 : i32
    %c0_i32_5 = arith.constant 0 : i32
    %15 = tpu.memref_slice %arg5[%14, %c0_i32_5] : memref<96x32xf32, #tpu.memory_space<vmem>> -> memref<32x32xf32, #tpu.memory_space<vmem>>
    %c0_i32_6 = arith.constant 0 : i32
    %16 = tpu.memref_slice %arg5[%14, %c0_i32_6] : memref<96x32xf32, #tpu.memory_space<vmem>> -> memref<32x32xf32, #tpu.memory_space<vmem>>
    %17 = tpu.memref_slice %arg6[%12] : memref<3x!tpu.dma_semaphore, #tpu.memory_space<semaphore_mem>> -> memref<1x!tpu.dma_semaphore, #tpu.memory_space<semaphore_mem>>
    %18 = tpu.memref_squeeze %17 : memref<1x!tpu.dma_semaphore, #tpu.memory_space<semaphore_mem>> -> memref<!tpu.dma_semaphore, #tpu.memory_space<semaphore_mem>>
    tpu.wait_dma2 semaphore(%18 : memref<!tpu.dma_semaphore, #tpu.memory_space<semaphore_mem>>) src(%15 : memref<32x32xf32, #tpu.memory_space<vmem>>) dst(%16 : memref<32x32xf32, #tpu.memory_space<vmem>>)
    %19 = arith.index_cast %14 : i32 to index
    %c0 = arith.constant 0 : index
    %20 = vector.load %arg5[%19, %c0] : memref<96x32xf32, #tpu.memory_space<vmem>>, vector<32x32xf32>
    %c0_7 = arith.constant 0 : index
    %c0_8 = arith.constant 0 : index
    %21 = vector.load %arg4[%c0_7, %c0_8] : memref<32x32xf32, #tpu.memory_space<vmem>>, vector<32x32xf32>
    tpu.vector_store %arg4[%c0_7, %c0_8], %20 {strides = array<i32>} : memref<32x32xf32, #tpu.memory_space<vmem>>, vector<32x32xf32>,
    return
  }
  func.func @transform_1(%arg0: i32, %arg1: i32, %arg2: memref<32xi32, #tpu.memory_space<smem>>) -> (i32, i32) {
    %c1_i32 = arith.constant 1 : i32
    %0 = arith.muli %arg0, %c1_i32 : i32
    %1 = arith.addi %0, %arg1 : i32
    %c0_i32 = arith.constant 0 : i32
    %c0_i32_0 = arith.constant 0 : i32
    return %1, %c0_i32 : i32, i32
  }
}

</mosaic_0001>

<llo_original>
// kernel: tpu_custom_call.1
$region0: #{tpu_custom_call.1}
  #allocation0 [shape = 'u32[]', space=smem, size = 0x4, offset = 0x4, fixed_abs, tag = 'smem constant byte address 0x4 - core index']
  #allocation1 [shape = 'u32[72,128]{1,0:T(1,128)}', space=vmem, size = 0x9000, scoped, tag = 'internal scratch']
  #allocation2 [shape = 'f32[96,32]{1,0:T(8,128)}', space=vmem, size = 0xc000, scoped, tag = 'scratch operand']
  #allocation3 [shape = 's32[3]{0}', space=sflag, size = 0xc, scoped, tag = 'scratch operand']
  #allocation4 [shape = 's32[1]{0}', space=sflag, size = 0x4, scoped, tag = 'scoped memory for tpu_custom_call.1']
  #allocation5 [shape = 'u8[512]{0}', space=smem, size = 0x200, scoped, tag = 'prefetched SMEM operand 0']
  #allocation8 [shape = 's32[]', space=sflag, size = 0x4, offset = 0, fixed_abs, tag = 'sflag constant byte address 0x0 - dummy sync flag']
  #allocation9 [shape = 's32[]', space=sflag, size = 0x4, offset = 0, fixed_abs, tag = 'sflag constant byte address 0x0 - dummy sync flag']
  #allocation10 [shape = 's32[]', space=sflag, size = 0x4, offset = 0, fixed_abs, tag = 'sflag constant byte address 0x0 - dummy sync flag']
  #allocation11 [shape = 's32[]', space=sflag, size = 0x4, offset = 0, fixed_abs, tag = 'sflag constant byte address 0x0 - dummy sync flag']
  #allocation12 [shape = 's32[]', space=sflag, size = 0x4, offset = 0, fixed_abs, tag = 'sflag constant byte address 0x0 - dummy sync flag']
  #allocation13 [shape = 's32[]', space=sflag, size = 0x4, offset = 0, fixed_abs, tag = 'sflag constant byte address 0x0 - dummy sync flag']
  #allocation14 [shape = 's32[]', space=sflag, size = 0x4, offset = 0, fixed_abs, tag = 'sflag constant byte address 0x0 - dummy sync flag']
  #allocation15 [shape = 's32[]', space=sflag, size = 0x4, offset = 0, fixed_abs, tag = 'sflag constant byte address 0x0 - dummy sync flag']
  #allocation16 [shape = 's32[]', space=sflag, size = 0x4, offset = 0, fixed_abs, tag = 'sflag constant byte address 0x0 - dummy sync flag']
  #allocation17 [shape = 's32[]', space=sflag, size = 0x4, offset = 0, fixed_abs, tag = 'sflag constant byte address 0x0 - dummy sync flag']
  #allocation18 [shape = 's32[]', space=sflag, size = 0x4, offset = 0, fixed_abs, tag = 'sflag constant byte address 0x0 - dummy sync flag']
  #allocation19 [shape = 's32[]', space=sflag, size = 0x4, offset = 0, fixed_abs, tag = 'sflag constant byte address 0x0 - dummy sync flag']
  #allocation20 [shape = 's32[]', space=sflag, size = 0x4, offset = 0, fixed_abs, tag = 'sflag constant byte address 0x0 - dummy sync flag']
  #allocation21 [shape = 's32[]', space=sflag, size = 0x4, offset = 0, fixed_abs, tag = 'sflag constant byte address 0x0 - dummy sync flag']
  #allocation22 [shape = 's32[]', space=sflag, size = 0x4, offset = 0, fixed_abs, tag = 'sflag constant byte address 0x0 - dummy sync flag']
  #allocation23 [shape = 's32[]', space=sflag, size = 0x4, offset = 0, fixed_abs, tag = 'sflag constant byte address 0x0 - dummy sync flag']
  #allocation24 [shape = 's32[]', space=sflag, size = 0x4, offset = 0, fixed_abs, tag = 'sflag constant byte address 0x0 - dummy sync flag']
  #allocation25 [shape = 's32[]', space=sflag, size = 0x4, offset = 0, fixed_abs, tag = 'sflag constant byte address 0x0 - dummy sync flag']
  #allocation26 [shape = 's32[]', space=sflag, size = 0x4, offset = 0, fixed_abs, tag = 'sflag constant byte address 0x0 - dummy sync flag']
  #allocation27 [shape = 's32[]', space=sflag, size = 0x4, offset = 0, fixed_abs, tag = 'sflag constant byte address 0x0 - dummy sync flag']
  #allocation28 [shape = 's32[]', space=sflag, size = 0x4, offset = 0, fixed_abs, tag = 'sflag constant byte address 0x0 - dummy sync flag']
  #allocation29 [shape = 's32[]', space=sflag, size = 0x4, offset = 0, fixed_abs, tag = 'sflag constant byte address 0x0 - dummy sync flag']
  #allocation30 [shape = 's32[]', space=sflag, size = 0x4, offset = 0, fixed_abs, tag = 'sflag constant byte address 0x0 - dummy sync flag']
  #allocation31 [shape = 's32[]', space=sflag, size = 0x4, offset = 0, fixed_abs, tag = 'sflag constant byte address 0x0 - dummy sync flag']
  #allocation32 [shape = 's32[]', space=sflag, size = 0x4, offset = 0, fixed_abs, tag = 'sflag constant byte address 0x0 - dummy sync flag']
  #allocation33 [shape = 's32[]', space=sflag, size = 0x4, offset = 0, fixed_abs, tag = 'sflag constant byte address 0x0 - dummy sync flag']
  #allocation34 [shape = 's32[]', space=sflag, size = 0x4, offset = 0, fixed_abs, tag = 'sflag constant byte address 0x0 - dummy sync flag']
  #allocation35 [shape = 's32[]', space=sflag, size = 0x4, offset = 0, fixed_abs, tag = 'sflag constant byte address 0x0 - dummy sync flag']
  #allocation36 [shape = 's32[]', space=sflag, size = 0x4, offset = 0, fixed_abs, tag = 'sflag constant byte address 0x0 - dummy sync flag']
  #allocation37 [shape = 's32[]', space=sflag, size = 0x4, offset = 0, fixed_abs, tag = 'sflag constant byte address 0x0 - dummy sync flag']
  #allocation38 [shape = 's32[]', space=sflag, size = 0x4, offset = 0, fixed_abs, tag = 'sflag constant byte address 0x0 - dummy sync flag']
  #allocation39 [shape = 's32[]', space=sflag, size = 0x4, offset = 0, fixed_abs, tag = 'sflag constant byte address 0x0 - dummy sync flag']
  #allocation40 [shape = 's32[]', space=sflag, size = 0x4, offset = 0, fixed_abs, tag = 'sflag constant byte address 0x0 - dummy sync flag']
  #allocation41 [shape = 's32[]', space=sflag, size = 0x4, offset = 0, fixed_abs, tag = 'sflag constant byte address 0x0 - dummy sync flag']
  #allocation42 [shape = 's32[]', space=sflag, size = 0x4, offset = 0, fixed_abs, tag = 'sflag constant byte address 0x0 - dummy sync flag']
  #allocation43 [shape = 's32[]', space=sflag, size = 0x4, offset = 0, fixed_abs, tag = 'sflag constant byte address 0x0 - dummy sync flag']
  %s0 = inlined_call_operand.vmem [shape: s32[32], index: 0, kind: input, shape index: {}]
  %s1 = inlined_call_operand.vmem [shape: f32[104,32], index: 1, kind: input, shape index: {}]
  %s2 = inlined_call_operand.hbm [shape: f32[32,32], index: 2, kind: output, shape index: {}]
  %s3 = sld [smem:[#allocation0]]
  $region1142: #{tpu_custom_call.1} parent=0
    _
  %s5 = ssub.s32 1, %s3
  %s6 = scalar_select 0, %s5, %s3
  %s8 = sshll.u32 %s0, 4
  %s9 = int_to_ptr.vmem [resolvable:$true] %s8
  %11 = dma.vmem_to_smem %s9, 16, [#allocation5], [#allocation4]
  %13 = dma.done [#allocation4], 16
  %14 = sfence
  $region1: #{tpu_custom_call.1} parent=0
    #allocation6 [shape = 'u8[16384]{0}', space=vmem, size = 0x4000, scoped, tag = 'output window, operand 0, single buffered']
    #allocation7 [shape = 's32[1]{0}', space=sflag, size = 0x4, scoped, tag = 'scoped memory for tpu_custom_call.1']
    %15 = vsyncpa [#allocation7], 0
    %s16 = sadd.s32 0, 0
    %s17 = smul.u32 4, %s16
    %p18 = scmp.eq.s32.totalorder 0, 0
    // Predicated region
    $region2: #{tpu_custom_call.1} parent=1 // pred_check
      %p19 = pneg %p18
    $region3: #{tpu_custom_call.1} parent=1 // pred_check_branch
      %21 = sbr.rel (%p19) target = $region5
    $region4: #{tpu_custom_call.1} parent=1 // pred_region
      %s22 = smul.u32 0, 32
      %s23 = sld [smem:[#allocation5 + %s22]]
      %s24 = sadd.s32 %s22, 1
      %s25 = sld [smem:[#allocation5 + %s24]]
      %s26 = sadd.s32 %s22, 2
      %s27 = sld [smem:[#allocation5 + %s26]]
      %s28 = sadd.s32 %s22, 3
      %s29 = sld [smem:[#allocation5 + %s28]]
      %s30 = sadd.s32 %s22, 4
      %s31 = sld [smem:[#allocation5 + %s30]]
      %s32 = sadd.s32 %s22, 5
      %s33 = sld [smem:[#allocation5 + %s32]]
      %s34 = sadd.s32 %s22, 6
      %s35 = sld [smem:[#allocation5 + %s34]]
      %s36 = sadd.s32 %s22, 7
      %s37 = sld [smem:[#allocation5 + %s36]]
      %s38 = sadd.s32 %s23, 1
      %p39 = scmp.eq.s32.totalorder %s25, %s38
      %s40 = sadd.s32 %s23, 2
      %p41 = scmp.eq.s32.totalorder %s27, %s40
      %p42 = pnand %p39, %p41
      %p43 = pneg %p42
      %s44 = sadd.s32 %s23, 3
      %p45 = scmp.eq.s32.totalorder %s29, %s44
      %p46 = pnand %p43, %p45
      %p47 = pneg %p46
      %s48 = sadd.s32 %s23, 4
      %p49 = scmp.eq.s32.totalorder %s31, %s48
      %p50 = pnand %p47, %p49
      %p51 = pneg %p50
      %s52 = sadd.s32 %s23, 5
      %p53 = scmp.eq.s32.totalorder %s33, %s52
      %p54 = pnand %p51, %p53
      %p55 = pneg %p54
      %s56 = sadd.s32 %s23, 6
      %p57 = scmp.eq.s32.totalorder %s35, %s56
      %p58 = pnand %p55, %p57
      %p59 = pneg %p58
      %s60 = sadd.s32 %s23, 7
      %p61 = scmp.eq.s32.totalorder %s37, %s60
      %p62 = pnand %p59, %p61
      %p63 = pneg %p62
      // Predicated region
      $region6: #{tpu_custom_call.1} parent=4 // pred_check
        _
      $region7: #{tpu_custom_call.1} parent=4 // pred_check_branch
        %65 = sbr.rel (%p62) target = $region9
      $region8: #{tpu_custom_call.1} parent=4 // pred_region
        %s66 = scalar_lea.vmem %s1, %s23
        // Predicated region
        $region10: #{tpu_custom_call.1} parent=8 // pred_check
          _
        $region11: #{tpu_custom_call.1} parent=8 // pred_check_branch
          %68 = sbr.rel (0) target = $region13
        $region12: #{tpu_custom_call.1} parent=8 // pred_region
          // Predicated region
          $region25: #{tpu_custom_call.1} parent=12 // pred_check
            _
          $region26: #{tpu_custom_call.1} parent=12 // pred_check_branch
            %84 = sbr.rel (0) target = $region28
          $region27: #{tpu_custom_call.1} parent=12 // pred_region
            loop: start=0, step=1, limit=1
            $region29: #{tpu_custom_call.1} parent=27 // loop_pre_header
              _
            $region30: #{tpu_custom_call.1} parent=27 // loop_header
              %s86 = sphi 0, %s90
              %p87 = scmp.ge.s32.totalorder %s86, 1
              %s91 = sphi %s66, %s66
              %s92 = sphi [#allocation2], [#allocation2]
            $region31: #{tpu_custom_call.1} parent=27 // loop_header_branch
              %89 = sbr.rel (%p87) target = $region35
            $region32: #{tpu_custom_call.1} parent=27 // loop_body
              %v93 = vld [vmem:[%s91] sm:$0xff]
              %94 = vst [vmem:[%s92] sm:$0xff] %v93
            $region33: #{tpu_custom_call.1} parent=27 // loop_footer
              %s90 = sadd.s32 1, %s86
            $region34: #{tpu_custom_call.1} parent=27 // loop_footer_branch
              %85 = sbr.rel target = $region30
            $region35: #{tpu_custom_call.1} parent=27 // loop_exit
              _
          $region28: #{tpu_custom_call.1} parent=12 // pred_fallthru
            _
          // Predicated region
          $region36: #{tpu_custom_call.1} parent=12 // pred_check
            _
          $region37: #{tpu_custom_call.1} parent=12 // pred_check_branch
            %96 = sbr.rel target = $region39
          $region38: #{tpu_custom_call.1} parent=12 // pred_region
            _
          $region39: #{tpu_custom_call.1} parent=12 // pred_fallthru
            _
        $region13: #{tpu_custom_call.1} parent=8 // pred_fallthru
          _
        // Predicated region
        $region14: #{tpu_custom_call.1} parent=8 // pred_check
          _
        $region15: #{tpu_custom_call.1} parent=8 // pred_check_branch
          %70 = sbr.rel target = $region17
        $region16: #{tpu_custom_call.1} parent=8 // pred_region
          %s72 = ssub.s32 256, 1
          loop: start=0, step=1, limit=1
          $region18: #{tpu_custom_call.1} parent=16 // loop_pre_header
            _
          $region19: #{tpu_custom_call.1} parent=16 // loop_header
            %s74 = sphi 0, %s78
            %p75 = scmp.ge.s32.totalorder %s74, 1
            %s79 = sphi %s66, %s66
            %s80 = sphi [#allocation2], [#allocation2]
          $region20: #{tpu_custom_call.1} parent=16 // loop_header_branch
            %77 = sbr.rel (%p75) target = $region24
          $region21: #{tpu_custom_call.1} parent=16 // loop_body
            %v81 = vld [vmem:[%s79] sm:%s72]
            %82 = vst [vmem:[%s80] sm:%s72] %v81
          $region22: #{tpu_custom_call.1} parent=16 // loop_footer
            %s78 = sadd.s32 1, %s74
          $region23: #{tpu_custom_call.1} parent=16 // loop_footer_branch
            %73 = sbr.rel target = $region19
          $region24: #{tpu_custom_call.1} parent=16 // loop_exit
            _
        $region17: #{tpu_custom_call.1} parent=8 // pred_fallthru
          _
        // Predicated region
        $region40: #{tpu_custom_call.1} parent=8 // pred_check
          _
        $region41: #{tpu_custom_call.1} parent=8 // pred_check_branch
          %99 = sbr.rel (0) target = $region43
        $region42: #{tpu_custom_call.1} parent=8 // pred_region
          %100 = vsyncadd [#allocation3], 128
        $region43: #{tpu_custom_call.1} parent=8 // pred_fallthru
          _
      $region9: #{tpu_custom_call.1} parent=4 // pred_fallthru
        _
      %p101 = pneg %p63
      // Predicated region
      $region44: #{tpu_custom_call.1} parent=4 // pred_check
        _
      $region45: #{tpu_custom_call.1} parent=4 // pred_check_branch
        %103 = sbr.rel (%p63) target = $region47
      $region46: #{tpu_custom_call.1} parent=4 // pred_region
        %s104 = scalar_lea.vmem %s1, %s23
        // Predicated region
        $region48: #{tpu_custom_call.1} parent=46 // pred_check
          _
        $region49: #{tpu_custom_call.1} parent=46 // pred_check_branch
          %106 = sbr.rel target = $region51
        $region50: #{tpu_custom_call.1} parent=46 // pred_region
          // Predicated region
          $region63: #{tpu_custom_call.1} parent=50 // pred_check
            _
          $region64: #{tpu_custom_call.1} parent=50 // pred_check_branch
            %122 = sbr.rel (0) target = $region66
          $region65: #{tpu_custom_call.1} parent=50 // pred_region
            %s124 = ssub.s32 2, 1
            loop: start=0, step=1, limit=1
            $region67: #{tpu_custom_call.1} parent=65 // loop_pre_header
              _
            $region68: #{tpu_custom_call.1} parent=65 // loop_header
              %s126 = sphi 0, %s130
              %p127 = scmp.ge.s32.totalorder %s126, 1
              %s131 = sphi %s104, %s104
              %s132 = sphi [#allocation2], [#allocation2]
            $region69: #{tpu_custom_call.1} parent=65 // loop_header_branch
              %129 = sbr.rel (%p127) target = $region73
            $region70: #{tpu_custom_call.1} parent=65 // loop_body
              %v133 = vld [vmem:[%s131] sm:%s124]
              %134 = vst [vmem:[%s132] sm:%s124] %v133
            $region71: #{tpu_custom_call.1} parent=65 // loop_footer
              %s130 = sadd.s32 1, %s126
            $region72: #{tpu_custom_call.1} parent=65 // loop_footer_branch
              %125 = sbr.rel target = $region68
            $region73: #{tpu_custom_call.1} parent=65 // loop_exit
              _
          $region66: #{tpu_custom_call.1} parent=50 // pred_fallthru
            _
        $region51: #{tpu_custom_call.1} parent=46 // pred_fallthru
          _
        // Predicated region
        $region52: #{tpu_custom_call.1} parent=46 // pred_check
          _
        $region53: #{tpu_custom_call.1} parent=46 // pred_check_branch
          %108 = sbr.rel (0) target = $region55
        $region54: #{tpu_custom_call.1} parent=46 // pred_region
          %s110 = ssub.s32 2, 1
          loop: start=0, step=1, limit=1
          $region56: #{tpu_custom_call.1} parent=54 // loop_pre_header
            _
          $region57: #{tpu_custom_call.1} parent=54 // loop_header
            %s112 = sphi 0, %s116
            %p113 = scmp.ge.s32.totalorder %s112, 1
            %s117 = sphi %s104, %s104
            %s118 = sphi [#allocation2], [#allocation2]
          $region58: #{tpu_custom_call.1} parent=54 // loop_header_branch
            %115 = sbr.rel (%p113) target = $region62
          $region59: #{tpu_custom_call.1} parent=54 // loop_body
            %v119 = vld [vmem:[%s117] sm:%s110]
            %120 = vst [vmem:[%s118] sm:%s110] %v119
          $region60: #{tpu_custom_call.1} parent=54 // loop_footer
            %s116 = sadd.s32 1, %s112
          $region61: #{tpu_custom_call.1} parent=54 // loop_footer_branch
            %111 = sbr.rel target = $region57
          $region62: #{tpu_custom_call.1} parent=54 // loop_exit
            _
        $region55: #{tpu_custom_call.1} parent=46 // pred_fallthru
          _
        // Predicated region
        $region74: #{tpu_custom_call.1} parent=46 // pred_check
          _
        $region75: #{tpu_custom_call.1} parent=46 // pred_check_branch
          %137 = sbr.rel (0) target = $region77
        $region76: #{tpu_custom_call.1} parent=46 // pred_region
          %138 = vsyncadd [#allocation3], 16
        $region77: #{tpu_custom_call.1} parent=46 // pred_fallthru
          _
        %s139 = scalar_lea.vmem %s1, %s25
        %s140 = scalar_lea.vmem [#allocation2], 1
        // Predicated region
        $region78: #{tpu_custom_call.1} parent=46 // pred_check
          _
        $region79: #{tpu_custom_call.1} parent=46 // pred_check_branch
          %142 = sbr.rel target = $region81
        $region80: #{tpu_custom_call.1} parent=46 // pred_region
          // Predicated region
          $region93: #{tpu_custom_call.1} parent=80 // pred_check
            _
          $region94: #{tpu_custom_call.1} parent=80 // pred_check_branch
            %158 = sbr.rel (0) target = $region96
          $region95: #{tpu_custom_call.1} parent=80 // pred_region
            %s160 = ssub.s32 2, 1
            loop: start=0, step=1, limit=1
            $region97: #{tpu_custom_call.1} parent=95 // loop_pre_header
              _
            $region98: #{tpu_custom_call.1} parent=95 // loop_header
              %s162 = sphi 0, %s166
              %p163 = scmp.ge.s32.totalorder %s162, 1
              %s167 = sphi %s139, %s139
              %s168 = sphi %s140, %s140
            $region99: #{tpu_custom_call.1} parent=95 // loop_header_branch
              %165 = sbr.rel (%p163) target = $region103
            $region100: #{tpu_custom_call.1} parent=95 // loop_body
              %v169 = vld [vmem:[%s167] sm:%s160]
              %170 = vst [vmem:[%s168] sm:%s160] %v169
            $region101: #{tpu_custom_call.1} parent=95 // loop_footer
              %s166 = sadd.s32 1, %s162
            $region102: #{tpu_custom_call.1} parent=95 // loop_footer_branch
              %161 = sbr.rel target = $region98
            $region103: #{tpu_custom_call.1} parent=95 // loop_exit
              _
          $region96: #{tpu_custom_call.1} parent=80 // pred_fallthru
            _
        $region81: #{tpu_custom_call.1} parent=46 // pred_fallthru
          _
        // Predicated region
        $region82: #{tpu_custom_call.1} parent=46 // pred_check
          _
        $region83: #{tpu_custom_call.1} parent=46 // pred_check_branch
          %144 = sbr.rel (0) target = $region85
        $region84: #{tpu_custom_call.1} parent=46 // pred_region
          %s146 = ssub.s32 2, 1
          loop: start=0, step=1, limit=1
          $region86: #{tpu_custom_call.1} parent=84 // loop_pre_header
            _
          $region87: #{tpu_custom_call.1} parent=84 // loop_header
            %s148 = sphi 0, %s152
            %p149 = scmp.ge.s32.totalorder %s148, 1
            %s153 = sphi %s139, %s139
            %s154 = sphi %s140, %s140
          $region88: #{tpu_custom_call.1} parent=84 // loop_header_branch
            %151 = sbr.rel (%p149) target = $region92
          $region89: #{tpu_custom_call.1} parent=84 // loop_body
            %v155 = vld [vmem:[%s153] sm:%s146]
            %156 = vst [vmem:[%s154] sm:%s146] %v155
          $region90: #{tpu_custom_call.1} parent=84 // loop_footer
            %s152 = sadd.s32 1, %s148
          $region91: #{tpu_custom_call.1} parent=84 // loop_footer_branch
            %147 = sbr.rel target = $region87
          $region92: #{tpu_custom_call.1} parent=84 // loop_exit
            _
        $region85: #{tpu_custom_call.1} parent=46 // pred_fallthru
          _
        // Predicated region
        $region104: #{tpu_custom_call.1} parent=46 // pred_check
          _
        $region105: #{tpu_custom_call.1} parent=46 // pred_check_branch
          %173 = sbr.rel (0) target = $region107
        $region106: #{tpu_custom_call.1} parent=46 // pred_region
          %174 = vsyncadd [#allocation3], 16
        $region107: #{tpu_custom_call.1} parent=46 // pred_fallthru
          _
        %s175 = scalar_lea.vmem %s1, %s27
        %s176 = scalar_lea.vmem [#allocation2], 2
        // Predicated region
        $region108: #{tpu_custom_call.1} parent=46 // pred_check
          _
        $region109: #{tpu_custom_call.1} parent=46 // pred_check_branch
          %178 = sbr.rel target = $region111
        $region110: #{tpu_custom_call.1} parent=46 // pred_region
          // Predicated region
          $region123: #{tpu_custom_call.1} parent=110 // pred_check
            _
          $region124: #{tpu_custom_call.1} parent=110 // pred_check_branch
            %194 = sbr.rel (0) target = $region126
          $region125: #{tpu_custom_call.1} parent=110 // pred_region
            %s196 = ssub.s32 2, 1
            loop: start=0, step=1, limit=1
            $region127: #{tpu_custom_call.1} parent=125 // loop_pre_header
              _
            $region128: #{tpu_custom_call.1} parent=125 // loop_header
              %s198 = sphi 0, %s202
              %p199 = scmp.ge.s32.totalorder %s198, 1
              %s203 = sphi %s175, %s175
              %s204 = sphi %s176, %s176
            $region129: #{tpu_custom_call.1} parent=125 // loop_header_branch
              %201 = sbr.rel (%p199) target = $region133
            $region130: #{tpu_custom_call.1} parent=125 // loop_body
              %v205 = vld [vmem:[%s203] sm:%s196]
              %206 = vst [vmem:[%s204] sm:%s196] %v205
            $region131: #{tpu_custom_call.1} parent=125 // loop_footer
              %s202 = sadd.s32 1, %s198
            $region132: #{tpu_custom_call.1} parent=125 // loop_footer_branch
              %197 = sbr.rel target = $region128
            $region133: #{tpu_custom_call.1} parent=125 // loop_exit
              _
          $region126: #{tpu_custom_call.1} parent=110 // pred_fallthru
            _
        $region111: #{tpu_custom_call.1} parent=46 // pred_fallthru
          _
        // Predicated region
        $region112: #{tpu_custom_call.1} parent=46 // pred_check
          _
        $region113: #{tpu_custom_call.1} parent=46 // pred_check_branch
          %180 = sbr.rel (0) target = $region115
        $region114: #{tpu_custom_call.1} parent=46 // pred_region
          %s182 = ssub.s32 2, 1
          loop: start=0, step=1, limit=1
          $region116: #{tpu_custom_call.1} parent=114 // loop_pre_header
            _
          $region117: #{tpu_custom_call.1} parent=114 // loop_header
            %s184 = sphi 0, %s188
            %p185 = scmp.ge.s32.totalorder %s184, 1
            %s189 = sphi %s175, %s175
            %s190 = sphi %s176, %s176
          $region118: #{tpu_custom_call.1} parent=114 // loop_header_branch
            %187 = sbr.rel (%p185) target = $region122
          $region119: #{tpu_custom_call.1} parent=114 // loop_body
            %v191 = vld [vmem:[%s189] sm:%s182]
            %192 = vst [vmem:[%s190] sm:%s182] %v191
          $region120: #{tpu_custom_call.1} parent=114 // loop_footer
            %s188 = sadd.s32 1, %s184
          $region121: #{tpu_custom_call.1} parent=114 // loop_footer_branch
            %183 = sbr.rel target = $region117
          $region122: #{tpu_custom_call.1} parent=114 // loop_exit
            _
        $region115: #{tpu_custom_call.1} parent=46 // pred_fallthru
          _
        // Predicated region
        $region134: #{tpu_custom_call.1} parent=46 // pred_check
          _
        $region135: #{tpu_custom_call.1} parent=46 // pred_check_branch
          %209 = sbr.rel (0) target = $region137
        $region136: #{tpu_custom_call.1} parent=46 // pred_region
          %210 = vsyncadd [#allocation3], 16
        $region137: #{tpu_custom_call.1} parent=46 // pred_fallthru
          _
        %s211 = scalar_lea.vmem %s1, %s29
        %s212 = scalar_lea.vmem [#allocation2], 3
        // Predicated region
        $region138: #{tpu_custom_call.1} parent=46 // pred_check
          _
        $region139: #{tpu_custom_call.1} parent=46 // pred_check_branch
          %214 = sbr.rel target = $region141
        $region140: #{tpu_custom_call.1} parent=46 // pred_region
          // Predicated region
          $region153: #{tpu_custom_call.1} parent=140 // pred_check
            _
          $region154: #{tpu_custom_call.1} parent=140 // pred_check_branch
            %230 = sbr.rel (0) target = $region156
          $region155: #{tpu_custom_call.1} parent=140 // pred_region
            %s232 = ssub.s32 2, 1
            loop: start=0, step=1, limit=1
            $region157: #{tpu_custom_call.1} parent=155 // loop_pre_header
              _
            $region158: #{tpu_custom_call.1} parent=155 // loop_header
              %s234 = sphi 0, %s238
              %p235 = scmp.ge.s32.totalorder %s234, 1
              %s239 = sphi %s211, %s211
              %s240 = sphi %s212, %s212
            $region159: #{tpu_custom_call.1} parent=155 // loop_header_branch
              %237 = sbr.rel (%p235) target = $region163
            $region160: #{tpu_custom_call.1} parent=155 // loop_body
              %v241 = vld [vmem:[%s239] sm:%s232]
              %242 = vst [vmem:[%s240] sm:%s232] %v241
            $region161: #{tpu_custom_call.1} parent=155 // loop_footer
              %s238 = sadd.s32 1, %s234
            $region162: #{tpu_custom_call.1} parent=155 // loop_footer_branch
              %233 = sbr.rel target = $region158
            $region163: #{tpu_custom_call.1} parent=155 // loop_exit
              _
          $region156: #{tpu_custom_call.1} parent=140 // pred_fallthru
            _
        $region141: #{tpu_custom_call.1} parent=46 // pred_fallthru
          _
        // Predicated region
        $region142: #{tpu_custom_call.1} parent=46 // pred_check
          _
        $region143: #{tpu_custom_call.1} parent=46 // pred_check_branch
          %216 = sbr.rel (0) target = $region145
        $region144: #{tpu_custom_call.1} parent=46 // pred_region
          %s218 = ssub.s32 2, 1
          loop: start=0, step=1, limit=1
          $region146: #{tpu_custom_call.1} parent=144 // loop_pre_header
            _
          $region147: #{tpu_custom_call.1} parent=144 // loop_header
            %s220 = sphi 0, %s224
            %p221 = scmp.ge.s32.totalorder %s220, 1
            %s225 = sphi %s211, %s211
            %s226 = sphi %s212, %s212
          $region148: #{tpu_custom_call.1} parent=144 // loop_header_branch
            %223 = sbr.rel (%p221) target = $region152
          $region149: #{tpu_custom_call.1} parent=144 // loop_body
            %v227 = vld [vmem:[%s225] sm:%s218]
            %228 = vst [vmem:[%s226] sm:%s218] %v227
          $region150: #{tpu_custom_call.1} parent=144 // loop_footer
            %s224 = sadd.s32 1, %s220
          $region151: #{tpu_custom_call.1} parent=144 // loop_footer_branch
            %219 = sbr.rel target = $region147
          $region152: #{tpu_custom_call.1} parent=144 // loop_exit
            _
        $region145: #{tpu_custom_call.1} parent=46 // pred_fallthru
          _
        // Predicated region
        $region164: #{tpu_custom_call.1} parent=46 // pred_check
          _
        $region165: #{tpu_custom_call.1} parent=46 // pred_check_branch
          %245 = sbr.rel (0) target = $region167
        $region166: #{tpu_custom_call.1} parent=46 // pred_region
          %246 = vsyncadd [#allocation3], 16
        $region167: #{tpu_custom_call.1} parent=46 // pred_fallthru
          _
        %s247 = scalar_lea.vmem %s1, %s31
        %s248 = scalar_lea.vmem [#allocation2], 4
        // Predicated region
        $region168: #{tpu_custom_call.1} parent=46 // pred_check
          _
        $region169: #{tpu_custom_call.1} parent=46 // pred_check_branch
          %250 = sbr.rel target = $region171
        $region170: #{tpu_custom_call.1} parent=46 // pred_region
          // Predicated region
          $region183: #{tpu_custom_call.1} parent=170 // pred_check
            _
          $region184: #{tpu_custom_call.1} parent=170 // pred_check_branch
            %266 = sbr.rel (0) target = $region186
          $region185: #{tpu_custom_call.1} parent=170 // pred_region
            %s268 = ssub.s32 2, 1
            loop: start=0, step=1, limit=1
            $region187: #{tpu_custom_call.1} parent=185 // loop_pre_header
              _
            $region188: #{tpu_custom_call.1} parent=185 // loop_header
              %s270 = sphi 0, %s274
              %p271 = scmp.ge.s32.totalorder %s270, 1
              %s275 = sphi %s247, %s247
              %s276 = sphi %s248, %s248
            $region189: #{tpu_custom_call.1} parent=185 // loop_header_branch
              %273 = sbr.rel (%p271) target = $region193
            $region190: #{tpu_custom_call.1} parent=185 // loop_body
              %v277 = vld [vmem:[%s275] sm:%s268]
              %278 = vst [vmem:[%s276] sm:%s268] %v277
            $region191: #{tpu_custom_call.1} parent=185 // loop_footer
              %s274 = sadd.s32 1, %s270
            $region192: #{tpu_custom_call.1} parent=185 // loop_footer_branch
              %269 = sbr.rel target = $region188
            $region193: #{tpu_custom_call.1} parent=185 // loop_exit
              _
          $region186: #{tpu_custom_call.1} parent=170 // pred_fallthru
            _
        $region171: #{tpu_custom_call.1} parent=46 // pred_fallthru
          _
        // Predicated region
        $region172: #{tpu_custom_call.1} parent=46 // pred_check
          _
        $region173: #{tpu_custom_call.1} parent=46 // pred_check_branch
          %252 = sbr.rel (0) target = $region175
        $region174: #{tpu_custom_call.1} parent=46 // pred_region
          %s254 = ssub.s32 2, 1
          loop: start=0, step=1, limit=1
          $region176: #{tpu_custom_call.1} parent=174 // loop_pre_header
            _
          $region177: #{tpu_custom_call.1} parent=174 // loop_header
            %s256 = sphi 0, %s260
            %p257 = scmp.ge.s32.totalorder %s256, 1
            %s261 = sphi %s247, %s247
            %s262 = sphi %s248, %s248
          $region178: #{tpu_custom_call.1} parent=174 // loop_header_branch
            %259 = sbr.rel (%p257) target = $region182
          $region179: #{tpu_custom_call.1} parent=174 // loop_body
            %v263 = vld [vmem:[%s261] sm:%s254]
            %264 = vst [vmem:[%s262] sm:%s254] %v263
          $region180: #{tpu_custom_call.1} parent=174 // loop_footer
            %s260 = sadd.s32 1, %s256
          $region181: #{tpu_custom_call.1} parent=174 // loop_footer_branch
            %255 = sbr.rel target = $region177
          $region182: #{tpu_custom_call.1} parent=174 // loop_exit
            _
        $region175: #{tpu_custom_call.1} parent=46 // pred_fallthru
          _
        // Predicated region
        $region194: #{tpu_custom_call.1} parent=46 // pred_check
          _
        $region195: #{tpu_custom_call.1} parent=46 // pred_check_branch
          %281 = sbr.rel (0) target = $region197
        $region196: #{tpu_custom_call.1} parent=46 // pred_region
          %282 = vsyncadd [#allocation3], 16
        $region197: #{tpu_custom_call.1} parent=46 // pred_fallthru
          _
        %s283 = scalar_lea.vmem %s1, %s33
        %s284 = scalar_lea.vmem [#allocation2], 5
        // Predicated region
        $region198: #{tpu_custom_call.1} parent=46 // pred_check
          _
        $region199: #{tpu_custom_call.1} parent=46 // pred_check_branch
          %286 = sbr.rel target = $region201
        $region200: #{tpu_custom_call.1} parent=46 // pred_region
          // Predicated region
          $region213: #{tpu_custom_call.1} parent=200 // pred_check
            _
          $region214: #{tpu_custom_call.1} parent=200 // pred_check_branch
            %302 = sbr.rel (0) target = $region216
          $region215: #{tpu_custom_call.1} parent=200 // pred_region
            %s304 = ssub.s32 2, 1
            loop: start=0, step=1, limit=1
            $region217: #{tpu_custom_call.1} parent=215 // loop_pre_header
              _
            $region218: #{tpu_custom_call.1} parent=215 // loop_header
              %s306 = sphi 0, %s310
              %p307 = scmp.ge.s32.totalorder %s306, 1
              %s311 = sphi %s283, %s283
              %s312 = sphi %s284, %s284
            $region219: #{tpu_custom_call.1} parent=215 // loop_header_branch
              %309 = sbr.rel (%p307) target = $region223
            $region220: #{tpu_custom_call.1} parent=215 // loop_body
              %v313 = vld [vmem:[%s311] sm:%s304]
              %314 = vst [vmem:[%s312] sm:%s304] %v313
            $region221: #{tpu_custom_call.1} parent=215 // loop_footer
              %s310 = sadd.s32 1, %s306
            $region222: #{tpu_custom_call.1} parent=215 // loop_footer_branch
              %305 = sbr.rel target = $region218
            $region223: #{tpu_custom_call.1} parent=215 // loop_exit
              _
          $region216: #{tpu_custom_call.1} parent=200 // pred_fallthru
            _
        $region201: #{tpu_custom_call.1} parent=46 // pred_fallthru
          _
        // Predicated region
        $region202: #{tpu_custom_call.1} parent=46 // pred_check
          _
        $region203: #{tpu_custom_call.1} parent=46 // pred_check_branch
          %288 = sbr.rel (0) target = $region205
        $region204: #{tpu_custom_call.1} parent=46 // pred_region
          %s290 = ssub.s32 2, 1
          loop: start=0, step=1, limit=1
          $region206: #{tpu_custom_call.1} parent=204 // loop_pre_header
            _
          $region207: #{tpu_custom_call.1} parent=204 // loop_header
            %s292 = sphi 0, %s296
            %p293 = scmp.ge.s32.totalorder %s292, 1
            %s297 = sphi %s283, %s283
            %s298 = sphi %s284, %s284
          $region208: #{tpu_custom_call.1} parent=204 // loop_header_branch
            %295 = sbr.rel (%p293) target = $region212
          $region209: #{tpu_custom_call.1} parent=204 // loop_body
            %v299 = vld [vmem:[%s297] sm:%s290]
            %300 = vst [vmem:[%s298] sm:%s290] %v299
          $region210: #{tpu_custom_call.1} parent=204 // loop_footer
            %s296 = sadd.s32 1, %s292
          $region211: #{tpu_custom_call.1} parent=204 // loop_footer_branch
            %291 = sbr.rel target = $region207
          $region212: #{tpu_custom_call.1} parent=204 // loop_exit
            _
        $region205: #{tpu_custom_call.1} parent=46 // pred_fallthru
          _
        // Predicated region
        $region224: #{tpu_custom_call.1} parent=46 // pred_check
          _
        $region225: #{tpu_custom_call.1} parent=46 // pred_check_branch
          %317 = sbr.rel (0) target = $region227
        $region226: #{tpu_custom_call.1} parent=46 // pred_region
          %318 = vsyncadd [#allocation3], 16
        $region227: #{tpu_custom_call.1} parent=46 // pred_fallthru
          _
        %s319 = scalar_lea.vmem %s1, %s35
        %s320 = scalar_lea.vmem [#allocation2], 6
        // Predicated region
        $region228: #{tpu_custom_call.1} parent=46 // pred_check
          _
        $region229: #{tpu_custom_call.1} parent=46 // pred_check_branch
          %322 = sbr.rel target = $region231
        $region230: #{tpu_custom_call.1} parent=46 // pred_region
          // Predicated region
          $region243: #{tpu_custom_call.1} parent=230 // pred_check
            _
          $region244: #{tpu_custom_call.1} parent=230 // pred_check_branch
            %338 = sbr.rel (0) target = $region246
          $region245: #{tpu_custom_call.1} parent=230 // pred_region
            %s340 = ssub.s32 2, 1
            loop: start=0, step=1, limit=1
            $region247: #{tpu_custom_call.1} parent=245 // loop_pre_header
              _
            $region248: #{tpu_custom_call.1} parent=245 // loop_header
              %s342 = sphi 0, %s346
              %p343 = scmp.ge.s32.totalorder %s342, 1
              %s347 = sphi %s319, %s319
              %s348 = sphi %s320, %s320
            $region249: #{tpu_custom_call.1} parent=245 // loop_header_branch
              %345 = sbr.rel (%p343) target = $region253
            $region250: #{tpu_custom_call.1} parent=245 // loop_body
              %v349 = vld [vmem:[%s347] sm:%s340]
              %350 = vst [vmem:[%s348] sm:%s340] %v349
            $region251: #{tpu_custom_call.1} parent=245 // loop_footer
              %s346 = sadd.s32 1, %s342
            $region252: #{tpu_custom_call.1} parent=245 // loop_footer_branch
              %341 = sbr.rel target = $region248
            $region253: #{tpu_custom_call.1} parent=245 // loop_exit
              _
          $region246: #{tpu_custom_call.1} parent=230 // pred_fallthru
            _
        $region231: #{tpu_custom_call.1} parent=46 // pred_fallthru
          _
        // Predicated region
        $region232: #{tpu_custom_call.1} parent=46 // pred_check
          _
        $region233: #{tpu_custom_call.1} parent=46 // pred_check_branch
          %324 = sbr.rel (0) target = $region235
        $region234: #{tpu_custom_call.1} parent=46 // pred_region
          %s326 = ssub.s32 2, 1
          loop: start=0, step=1, limit=1
          $region236: #{tpu_custom_call.1} parent=234 // loop_pre_header
            _
          $region237: #{tpu_custom_call.1} parent=234 // loop_header
            %s328 = sphi 0, %s332
            %p329 = scmp.ge.s32.totalorder %s328, 1
            %s333 = sphi %s319, %s319
            %s334 = sphi %s320, %s320
          $region238: #{tpu_custom_call.1} parent=234 // loop_header_branch
            %331 = sbr.rel (%p329) target = $region242
          $region239: #{tpu_custom_call.1} parent=234 // loop_body
            %v335 = vld [vmem:[%s333] sm:%s326]
            %336 = vst [vmem:[%s334] sm:%s326] %v335
          $region240: #{tpu_custom_call.1} parent=234 // loop_footer
            %s332 = sadd.s32 1, %s328
          $region241: #{tpu_custom_call.1} parent=234 // loop_footer_branch
            %327 = sbr.rel target = $region237
          $region242: #{tpu_custom_call.1} parent=234 // loop_exit
            _
        $region235: #{tpu_custom_call.1} parent=46 // pred_fallthru
          _
        // Predicated region
        $region254: #{tpu_custom_call.1} parent=46 // pred_check
          _
        $region255: #{tpu_custom_call.1} parent=46 // pred_check_branch
          %353 = sbr.rel (0) target = $region257
        $region256: #{tpu_custom_call.1} parent=46 // pred_region
          %354 = vsyncadd [#allocation3], 16
        $region257: #{tpu_custom_call.1} parent=46 // pred_fallthru
          _
        %s355 = scalar_lea.vmem %s1, %s37
        %s356 = scalar_lea.vmem [#allocation2], 7
        // Predicated region
        $region258: #{tpu_custom_call.1} parent=46 // pred_check
          _
        $region259: #{tpu_custom_call.1} parent=46 // pred_check_branch
          %358 = sbr.rel target = $region261
        $region260: #{tpu_custom_call.1} parent=46 // pred_region
          // Predicated region
          $region273: #{tpu_custom_call.1} parent=260 // pred_check
            _
          $region274: #{tpu_custom_call.1} parent=260 // pred_check_branch
            %374 = sbr.rel (0) target = $region276
          $region275: #{tpu_custom_call.1} parent=260 // pred_region
            %s376 = ssub.s32 2, 1
            loop: start=0, step=1, limit=1
            $region277: #{tpu_custom_call.1} parent=275 // loop_pre_header
              _
            $region278: #{tpu_custom_call.1} parent=275 // loop_header
              %s378 = sphi 0, %s382
              %p379 = scmp.ge.s32.totalorder %s378, 1
              %s383 = sphi %s355, %s355
              %s384 = sphi %s356, %s356
            $region279: #{tpu_custom_call.1} parent=275 // loop_header_branch
              %381 = sbr.rel (%p379) target = $region283
            $region280: #{tpu_custom_call.1} parent=275 // loop_body
              %v385 = vld [vmem:[%s383] sm:%s376]
              %386 = vst [vmem:[%s384] sm:%s376] %v385
            $region281: #{tpu_custom_call.1} parent=275 // loop_footer
              %s382 = sadd.s32 1, %s378
            $region282: #{tpu_custom_call.1} parent=275 // loop_footer_branch
              %377 = sbr.rel target = $region278
            $region283: #{tpu_custom_call.1} parent=275 // loop_exit
              _
          $region276: #{tpu_custom_call.1} parent=260 // pred_fallthru
            _
        $region261: #{tpu_custom_call.1} parent=46 // pred_fallthru
          _
        // Predicated region
        $region262: #{tpu_custom_call.1} parent=46 // pred_check
          _
        $region263: #{tpu_custom_call.1} parent=46 // pred_check_branch
          %360 = sbr.rel (0) target = $region265
        $region264: #{tpu_custom_call.1} parent=46 // pred_region
          %s362 = ssub.s32 2, 1
          loop: start=0, step=1, limit=1
          $region266: #{tpu_custom_call.1} parent=264 // loop_pre_header
            _
          $region267: #{tpu_custom_call.1} parent=264 // loop_header
            %s364 = sphi 0, %s368
            %p365 = scmp.ge.s32.totalorder %s364, 1
            %s369 = sphi %s355, %s355
            %s370 = sphi %s356, %s356
          $region268: #{tpu_custom_call.1} parent=264 // loop_header_branch
            %367 = sbr.rel (%p365) target = $region272
          $region269: #{tpu_custom_call.1} parent=264 // loop_body
            %v371 = vld [vmem:[%s369] sm:%s362]
            %372 = vst [vmem:[%s370] sm:%s362] %v371
          $region270: #{tpu_custom_call.1} parent=264 // loop_footer
            %s368 = sadd.s32 1, %s364
          $region271: #{tpu_custom_call.1} parent=264 // loop_footer_branch
            %363 = sbr.rel target = $region267
          $region272: #{tpu_custom_call.1} parent=264 // loop_exit
            _
        $region265: #{tpu_custom_call.1} parent=46 // pred_fallthru
          _
        // Predicated region
        $region284: #{tpu_custom_call.1} parent=46 // pred_check
          _
        $region285: #{tpu_custom_call.1} parent=46 // pred_check_branch
          %389 = sbr.rel (0) target = $region287
        $region286: #{tpu_custom_call.1} parent=46 // pred_region
          %390 = vsyncadd [#allocation3], 16
        $region287: #{tpu_custom_call.1} parent=46 // pred_fallthru
          _
      $region47: #{tpu_custom_call.1} parent=4 // pred_fallthru
        _
      %s391 = sadd.s32 %s22, 8
      %s392 = sld [smem:[#allocation5 + %s391]]
      %s393 = sadd.s32 %s22, 9
      %s394 = sld [smem:[#allocation5 + %s393]]
      %s395 = sadd.s32 %s22, 10
      %s396 = sld [smem:[#allocation5 + %s395]]
      %s397 = sadd.s32 %s22, 11
      %s398 = sld [smem:[#allocation5 + %s397]]
      %s399 = sadd.s32 %s22, 12
      %s400 = sld [smem:[#allocation5 + %s399]]
      %s401 = sadd.s32 %s22, 13
      %s402 = sld [smem:[#allocation5 + %s401]]
      %s403 = sadd.s32 %s22, 14
      %s404 = sld [smem:[#allocation5 + %s403]]
      %s405 = sadd.s32 %s22, 15
      %s406 = sld [smem:[#allocation5 + %s405]]
      %s407 = sadd.s32 %s392, 1
      %p408 = scmp.eq.s32.totalorder %s394, %s407
      %s409 = sadd.s32 %s392, 2
      %p410 = scmp.eq.s32.totalorder %s396, %s409
      %p411 = pnand %p408, %p410
      %p412 = pneg %p411
      %s413 = sadd.s32 %s392, 3
      %p414 = scmp.eq.s32.totalorder %s398, %s413
      %p415 = pnand %p412, %p414
      %p416 = pneg %p415
      %s417 = sadd.s32 %s392, 4
      %p418 = scmp.eq.s32.totalorder %s400, %s417
      %p419 = pnand %p416, %p418
      %p420 = pneg %p419
      %s421 = sadd.s32 %s392, 5
      %p422 = scmp.eq.s32.totalorder %s402, %s421
      %p423 = pnand %p420, %p422
      %p424 = pneg %p423
      %s425 = sadd.s32 %s392, 6
      %p426 = scmp.eq.s32.totalorder %s404, %s425
      %p427 = pnand %p424, %p426
      %p428 = pneg %p427
      %s429 = sadd.s32 %s392, 7
      %p430 = scmp.eq.s32.totalorder %s406, %s429
      %p431 = pnand %p428, %p430
      %p432 = pneg %p431
      // Predicated region
      $region288: #{tpu_custom_call.1} parent=4 // pred_check
        _
      $region289: #{tpu_custom_call.1} parent=4 // pred_check_branch
        %434 = sbr.rel (%p431) target = $region291
      $region290: #{tpu_custom_call.1} parent=4 // pred_region
        %s435 = scalar_lea.vmem %s1, %s392
        %s436 = scalar_lea.vmem [#allocation2], 8
        // Predicated region
        $region292: #{tpu_custom_call.1} parent=290 // pred_check
          _
        $region293: #{tpu_custom_call.1} parent=290 // pred_check_branch
          %438 = sbr.rel (0) target = $region295
        $region294: #{tpu_custom_call.1} parent=290 // pred_region
          // Predicated region
          $region307: #{tpu_custom_call.1} parent=294 // pred_check
            _
          $region308: #{tpu_custom_call.1} parent=294 // pred_check_branch
            %454 = sbr.rel (0) target = $region310
          $region309: #{tpu_custom_call.1} parent=294 // pred_region
            loop: start=0, step=1, limit=1
            $region311: #{tpu_custom_call.1} parent=309 // loop_pre_header
              _
            $region312: #{tpu_custom_call.1} parent=309 // loop_header
              %s456 = sphi 0, %s460
              %p457 = scmp.ge.s32.totalorder %s456, 1
              %s461 = sphi %s435, %s435
              %s462 = sphi %s436, %s436
            $region313: #{tpu_custom_call.1} parent=309 // loop_header_branch
              %459 = sbr.rel (%p457) target = $region317
            $region314: #{tpu_custom_call.1} parent=309 // loop_body
              %v463 = vld [vmem:[%s461] sm:$0xff]
              %464 = vst [vmem:[%s462] sm:$0xff] %v463
            $region315: #{tpu_custom_call.1} parent=309 // loop_footer
              %s460 = sadd.s32 1, %s456
            $region316: #{tpu_custom_call.1} parent=309 // loop_footer_branch
              %455 = sbr.rel target = $region312
            $region317: #{tpu_custom_call.1} parent=309 // loop_exit
              _
          $region310: #{tpu_custom_call.1} parent=294 // pred_fallthru
            _
          // Predicated region
          $region318: #{tpu_custom_call.1} parent=294 // pred_check
            _
          $region319: #{tpu_custom_call.1} parent=294 // pred_check_branch
            %466 = sbr.rel target = $region321
          $region320: #{tpu_custom_call.1} parent=294 // pred_region
            _
          $region321: #{tpu_custom_call.1} parent=294 // pred_fallthru
            _
        $region295: #{tpu_custom_call.1} parent=290 // pred_fallthru
          _
        // Predicated region
        $region296: #{tpu_custom_call.1} parent=290 // pred_check
          _
        $region297: #{tpu_custom_call.1} parent=290 // pred_check_branch
          %440 = sbr.rel target = $region299
        $region298: #{tpu_custom_call.1} parent=290 // pred_region
          %s442 = ssub.s32 256, 1
          loop: start=0, step=1, limit=1
          $region300: #{tpu_custom_call.1} parent=298 // loop_pre_header
            _
          $region301: #{tpu_custom_call.1} parent=298 // loop_header
            %s444 = sphi 0, %s448
            %p445 = scmp.ge.s32.totalorder %s444, 1
            %s449 = sphi %s435, %s435
            %s450 = sphi %s436, %s436
          $region302: #{tpu_custom_call.1} parent=298 // loop_header_branch
            %447 = sbr.rel (%p445) target = $region306
          $region303: #{tpu_custom_call.1} parent=298 // loop_body
            %v451 = vld [vmem:[%s449] sm:%s442]
            %452 = vst [vmem:[%s450] sm:%s442] %v451
          $region304: #{tpu_custom_call.1} parent=298 // loop_footer
            %s448 = sadd.s32 1, %s444
          $region305: #{tpu_custom_call.1} parent=298 // loop_footer_branch
            %443 = sbr.rel target = $region301
          $region306: #{tpu_custom_call.1} parent=298 // loop_exit
            _
        $region299: #{tpu_custom_call.1} parent=290 // pred_fallthru
          _
        // Predicated region
        $region322: #{tpu_custom_call.1} parent=290 // pred_check
          _
        $region323: #{tpu_custom_call.1} parent=290 // pred_check_branch
          %469 = sbr.rel (0) target = $region325
        $region324: #{tpu_custom_call.1} parent=290 // pred_region
          %470 = vsyncadd [#allocation3], 128
        $region325: #{tpu_custom_call.1} parent=290 // pred_fallthru
          _
      $region291: #{tpu_custom_call.1} parent=4 // pred_fallthru
        _
      %p471 = pneg %p432
      // Predicated region
      $region326: #{tpu_custom_call.1} parent=4 // pred_check
        _
      $region327: #{tpu_custom_call.1} parent=4 // pred_check_branch
        %473 = sbr.rel (%p432) target = $region329
      $region328: #{tpu_custom_call.1} parent=4 // pred_region
        %s474 = scalar_lea.vmem %s1, %s392
        %s475 = scalar_lea.vmem [#allocation2], 8
        // Predicated region
        $region330: #{tpu_custom_call.1} parent=328 // pred_check
          _
        $region331: #{tpu_custom_call.1} parent=328 // pred_check_branch
          %477 = sbr.rel target = $region333
        $region332: #{tpu_custom_call.1} parent=328 // pred_region
          // Predicated region
          $region345: #{tpu_custom_call.1} parent=332 // pred_check
            _
          $region346: #{tpu_custom_call.1} parent=332 // pred_check_branch
            %493 = sbr.rel (0) target = $region348
          $region347: #{tpu_custom_call.1} parent=332 // pred_region
            %s495 = ssub.s32 2, 1
            loop: start=0, step=1, limit=1
            $region349: #{tpu_custom_call.1} parent=347 // loop_pre_header
              _
            $region350: #{tpu_custom_call.1} parent=347 // loop_header
              %s497 = sphi 0, %s501
              %p498 = scmp.ge.s32.totalorder %s497, 1
              %s502 = sphi %s474, %s474
              %s503 = sphi %s475, %s475
            $region351: #{tpu_custom_call.1} parent=347 // loop_header_branch
              %500 = sbr.rel (%p498) target = $region355
            $region352: #{tpu_custom_call.1} parent=347 // loop_body
              %v504 = vld [vmem:[%s502] sm:%s495]
              %505 = vst [vmem:[%s503] sm:%s495] %v504
            $region353: #{tpu_custom_call.1} parent=347 // loop_footer
              %s501 = sadd.s32 1, %s497
            $region354: #{tpu_custom_call.1} parent=347 // loop_footer_branch
              %496 = sbr.rel target = $region350
            $region355: #{tpu_custom_call.1} parent=347 // loop_exit
              _
          $region348: #{tpu_custom_call.1} parent=332 // pred_fallthru
            _
        $region333: #{tpu_custom_call.1} parent=328 // pred_fallthru
          _
        // Predicated region
        $region334: #{tpu_custom_call.1} parent=328 // pred_check
          _
        $region335: #{tpu_custom_call.1} parent=328 // pred_check_branch
          %479 = sbr.rel (0) target = $region337
        $region336: #{tpu_custom_call.1} parent=328 // pred_region
          %s481 = ssub.s32 2, 1
          loop: start=0, step=1, limit=1
          $region338: #{tpu_custom_call.1} parent=336 // loop_pre_header
            _
          $region339: #{tpu_custom_call.1} parent=336 // loop_header
            %s483 = sphi 0, %s487
            %p484 = scmp.ge.s32.totalorder %s483, 1
            %s488 = sphi %s474, %s474
            %s489 = sphi %s475, %s475
          $region340: #{tpu_custom_call.1} parent=336 // loop_header_branch
            %486 = sbr.rel (%p484) target = $region344
          $region341: #{tpu_custom_call.1} parent=336 // loop_body
            %v490 = vld [vmem:[%s488] sm:%s481]
            %491 = vst [vmem:[%s489] sm:%s481] %v490
          $region342: #{tpu_custom_call.1} parent=336 // loop_footer
            %s487 = sadd.s32 1, %s483
          $region343: #{tpu_custom_call.1} parent=336 // loop_footer_branch
            %482 = sbr.rel target = $region339
          $region344: #{tpu_custom_call.1} parent=336 // loop_exit
            _
        $region337: #{tpu_custom_call.1} parent=328 // pred_fallthru
          _
        // Predicated region
        $region356: #{tpu_custom_call.1} parent=328 // pred_check
          _
        $region357: #{tpu_custom_call.1} parent=328 // pred_check_branch
          %508 = sbr.rel (0) target = $region359
        $region358: #{tpu_custom_call.1} parent=328 // pred_region
          %509 = vsyncadd [#allocation3], 16
        $region359: #{tpu_custom_call.1} parent=328 // pred_fallthru
          _
        %s510 = scalar_lea.vmem %s1, %s394
        %s511 = scalar_lea.vmem [#allocation2], 9
        // Predicated region
        $region360: #{tpu_custom_call.1} parent=328 // pred_check
          _
        $region361: #{tpu_custom_call.1} parent=328 // pred_check_branch
          %513 = sbr.rel target = $region363
        $region362: #{tpu_custom_call.1} parent=328 // pred_region
          // Predicated region
          $region375: #{tpu_custom_call.1} parent=362 // pred_check
            _
          $region376: #{tpu_custom_call.1} parent=362 // pred_check_branch
            %529 = sbr.rel (0) target = $region378
          $region377: #{tpu_custom_call.1} parent=362 // pred_region
            %s531 = ssub.s32 2, 1
            loop: start=0, step=1, limit=1
            $region379: #{tpu_custom_call.1} parent=377 // loop_pre_header
              _
            $region380: #{tpu_custom_call.1} parent=377 // loop_header
              %s533 = sphi 0, %s537
              %p534 = scmp.ge.s32.totalorder %s533, 1
              %s538 = sphi %s510, %s510
              %s539 = sphi %s511, %s511
            $region381: #{tpu_custom_call.1} parent=377 // loop_header_branch
              %536 = sbr.rel (%p534) target = $region385
            $region382: #{tpu_custom_call.1} parent=377 // loop_body
              %v540 = vld [vmem:[%s538] sm:%s531]
              %541 = vst [vmem:[%s539] sm:%s531] %v540
            $region383: #{tpu_custom_call.1} parent=377 // loop_footer
              %s537 = sadd.s32 1, %s533
            $region384: #{tpu_custom_call.1} parent=377 // loop_footer_branch
              %532 = sbr.rel target = $region380
            $region385: #{tpu_custom_call.1} parent=377 // loop_exit
              _
          $region378: #{tpu_custom_call.1} parent=362 // pred_fallthru
            _
        $region363: #{tpu_custom_call.1} parent=328 // pred_fallthru
          _
        // Predicated region
        $region364: #{tpu_custom_call.1} parent=328 // pred_check
          _
        $region365: #{tpu_custom_call.1} parent=328 // pred_check_branch
          %515 = sbr.rel (0) target = $region367
        $region366: #{tpu_custom_call.1} parent=328 // pred_region
          %s517 = ssub.s32 2, 1
          loop: start=0, step=1, limit=1
          $region368: #{tpu_custom_call.1} parent=366 // loop_pre_header
            _
          $region369: #{tpu_custom_call.1} parent=366 // loop_header
            %s519 = sphi 0, %s523
            %p520 = scmp.ge.s32.totalorder %s519, 1
            %s524 = sphi %s510, %s510
            %s525 = sphi %s511, %s511
          $region370: #{tpu_custom_call.1} parent=366 // loop_header_branch
            %522 = sbr.rel (%p520) target = $region374
          $region371: #{tpu_custom_call.1} parent=366 // loop_body
            %v526 = vld [vmem:[%s524] sm:%s517]
            %527 = vst [vmem:[%s525] sm:%s517] %v526
          $region372: #{tpu_custom_call.1} parent=366 // loop_footer
            %s523 = sadd.s32 1, %s519
          $region373: #{tpu_custom_call.1} parent=366 // loop_footer_branch
            %518 = sbr.rel target = $region369
          $region374: #{tpu_custom_call.1} parent=366 // loop_exit
            _
        $region367: #{tpu_custom_call.1} parent=328 // pred_fallthru
          _
        // Predicated region
        $region386: #{tpu_custom_call.1} parent=328 // pred_check
          _
        $region387: #{tpu_custom_call.1} parent=328 // pred_check_branch
          %544 = sbr.rel (0) target = $region389
        $region388: #{tpu_custom_call.1} parent=328 // pred_region
          %545 = vsyncadd [#allocation3], 16
        $region389: #{tpu_custom_call.1} parent=328 // pred_fallthru
          _
        %s546 = scalar_lea.vmem %s1, %s396
        %s547 = scalar_lea.vmem [#allocation2], 10
        // Predicated region
        $region390: #{tpu_custom_call.1} parent=328 // pred_check
          _
        $region391: #{tpu_custom_call.1} parent=328 // pred_check_branch
          %549 = sbr.rel target = $region393
        $region392: #{tpu_custom_call.1} parent=328 // pred_region
          // Predicated region
          $region405: #{tpu_custom_call.1} parent=392 // pred_check
            _
          $region406: #{tpu_custom_call.1} parent=392 // pred_check_branch
            %565 = sbr.rel (0) target = $region408
          $region407: #{tpu_custom_call.1} parent=392 // pred_region
            %s567 = ssub.s32 2, 1
            loop: start=0, step=1, limit=1
            $region409: #{tpu_custom_call.1} parent=407 // loop_pre_header
              _
            $region410: #{tpu_custom_call.1} parent=407 // loop_header
              %s569 = sphi 0, %s573
              %p570 = scmp.ge.s32.totalorder %s569, 1
              %s574 = sphi %s546, %s546
              %s575 = sphi %s547, %s547
            $region411: #{tpu_custom_call.1} parent=407 // loop_header_branch
              %572 = sbr.rel (%p570) target = $region415
            $region412: #{tpu_custom_call.1} parent=407 // loop_body
              %v576 = vld [vmem:[%s574] sm:%s567]
              %577 = vst [vmem:[%s575] sm:%s567] %v576
            $region413: #{tpu_custom_call.1} parent=407 // loop_footer
              %s573 = sadd.s32 1, %s569
            $region414: #{tpu_custom_call.1} parent=407 // loop_footer_branch
              %568 = sbr.rel target = $region410
            $region415: #{tpu_custom_call.1} parent=407 // loop_exit
              _
          $region408: #{tpu_custom_call.1} parent=392 // pred_fallthru
            _
        $region393: #{tpu_custom_call.1} parent=328 // pred_fallthru
          _
        // Predicated region
        $region394: #{tpu_custom_call.1} parent=328 // pred_check
          _
        $region395: #{tpu_custom_call.1} parent=328 // pred_check_branch
          %551 = sbr.rel (0) target = $region397
        $region396: #{tpu_custom_call.1} parent=328 // pred_region
          %s553 = ssub.s32 2, 1
          loop: start=0, step=1, limit=1
          $region398: #{tpu_custom_call.1} parent=396 // loop_pre_header
            _
          $region399: #{tpu_custom_call.1} parent=396 // loop_header
            %s555 = sphi 0, %s559
            %p556 = scmp.ge.s32.totalorder %s555, 1
            %s560 = sphi %s546, %s546
            %s561 = sphi %s547, %s547
          $region400: #{tpu_custom_call.1} parent=396 // loop_header_branch
            %558 = sbr.rel (%p556) target = $region404
          $region401: #{tpu_custom_call.1} parent=396 // loop_body
            %v562 = vld [vmem:[%s560] sm:%s553]
            %563 = vst [vmem:[%s561] sm:%s553] %v562
          $region402: #{tpu_custom_call.1} parent=396 // loop_footer
            %s559 = sadd.s32 1, %s555
          $region403: #{tpu_custom_call.1} parent=396 // loop_footer_branch
            %554 = sbr.rel target = $region399
          $region404: #{tpu_custom_call.1} parent=396 // loop_exit
            _
        $region397: #{tpu_custom_call.1} parent=328 // pred_fallthru
          _
        // Predicated region
        $region416: #{tpu_custom_call.1} parent=328 // pred_check
          _
        $region417: #{tpu_custom_call.1} parent=328 // pred_check_branch
          %580 = sbr.rel (0) target = $region419
        $region418: #{tpu_custom_call.1} parent=328 // pred_region
          %581 = vsyncadd [#allocation3], 16
        $region419: #{tpu_custom_call.1} parent=328 // pred_fallthru
          _
        %s582 = scalar_lea.vmem %s1, %s398
        %s583 = scalar_lea.vmem [#allocation2], 11
        // Predicated region
        $region420: #{tpu_custom_call.1} parent=328 // pred_check
          _
        $region421: #{tpu_custom_call.1} parent=328 // pred_check_branch
          %585 = sbr.rel target = $region423
        $region422: #{tpu_custom_call.1} parent=328 // pred_region
          // Predicated region
          $region435: #{tpu_custom_call.1} parent=422 // pred_check
            _
          $region436: #{tpu_custom_call.1} parent=422 // pred_check_branch
            %601 = sbr.rel (0) target = $region438
          $region437: #{tpu_custom_call.1} parent=422 // pred_region
            %s603 = ssub.s32 2, 1
            loop: start=0, step=1, limit=1
            $region439: #{tpu_custom_call.1} parent=437 // loop_pre_header
              _
            $region440: #{tpu_custom_call.1} parent=437 // loop_header
              %s605 = sphi 0, %s609
              %p606 = scmp.ge.s32.totalorder %s605, 1
              %s610 = sphi %s582, %s582
              %s611 = sphi %s583, %s583
            $region441: #{tpu_custom_call.1} parent=437 // loop_header_branch
              %608 = sbr.rel (%p606) target = $region445
            $region442: #{tpu_custom_call.1} parent=437 // loop_body
              %v612 = vld [vmem:[%s610] sm:%s603]
              %613 = vst [vmem:[%s611] sm:%s603] %v612
            $region443: #{tpu_custom_call.1} parent=437 // loop_footer
              %s609 = sadd.s32 1, %s605
            $region444: #{tpu_custom_call.1} parent=437 // loop_footer_branch
              %604 = sbr.rel target = $region440
            $region445: #{tpu_custom_call.1} parent=437 // loop_exit
              _
          $region438: #{tpu_custom_call.1} parent=422 // pred_fallthru
            _
        $region423: #{tpu_custom_call.1} parent=328 // pred_fallthru
          _
        // Predicated region
        $region424: #{tpu_custom_call.1} parent=328 // pred_check
          _
        $region425: #{tpu_custom_call.1} parent=328 // pred_check_branch
          %587 = sbr.rel (0) target = $region427
        $region426: #{tpu_custom_call.1} parent=328 // pred_region
          %s589 = ssub.s32 2, 1
          loop: start=0, step=1, limit=1
          $region428: #{tpu_custom_call.1} parent=426 // loop_pre_header
            _
          $region429: #{tpu_custom_call.1} parent=426 // loop_header
            %s591 = sphi 0, %s595
            %p592 = scmp.ge.s32.totalorder %s591, 1
            %s596 = sphi %s582, %s582
            %s597 = sphi %s583, %s583
          $region430: #{tpu_custom_call.1} parent=426 // loop_header_branch
            %594 = sbr.rel (%p592) target = $region434
          $region431: #{tpu_custom_call.1} parent=426 // loop_body
            %v598 = vld [vmem:[%s596] sm:%s589]
            %599 = vst [vmem:[%s597] sm:%s589] %v598
          $region432: #{tpu_custom_call.1} parent=426 // loop_footer
            %s595 = sadd.s32 1, %s591
          $region433: #{tpu_custom_call.1} parent=426 // loop_footer_branch
            %590 = sbr.rel target = $region429
          $region434: #{tpu_custom_call.1} parent=426 // loop_exit
            _
        $region427: #{tpu_custom_call.1} parent=328 // pred_fallthru
          _
        // Predicated region
        $region446: #{tpu_custom_call.1} parent=328 // pred_check
          _
        $region447: #{tpu_custom_call.1} parent=328 // pred_check_branch
          %616 = sbr.rel (0) target = $region449
        $region448: #{tpu_custom_call.1} parent=328 // pred_region
          %617 = vsyncadd [#allocation3], 16
        $region449: #{tpu_custom_call.1} parent=328 // pred_fallthru
          _
        %s618 = scalar_lea.vmem %s1, %s400
        %s619 = scalar_lea.vmem [#allocation2], 12
        // Predicated region
        $region450: #{tpu_custom_call.1} parent=328 // pred_check
          _
        $region451: #{tpu_custom_call.1} parent=328 // pred_check_branch
          %621 = sbr.rel target = $region453
        $region452: #{tpu_custom_call.1} parent=328 // pred_region
          // Predicated region
          $region465: #{tpu_custom_call.1} parent=452 // pred_check
            _
          $region466: #{tpu_custom_call.1} parent=452 // pred_check_branch
            %637 = sbr.rel (0) target = $region468
          $region467: #{tpu_custom_call.1} parent=452 // pred_region
            %s639 = ssub.s32 2, 1
            loop: start=0, step=1, limit=1
            $region469: #{tpu_custom_call.1} parent=467 // loop_pre_header
              _
            $region470: #{tpu_custom_call.1} parent=467 // loop_header
              %s641 = sphi 0, %s645
              %p642 = scmp.ge.s32.totalorder %s641, 1
              %s646 = sphi %s618, %s618
              %s647 = sphi %s619, %s619
            $region471: #{tpu_custom_call.1} parent=467 // loop_header_branch
              %644 = sbr.rel (%p642) target = $region475
            $region472: #{tpu_custom_call.1} parent=467 // loop_body
              %v648 = vld [vmem:[%s646] sm:%s639]
              %649 = vst [vmem:[%s647] sm:%s639] %v648
            $region473: #{tpu_custom_call.1} parent=467 // loop_footer
              %s645 = sadd.s32 1, %s641
            $region474: #{tpu_custom_call.1} parent=467 // loop_footer_branch
              %640 = sbr.rel target = $region470
            $region475: #{tpu_custom_call.1} parent=467 // loop_exit
              _
          $region468: #{tpu_custom_call.1} parent=452 // pred_fallthru
            _
        $region453: #{tpu_custom_call.1} parent=328 // pred_fallthru
          _
        // Predicated region
        $region454: #{tpu_custom_call.1} parent=328 // pred_check
          _
        $region455: #{tpu_custom_call.1} parent=328 // pred_check_branch
          %623 = sbr.rel (0) target = $region457
        $region456: #{tpu_custom_call.1} parent=328 // pred_region
          %s625 = ssub.s32 2, 1
          loop: start=0, step=1, limit=1
          $region458: #{tpu_custom_call.1} parent=456 // loop_pre_header
            _
          $region459: #{tpu_custom_call.1} parent=456 // loop_header
            %s627 = sphi 0, %s631
            %p628 = scmp.ge.s32.totalorder %s627, 1
            %s632 = sphi %s618, %s618
            %s633 = sphi %s619, %s619
          $region460: #{tpu_custom_call.1} parent=456 // loop_header_branch
            %630 = sbr.rel (%p628) target = $region464
          $region461: #{tpu_custom_call.1} parent=456 // loop_body
            %v634 = vld [vmem:[%s632] sm:%s625]
            %635 = vst [vmem:[%s633] sm:%s625] %v634
          $region462: #{tpu_custom_call.1} parent=456 // loop_footer
            %s631 = sadd.s32 1, %s627
          $region463: #{tpu_custom_call.1} parent=456 // loop_footer_branch
            %626 = sbr.rel target = $region459
          $region464: #{tpu_custom_call.1} parent=456 // loop_exit
            _
        $region457: #{tpu_custom_call.1} parent=328 // pred_fallthru
          _
        // Predicated region
        $region476: #{tpu_custom_call.1} parent=328 // pred_check
          _
        $region477: #{tpu_custom_call.1} parent=328 // pred_check_branch
          %652 = sbr.rel (0) target = $region479
        $region478: #{tpu_custom_call.1} parent=328 // pred_region
          %653 = vsyncadd [#allocation3], 16
        $region479: #{tpu_custom_call.1} parent=328 // pred_fallthru
          _
        %s654 = scalar_lea.vmem %s1, %s402
        %s655 = scalar_lea.vmem [#allocation2], 13
        // Predicated region
        $region480: #{tpu_custom_call.1} parent=328 // pred_check
          _
        $region481: #{tpu_custom_call.1} parent=328 // pred_check_branch
          %657 = sbr.rel target = $region483
        $region482: #{tpu_custom_call.1} parent=328 // pred_region
          // Predicated region
          $region495: #{tpu_custom_call.1} parent=482 // pred_check
            _
          $region496: #{tpu_custom_call.1} parent=482 // pred_check_branch
            %673 = sbr.rel (0) target = $region498
          $region497: #{tpu_custom_call.1} parent=482 // pred_region
            %s675 = ssub.s32 2, 1
            loop: start=0, step=1, limit=1
            $region499: #{tpu_custom_call.1} parent=497 // loop_pre_header
              _
            $region500: #{tpu_custom_call.1} parent=497 // loop_header
              %s677 = sphi 0, %s681
              %p678 = scmp.ge.s32.totalorder %s677, 1
              %s682 = sphi %s654, %s654
              %s683 = sphi %s655, %s655
            $region501: #{tpu_custom_call.1} parent=497 // loop_header_branch
              %680 = sbr.rel (%p678) target = $region505
            $region502: #{tpu_custom_call.1} parent=497 // loop_body
              %v684 = vld [vmem:[%s682] sm:%s675]
              %685 = vst [vmem:[%s683] sm:%s675] %v684
            $region503: #{tpu_custom_call.1} parent=497 // loop_footer
              %s681 = sadd.s32 1, %s677
            $region504: #{tpu_custom_call.1} parent=497 // loop_footer_branch
              %676 = sbr.rel target = $region500
            $region505: #{tpu_custom_call.1} parent=497 // loop_exit
              _
          $region498: #{tpu_custom_call.1} parent=482 // pred_fallthru
            _
        $region483: #{tpu_custom_call.1} parent=328 // pred_fallthru
          _
        // Predicated region
        $region484: #{tpu_custom_call.1} parent=328 // pred_check
          _
        $region485: #{tpu_custom_call.1} parent=328 // pred_check_branch
          %659 = sbr.rel (0) target = $region487
        $region486: #{tpu_custom_call.1} parent=328 // pred_region
          %s661 = ssub.s32 2, 1
          loop: start=0, step=1, limit=1
          $region488: #{tpu_custom_call.1} parent=486 // loop_pre_header
            _
          $region489: #{tpu_custom_call.1} parent=486 // loop_header
            %s663 = sphi 0, %s667
            %p664 = scmp.ge.s32.totalorder %s663, 1
            %s668 = sphi %s654, %s654
            %s669 = sphi %s655, %s655
          $region490: #{tpu_custom_call.1} parent=486 // loop_header_branch
            %666 = sbr.rel (%p664) target = $region494
          $region491: #{tpu_custom_call.1} parent=486 // loop_body
            %v670 = vld [vmem:[%s668] sm:%s661]
            %671 = vst [vmem:[%s669] sm:%s661] %v670
          $region492: #{tpu_custom_call.1} parent=486 // loop_footer
            %s667 = sadd.s32 1, %s663
          $region493: #{tpu_custom_call.1} parent=486 // loop_footer_branch
            %662 = sbr.rel target = $region489
          $region494: #{tpu_custom_call.1} parent=486 // loop_exit
            _
        $region487: #{tpu_custom_call.1} parent=328 // pred_fallthru
          _
        // Predicated region
        $region506: #{tpu_custom_call.1} parent=328 // pred_check
          _
        $region507: #{tpu_custom_call.1} parent=328 // pred_check_branch
          %688 = sbr.rel (0) target = $region509
        $region508: #{tpu_custom_call.1} parent=328 // pred_region
          %689 = vsyncadd [#allocation3], 16
        $region509: #{tpu_custom_call.1} parent=328 // pred_fallthru
          _
        %s690 = scalar_lea.vmem %s1, %s404
        %s691 = scalar_lea.vmem [#allocation2], 14
        // Predicated region
        $region510: #{tpu_custom_call.1} parent=328 // pred_check
          _
        $region511: #{tpu_custom_call.1} parent=328 // pred_check_branch
          %693 = sbr.rel target = $region513
        $region512: #{tpu_custom_call.1} parent=328 // pred_region
          // Predicated region
          $region525: #{tpu_custom_call.1} parent=512 // pred_check
            _
          $region526: #{tpu_custom_call.1} parent=512 // pred_check_branch
            %709 = sbr.rel (0) target = $region528
          $region527: #{tpu_custom_call.1} parent=512 // pred_region
            %s711 = ssub.s32 2, 1
            loop: start=0, step=1, limit=1
            $region529: #{tpu_custom_call.1} parent=527 // loop_pre_header
              _
            $region530: #{tpu_custom_call.1} parent=527 // loop_header
              %s713 = sphi 0, %s717
              %p714 = scmp.ge.s32.totalorder %s713, 1
              %s718 = sphi %s690, %s690
              %s719 = sphi %s691, %s691
            $region531: #{tpu_custom_call.1} parent=527 // loop_header_branch
              %716 = sbr.rel (%p714) target = $region535
            $region532: #{tpu_custom_call.1} parent=527 // loop_body
              %v720 = vld [vmem:[%s718] sm:%s711]
              %721 = vst [vmem:[%s719] sm:%s711] %v720
            $region533: #{tpu_custom_call.1} parent=527 // loop_footer
              %s717 = sadd.s32 1, %s713
            $region534: #{tpu_custom_call.1} parent=527 // loop_footer_branch
              %712 = sbr.rel target = $region530
            $region535: #{tpu_custom_call.1} parent=527 // loop_exit
              _
          $region528: #{tpu_custom_call.1} parent=512 // pred_fallthru
            _
        $region513: #{tpu_custom_call.1} parent=328 // pred_fallthru
          _
        // Predicated region
        $region514: #{tpu_custom_call.1} parent=328 // pred_check
          _
        $region515: #{tpu_custom_call.1} parent=328 // pred_check_branch
          %695 = sbr.rel (0) target = $region517
        $region516: #{tpu_custom_call.1} parent=328 // pred_region
          %s697 = ssub.s32 2, 1
          loop: start=0, step=1, limit=1
          $region518: #{tpu_custom_call.1} parent=516 // loop_pre_header
            _
          $region519: #{tpu_custom_call.1} parent=516 // loop_header
            %s699 = sphi 0, %s703
            %p700 = scmp.ge.s32.totalorder %s699, 1
            %s704 = sphi %s690, %s690
            %s705 = sphi %s691, %s691
          $region520: #{tpu_custom_call.1} parent=516 // loop_header_branch
            %702 = sbr.rel (%p700) target = $region524
          $region521: #{tpu_custom_call.1} parent=516 // loop_body
            %v706 = vld [vmem:[%s704] sm:%s697]
            %707 = vst [vmem:[%s705] sm:%s697] %v706
          $region522: #{tpu_custom_call.1} parent=516 // loop_footer
            %s703 = sadd.s32 1, %s699
          $region523: #{tpu_custom_call.1} parent=516 // loop_footer_branch
            %698 = sbr.rel target = $region519
          $region524: #{tpu_custom_call.1} parent=516 // loop_exit
            _
        $region517: #{tpu_custom_call.1} parent=328 // pred_fallthru
          _
        // Predicated region
        $region536: #{tpu_custom_call.1} parent=328 // pred_check
          _
        $region537: #{tpu_custom_call.1} parent=328 // pred_check_branch
          %724 = sbr.rel (0) target = $region539
        $region538: #{tpu_custom_call.1} parent=328 // pred_region
          %725 = vsyncadd [#allocation3], 16
        $region539: #{tpu_custom_call.1} parent=328 // pred_fallthru
          _
        %s726 = scalar_lea.vmem %s1, %s406
        %s727 = scalar_lea.vmem [#allocation2], 15
        // Predicated region
        $region540: #{tpu_custom_call.1} parent=328 // pred_check
          _
        $region541: #{tpu_custom_call.1} parent=328 // pred_check_branch
          %729 = sbr.rel target = $region543
        $region542: #{tpu_custom_call.1} parent=328 // pred_region
          // Predicated region
          $region555: #{tpu_custom_call.1} parent=542 // pred_check
            _
          $region556: #{tpu_custom_call.1} parent=542 // pred_check_branch
            %745 = sbr.rel (0) target = $region558
          $region557: #{tpu_custom_call.1} parent=542 // pred_region
            %s747 = ssub.s32 2, 1
            loop: start=0, step=1, limit=1
            $region559: #{tpu_custom_call.1} parent=557 // loop_pre_header
              _
            $region560: #{tpu_custom_call.1} parent=557 // loop_header
              %s749 = sphi 0, %s753
              %p750 = scmp.ge.s32.totalorder %s749, 1
              %s754 = sphi %s726, %s726
              %s755 = sphi %s727, %s727
            $region561: #{tpu_custom_call.1} parent=557 // loop_header_branch
              %752 = sbr.rel (%p750) target = $region565
            $region562: #{tpu_custom_call.1} parent=557 // loop_body
              %v756 = vld [vmem:[%s754] sm:%s747]
              %757 = vst [vmem:[%s755] sm:%s747] %v756
            $region563: #{tpu_custom_call.1} parent=557 // loop_footer
              %s753 = sadd.s32 1, %s749
            $region564: #{tpu_custom_call.1} parent=557 // loop_footer_branch
              %748 = sbr.rel target = $region560
            $region565: #{tpu_custom_call.1} parent=557 // loop_exit
              _
          $region558: #{tpu_custom_call.1} parent=542 // pred_fallthru
            _
        $region543: #{tpu_custom_call.1} parent=328 // pred_fallthru
          _
        // Predicated region
        $region544: #{tpu_custom_call.1} parent=328 // pred_check
          _
        $region545: #{tpu_custom_call.1} parent=328 // pred_check_branch
          %731 = sbr.rel (0) target = $region547
        $region546: #{tpu_custom_call.1} parent=328 // pred_region
          %s733 = ssub.s32 2, 1
          loop: start=0, step=1, limit=1
          $region548: #{tpu_custom_call.1} parent=546 // loop_pre_header
            _
          $region549: #{tpu_custom_call.1} parent=546 // loop_header
            %s735 = sphi 0, %s739
            %p736 = scmp.ge.s32.totalorder %s735, 1
            %s740 = sphi %s726, %s726
            %s741 = sphi %s727, %s727
          $region550: #{tpu_custom_call.1} parent=546 // loop_header_branch
            %738 = sbr.rel (%p736) target = $region554
          $region551: #{tpu_custom_call.1} parent=546 // loop_body
            %v742 = vld [vmem:[%s740] sm:%s733]
            %743 = vst [vmem:[%s741] sm:%s733] %v742
          $region552: #{tpu_custom_call.1} parent=546 // loop_footer
            %s739 = sadd.s32 1, %s735
          $region553: #{tpu_custom_call.1} parent=546 // loop_footer_branch
            %734 = sbr.rel target = $region549
          $region554: #{tpu_custom_call.1} parent=546 // loop_exit
            _
        $region547: #{tpu_custom_call.1} parent=328 // pred_fallthru
          _
        // Predicated region
        $region566: #{tpu_custom_call.1} parent=328 // pred_check
          _
        $region567: #{tpu_custom_call.1} parent=328 // pred_check_branch
          %760 = sbr.rel (0) target = $region569
        $region568: #{tpu_custom_call.1} parent=328 // pred_region
          %761 = vsyncadd [#allocation3], 16
        $region569: #{tpu_custom_call.1} parent=328 // pred_fallthru
          _
      $region329: #{tpu_custom_call.1} parent=4 // pred_fallthru
        _
      %s762 = sadd.s32 %s22, 16
      %s763 = sld [smem:[#allocation5 + %s762]]
      %s764 = sadd.s32 %s22, 17
      %s765 = sld [smem:[#allocation5 + %s764]]
      %s766 = sadd.s32 %s22, 18
      %s767 = sld [smem:[#allocation5 + %s766]]
      %s768 = sadd.s32 %s22, 19
      %s769 = sld [smem:[#allocation5 + %s768]]
      %s770 = sadd.s32 %s22, 20
      %s771 = sld [smem:[#allocation5 + %s770]]
      %s772 = sadd.s32 %s22, 21
      %s773 = sld [smem:[#allocation5 + %s772]]
      %s774 = sadd.s32 %s22, 22
      %s775 = sld [smem:[#allocation5 + %s774]]
      %s776 = sadd.s32 %s22, 23
      %s777 = sld [smem:[#allocation5 + %s776]]
      %s778 = sadd.s32 %s763, 1
      %p779 = scmp.eq.s32.totalorder %s765, %s778
      %s780 = sadd.s32 %s763, 2
      %p781 = scmp.eq.s32.totalorder %s767, %s780
      %p782 = pnand %p779, %p781
      %p783 = pneg %p782
      %s784 = sadd.s32 %s763, 3
      %p785 = scmp.eq.s32.totalorder %s769, %s784
      %p786 = pnand %p783, %p785
      %p787 = pneg %p786
      %s788 = sadd.s32 %s763, 4
      %p789 = scmp.eq.s32.totalorder %s771, %s788
      %p790 = pnand %p787, %p789
      %p791 = pneg %p790
      %s792 = sadd.s32 %s763, 5
      %p793 = scmp.eq.s32.totalorder %s773, %s792
      %p794 = pnand %p791, %p793
      %p795 = pneg %p794
      %s796 = sadd.s32 %s763, 6
      %p797 = scmp.eq.s32.totalorder %s775, %s796
      %p798 = pnand %p795, %p797
      %p799 = pneg %p798
      %s800 = sadd.s32 %s763, 7
      %p801 = scmp.eq.s32.totalorder %s777, %s800
      %p802 = pnand %p799, %p801
      %p803 = pneg %p802
      // Predicated region
      $region570: #{tpu_custom_call.1} parent=4 // pred_check
        _
      $region571: #{tpu_custom_call.1} parent=4 // pred_check_branch
        %805 = sbr.rel (%p802) target = $region573
      $region572: #{tpu_custom_call.1} parent=4 // pred_region
        %s806 = scalar_lea.vmem %s1, %s763
        %s807 = scalar_lea.vmem [#allocation2], 16
        // Predicated region
        $region574: #{tpu_custom_call.1} parent=572 // pred_check
          _
        $region575: #{tpu_custom_call.1} parent=572 // pred_check_branch
          %809 = sbr.rel (0) target = $region577
        $region576: #{tpu_custom_call.1} parent=572 // pred_region
          // Predicated region
          $region589: #{tpu_custom_call.1} parent=576 // pred_check
            _
          $region590: #{tpu_custom_call.1} parent=576 // pred_check_branch
            %825 = sbr.rel (0) target = $region592
          $region591: #{tpu_custom_call.1} parent=576 // pred_region
            loop: start=0, step=1, limit=1
            $region593: #{tpu_custom_call.1} parent=591 // loop_pre_header
              _
            $region594: #{tpu_custom_call.1} parent=591 // loop_header
              %s827 = sphi 0, %s831
              %p828 = scmp.ge.s32.totalorder %s827, 1
              %s832 = sphi %s806, %s806
              %s833 = sphi %s807, %s807
            $region595: #{tpu_custom_call.1} parent=591 // loop_header_branch
              %830 = sbr.rel (%p828) target = $region599
            $region596: #{tpu_custom_call.1} parent=591 // loop_body
              %v834 = vld [vmem:[%s832] sm:$0xff]
              %835 = vst [vmem:[%s833] sm:$0xff] %v834
            $region597: #{tpu_custom_call.1} parent=591 // loop_footer
              %s831 = sadd.s32 1, %s827
            $region598: #{tpu_custom_call.1} parent=591 // loop_footer_branch
              %826 = sbr.rel target = $region594
            $region599: #{tpu_custom_call.1} parent=591 // loop_exit
              _
          $region592: #{tpu_custom_call.1} parent=576 // pred_fallthru
            _
          // Predicated region
          $region600: #{tpu_custom_call.1} parent=576 // pred_check
            _
          $region601: #{tpu_custom_call.1} parent=576 // pred_check_branch
            %837 = sbr.rel target = $region603
          $region602: #{tpu_custom_call.1} parent=576 // pred_region
            _
          $region603: #{tpu_custom_call.1} parent=576 // pred_fallthru
            _
        $region577: #{tpu_custom_call.1} parent=572 // pred_fallthru
          _
        // Predicated region
        $region578: #{tpu_custom_call.1} parent=572 // pred_check
          _
        $region579: #{tpu_custom_call.1} parent=572 // pred_check_branch
          %811 = sbr.rel target = $region581
        $region580: #{tpu_custom_call.1} parent=572 // pred_region
          %s813 = ssub.s32 256, 1
          loop: start=0, step=1, limit=1
          $region582: #{tpu_custom_call.1} parent=580 // loop_pre_header
            _
          $region583: #{tpu_custom_call.1} parent=580 // loop_header
            %s815 = sphi 0, %s819
            %p816 = scmp.ge.s32.totalorder %s815, 1
            %s820 = sphi %s806, %s806
            %s821 = sphi %s807, %s807
          $region584: #{tpu_custom_call.1} parent=580 // loop_header_branch
            %818 = sbr.rel (%p816) target = $region588
          $region585: #{tpu_custom_call.1} parent=580 // loop_body
            %v822 = vld [vmem:[%s820] sm:%s813]
            %823 = vst [vmem:[%s821] sm:%s813] %v822
          $region586: #{tpu_custom_call.1} parent=580 // loop_footer
            %s819 = sadd.s32 1, %s815
          $region587: #{tpu_custom_call.1} parent=580 // loop_footer_branch
            %814 = sbr.rel target = $region583
          $region588: #{tpu_custom_call.1} parent=580 // loop_exit
            _
        $region581: #{tpu_custom_call.1} parent=572 // pred_fallthru
          _
        // Predicated region
        $region604: #{tpu_custom_call.1} parent=572 // pred_check
          _
        $region605: #{tpu_custom_call.1} parent=572 // pred_check_branch
          %840 = sbr.rel (0) target = $region607
        $region606: #{tpu_custom_call.1} parent=572 // pred_region
          %841 = vsyncadd [#allocation3], 128
        $region607: #{tpu_custom_call.1} parent=572 // pred_fallthru
          _
      $region573: #{tpu_custom_call.1} parent=4 // pred_fallthru
        _
      %p842 = pneg %p803
      // Predicated region
      $region608: #{tpu_custom_call.1} parent=4 // pred_check
        _
      $region609: #{tpu_custom_call.1} parent=4 // pred_check_branch
        %844 = sbr.rel (%p803) target = $region611
      $region610: #{tpu_custom_call.1} parent=4 // pred_region
        %s845 = scalar_lea.vmem %s1, %s763
        %s846 = scalar_lea.vmem [#allocation2], 16
        // Predicated region
        $region612: #{tpu_custom_call.1} parent=610 // pred_check
          _
        $region613: #{tpu_custom_call.1} parent=610 // pred_check_branch
          %848 = sbr.rel target = $region615
        $region614: #{tpu_custom_call.1} parent=610 // pred_region
          // Predicated region
          $region627: #{tpu_custom_call.1} parent=614 // pred_check
            _
          $region628: #{tpu_custom_call.1} parent=614 // pred_check_branch
            %864 = sbr.rel (0) target = $region630
          $region629: #{tpu_custom_call.1} parent=614 // pred_region
            %s866 = ssub.s32 2, 1
            loop: start=0, step=1, limit=1
            $region631: #{tpu_custom_call.1} parent=629 // loop_pre_header
              _
            $region632: #{tpu_custom_call.1} parent=629 // loop_header
              %s868 = sphi 0, %s872
              %p869 = scmp.ge.s32.totalorder %s868, 1
              %s873 = sphi %s845, %s845
              %s874 = sphi %s846, %s846
            $region633: #{tpu_custom_call.1} parent=629 // loop_header_branch
              %871 = sbr.rel (%p869) target = $region637
            $region634: #{tpu_custom_call.1} parent=629 // loop_body
              %v875 = vld [vmem:[%s873] sm:%s866]
              %876 = vst [vmem:[%s874] sm:%s866] %v875
            $region635: #{tpu_custom_call.1} parent=629 // loop_footer
              %s872 = sadd.s32 1, %s868
            $region636: #{tpu_custom_call.1} parent=629 // loop_footer_branch
              %867 = sbr.rel target = $region632
            $region637: #{tpu_custom_call.1} parent=629 // loop_exit
              _
          $region630: #{tpu_custom_call.1} parent=614 // pred_fallthru
            _
        $region615: #{tpu_custom_call.1} parent=610 // pred_fallthru
          _
        // Predicated region
        $region616: #{tpu_custom_call.1} parent=610 // pred_check
          _
        $region617: #{tpu_custom_call.1} parent=610 // pred_check_branch
          %850 = sbr.rel (0) target = $region619
        $region618: #{tpu_custom_call.1} parent=610 // pred_region
          %s852 = ssub.s32 2, 1
          loop: start=0, step=1, limit=1
          $region620: #{tpu_custom_call.1} parent=618 // loop_pre_header
            _
          $region621: #{tpu_custom_call.1} parent=618 // loop_header
            %s854 = sphi 0, %s858
            %p855 = scmp.ge.s32.totalorder %s854, 1
            %s859 = sphi %s845, %s845
            %s860 = sphi %s846, %s846
          $region622: #{tpu_custom_call.1} parent=618 // loop_header_branch
            %857 = sbr.rel (%p855) target = $region626
          $region623: #{tpu_custom_call.1} parent=618 // loop_body
            %v861 = vld [vmem:[%s859] sm:%s852]
            %862 = vst [vmem:[%s860] sm:%s852] %v861
          $region624: #{tpu_custom_call.1} parent=618 // loop_footer
            %s858 = sadd.s32 1, %s854
          $region625: #{tpu_custom_call.1} parent=618 // loop_footer_branch
            %853 = sbr.rel target = $region621
          $region626: #{tpu_custom_call.1} parent=618 // loop_exit
            _
        $region619: #{tpu_custom_call.1} parent=610 // pred_fallthru
          _
        // Predicated region
        $region638: #{tpu_custom_call.1} parent=610 // pred_check
          _
        $region639: #{tpu_custom_call.1} parent=610 // pred_check_branch
          %879 = sbr.rel (0) target = $region641
        $region640: #{tpu_custom_call.1} parent=610 // pred_region
          %880 = vsyncadd [#allocation3], 16
        $region641: #{tpu_custom_call.1} parent=610 // pred_fallthru
          _
        %s881 = scalar_lea.vmem %s1, %s765
        %s882 = scalar_lea.vmem [#allocation2], 17
        // Predicated region
        $region642: #{tpu_custom_call.1} parent=610 // pred_check
          _
        $region643: #{tpu_custom_call.1} parent=610 // pred_check_branch
          %884 = sbr.rel target = $region645
        $region644: #{tpu_custom_call.1} parent=610 // pred_region
          // Predicated region
          $region657: #{tpu_custom_call.1} parent=644 // pred_check
            _
          $region658: #{tpu_custom_call.1} parent=644 // pred_check_branch
            %900 = sbr.rel (0) target = $region660
          $region659: #{tpu_custom_call.1} parent=644 // pred_region
            %s902 = ssub.s32 2, 1
            loop: start=0, step=1, limit=1
            $region661: #{tpu_custom_call.1} parent=659 // loop_pre_header
              _
            $region662: #{tpu_custom_call.1} parent=659 // loop_header
              %s904 = sphi 0, %s908
              %p905 = scmp.ge.s32.totalorder %s904, 1
              %s909 = sphi %s881, %s881
              %s910 = sphi %s882, %s882
            $region663: #{tpu_custom_call.1} parent=659 // loop_header_branch
              %907 = sbr.rel (%p905) target = $region667
            $region664: #{tpu_custom_call.1} parent=659 // loop_body
              %v911 = vld [vmem:[%s909] sm:%s902]
              %912 = vst [vmem:[%s910] sm:%s902] %v911
            $region665: #{tpu_custom_call.1} parent=659 // loop_footer
              %s908 = sadd.s32 1, %s904
            $region666: #{tpu_custom_call.1} parent=659 // loop_footer_branch
              %903 = sbr.rel target = $region662
            $region667: #{tpu_custom_call.1} parent=659 // loop_exit
              _
          $region660: #{tpu_custom_call.1} parent=644 // pred_fallthru
            _
        $region645: #{tpu_custom_call.1} parent=610 // pred_fallthru
          _
        // Predicated region
        $region646: #{tpu_custom_call.1} parent=610 // pred_check
          _
        $region647: #{tpu_custom_call.1} parent=610 // pred_check_branch
          %886 = sbr.rel (0) target = $region649
        $region648: #{tpu_custom_call.1} parent=610 // pred_region
          %s888 = ssub.s32 2, 1
          loop: start=0, step=1, limit=1
          $region650: #{tpu_custom_call.1} parent=648 // loop_pre_header
            _
          $region651: #{tpu_custom_call.1} parent=648 // loop_header
            %s890 = sphi 0, %s894
            %p891 = scmp.ge.s32.totalorder %s890, 1
            %s895 = sphi %s881, %s881
            %s896 = sphi %s882, %s882
          $region652: #{tpu_custom_call.1} parent=648 // loop_header_branch
            %893 = sbr.rel (%p891) target = $region656
          $region653: #{tpu_custom_call.1} parent=648 // loop_body
            %v897 = vld [vmem:[%s895] sm:%s888]
            %898 = vst [vmem:[%s896] sm:%s888] %v897
          $region654: #{tpu_custom_call.1} parent=648 // loop_footer
            %s894 = sadd.s32 1, %s890
          $region655: #{tpu_custom_call.1} parent=648 // loop_footer_branch
            %889 = sbr.rel target = $region651
          $region656: #{tpu_custom_call.1} parent=648 // loop_exit
            _
        $region649: #{tpu_custom_call.1} parent=610 // pred_fallthru
          _
        // Predicated region
        $region668: #{tpu_custom_call.1} parent=610 // pred_check
          _
        $region669: #{tpu_custom_call.1} parent=610 // pred_check_branch
          %915 = sbr.rel (0) target = $region671
        $region670: #{tpu_custom_call.1} parent=610 // pred_region
          %916 = vsyncadd [#allocation3], 16
        $region671: #{tpu_custom_call.1} parent=610 // pred_fallthru
          _
        %s917 = scalar_lea.vmem %s1, %s767
        %s918 = scalar_lea.vmem [#allocation2], 18
        // Predicated region
        $region672: #{tpu_custom_call.1} parent=610 // pred_check
          _
        $region673: #{tpu_custom_call.1} parent=610 // pred_check_branch
          %920 = sbr.rel target = $region675
        $region674: #{tpu_custom_call.1} parent=610 // pred_region
          // Predicated region
          $region687: #{tpu_custom_call.1} parent=674 // pred_check
            _
          $region688: #{tpu_custom_call.1} parent=674 // pred_check_branch
            %936 = sbr.rel (0) target = $region690
          $region689: #{tpu_custom_call.1} parent=674 // pred_region
            %s938 = ssub.s32 2, 1
            loop: start=0, step=1, limit=1
            $region691: #{tpu_custom_call.1} parent=689 // loop_pre_header
              _
            $region692: #{tpu_custom_call.1} parent=689 // loop_header
              %s940 = sphi 0, %s944
              %p941 = scmp.ge.s32.totalorder %s940, 1
              %s945 = sphi %s917, %s917
              %s946 = sphi %s918, %s918
            $region693: #{tpu_custom_call.1} parent=689 // loop_header_branch
              %943 = sbr.rel (%p941) target = $region697
            $region694: #{tpu_custom_call.1} parent=689 // loop_body
              %v947 = vld [vmem:[%s945] sm:%s938]
              %948 = vst [vmem:[%s946] sm:%s938] %v947
            $region695: #{tpu_custom_call.1} parent=689 // loop_footer
              %s944 = sadd.s32 1, %s940
            $region696: #{tpu_custom_call.1} parent=689 // loop_footer_branch
              %939 = sbr.rel target = $region692
            $region697: #{tpu_custom_call.1} parent=689 // loop_exit
              _
          $region690: #{tpu_custom_call.1} parent=674 // pred_fallthru
            _
        $region675: #{tpu_custom_call.1} parent=610 // pred_fallthru
          _
        // Predicated region
        $region676: #{tpu_custom_call.1} parent=610 // pred_check
          _
        $region677: #{tpu_custom_call.1} parent=610 // pred_check_branch
          %922 = sbr.rel (0) target = $region679
        $region678: #{tpu_custom_call.1} parent=610 // pred_region
          %s924 = ssub.s32 2, 1
          loop: start=0, step=1, limit=1
          $region680: #{tpu_custom_call.1} parent=678 // loop_pre_header
            _
          $region681: #{tpu_custom_call.1} parent=678 // loop_header
            %s926 = sphi 0, %s930
            %p927 = scmp.ge.s32.totalorder %s926, 1
            %s931 = sphi %s917, %s917
            %s932 = sphi %s918, %s918
          $region682: #{tpu_custom_call.1} parent=678 // loop_header_branch
            %929 = sbr.rel (%p927) target = $region686
          $region683: #{tpu_custom_call.1} parent=678 // loop_body
            %v933 = vld [vmem:[%s931] sm:%s924]
            %934 = vst [vmem:[%s932] sm:%s924] %v933
          $region684: #{tpu_custom_call.1} parent=678 // loop_footer
            %s930 = sadd.s32 1, %s926
          $region685: #{tpu_custom_call.1} parent=678 // loop_footer_branch
            %925 = sbr.rel target = $region681
          $region686: #{tpu_custom_call.1} parent=678 // loop_exit
            _
        $region679: #{tpu_custom_call.1} parent=610 // pred_fallthru
          _
        // Predicated region
        $region698: #{tpu_custom_call.1} parent=610 // pred_check
          _
        $region699: #{tpu_custom_call.1} parent=610 // pred_check_branch
          %951 = sbr.rel (0) target = $region701
        $region700: #{tpu_custom_call.1} parent=610 // pred_region
          %952 = vsyncadd [#allocation3], 16
        $region701: #{tpu_custom_call.1} parent=610 // pred_fallthru
          _
        %s953 = scalar_lea.vmem %s1, %s769
        %s954 = scalar_lea.vmem [#allocation2], 19
        // Predicated region
        $region702: #{tpu_custom_call.1} parent=610 // pred_check
          _
        $region703: #{tpu_custom_call.1} parent=610 // pred_check_branch
          %956 = sbr.rel target = $region705
        $region704: #{tpu_custom_call.1} parent=610 // pred_region
          // Predicated region
          $region717: #{tpu_custom_call.1} parent=704 // pred_check
            _
          $region718: #{tpu_custom_call.1} parent=704 // pred_check_branch
            %972 = sbr.rel (0) target = $region720
          $region719: #{tpu_custom_call.1} parent=704 // pred_region
            %s974 = ssub.s32 2, 1
            loop: start=0, step=1, limit=1
            $region721: #{tpu_custom_call.1} parent=719 // loop_pre_header
              _
            $region722: #{tpu_custom_call.1} parent=719 // loop_header
              %s976 = sphi 0, %s980
              %p977 = scmp.ge.s32.totalorder %s976, 1
              %s981 = sphi %s953, %s953
              %s982 = sphi %s954, %s954
            $region723: #{tpu_custom_call.1} parent=719 // loop_header_branch
              %979 = sbr.rel (%p977) target = $region727
            $region724: #{tpu_custom_call.1} parent=719 // loop_body
              %v983 = vld [vmem:[%s981] sm:%s974]
              %984 = vst [vmem:[%s982] sm:%s974] %v983
            $region725: #{tpu_custom_call.1} parent=719 // loop_footer
              %s980 = sadd.s32 1, %s976
            $region726: #{tpu_custom_call.1} parent=719 // loop_footer_branch
              %975 = sbr.rel target = $region722
            $region727: #{tpu_custom_call.1} parent=719 // loop_exit
              _
          $region720: #{tpu_custom_call.1} parent=704 // pred_fallthru
            _
        $region705: #{tpu_custom_call.1} parent=610 // pred_fallthru
          _
        // Predicated region
        $region706: #{tpu_custom_call.1} parent=610 // pred_check
          _
        $region707: #{tpu_custom_call.1} parent=610 // pred_check_branch
          %958 = sbr.rel (0) target = $region709
        $region708: #{tpu_custom_call.1} parent=610 // pred_region
          %s960 = ssub.s32 2, 1
          loop: start=0, step=1, limit=1
          $region710: #{tpu_custom_call.1} parent=708 // loop_pre_header
            _
          $region711: #{tpu_custom_call.1} parent=708 // loop_header
            %s962 = sphi 0, %s966
            %p963 = scmp.ge.s32.totalorder %s962, 1
            %s967 = sphi %s953, %s953
            %s968 = sphi %s954, %s954
          $region712: #{tpu_custom_call.1} parent=708 // loop_header_branch
            %965 = sbr.rel (%p963) target = $region716
          $region713: #{tpu_custom_call.1} parent=708 // loop_body
            %v969 = vld [vmem:[%s967] sm:%s960]
            %970 = vst [vmem:[%s968] sm:%s960] %v969
          $region714: #{tpu_custom_call.1} parent=708 // loop_footer
            %s966 = sadd.s32 1, %s962
          $region715: #{tpu_custom_call.1} parent=708 // loop_footer_branch
            %961 = sbr.rel target = $region711
          $region716: #{tpu_custom_call.1} parent=708 // loop_exit
            _
        $region709: #{tpu_custom_call.1} parent=610 // pred_fallthru
          _
        // Predicated region
        $region728: #{tpu_custom_call.1} parent=610 // pred_check
          _
        $region729: #{tpu_custom_call.1} parent=610 // pred_check_branch
          %987 = sbr.rel (0) target = $region731
        $region730: #{tpu_custom_call.1} parent=610 // pred_region
          %988 = vsyncadd [#allocation3], 16
        $region731: #{tpu_custom_call.1} parent=610 // pred_fallthru
          _
        %s989 = scalar_lea.vmem %s1, %s771
        %s990 = scalar_lea.vmem [#allocation2], 20
        // Predicated region
        $region732: #{tpu_custom_call.1} parent=610 // pred_check
          _
        $region733: #{tpu_custom_call.1} parent=610 // pred_check_branch
          %992 = sbr.rel target = $region735
        $region734: #{tpu_custom_call.1} parent=610 // pred_region
          // Predicated region
          $region747: #{tpu_custom_call.1} parent=734 // pred_check
            _
          $region748: #{tpu_custom_call.1} parent=734 // pred_check_branch
            %1008 = sbr.rel (0) target = $region750
          $region749: #{tpu_custom_call.1} parent=734 // pred_region
            %s1010 = ssub.s32 2, 1
            loop: start=0, step=1, limit=1
            $region751: #{tpu_custom_call.1} parent=749 // loop_pre_header
              _
            $region752: #{tpu_custom_call.1} parent=749 // loop_header
              %s1012 = sphi 0, %s1016
              %p1013 = scmp.ge.s32.totalorder %s1012, 1
              %s1017 = sphi %s989, %s989
              %s1018 = sphi %s990, %s990
            $region753: #{tpu_custom_call.1} parent=749 // loop_header_branch
              %1015 = sbr.rel (%p1013) target = $region757
            $region754: #{tpu_custom_call.1} parent=749 // loop_body
              %v1019 = vld [vmem:[%s1017] sm:%s1010]
              %1020 = vst [vmem:[%s1018] sm:%s1010] %v1019
            $region755: #{tpu_custom_call.1} parent=749 // loop_footer
              %s1016 = sadd.s32 1, %s1012
            $region756: #{tpu_custom_call.1} parent=749 // loop_footer_branch
              %1011 = sbr.rel target = $region752
            $region757: #{tpu_custom_call.1} parent=749 // loop_exit
              _
          $region750: #{tpu_custom_call.1} parent=734 // pred_fallthru
            _
        $region735: #{tpu_custom_call.1} parent=610 // pred_fallthru
          _
        // Predicated region
        $region736: #{tpu_custom_call.1} parent=610 // pred_check
          _
        $region737: #{tpu_custom_call.1} parent=610 // pred_check_branch
          %994 = sbr.rel (0) target = $region739
        $region738: #{tpu_custom_call.1} parent=610 // pred_region
          %s996 = ssub.s32 2, 1
          loop: start=0, step=1, limit=1
          $region740: #{tpu_custom_call.1} parent=738 // loop_pre_header
            _
          $region741: #{tpu_custom_call.1} parent=738 // loop_header
            %s998 = sphi 0, %s1002
            %p999 = scmp.ge.s32.totalorder %s998, 1
            %s1003 = sphi %s989, %s989
            %s1004 = sphi %s990, %s990
          $region742: #{tpu_custom_call.1} parent=738 // loop_header_branch
            %1001 = sbr.rel (%p999) target = $region746
          $region743: #{tpu_custom_call.1} parent=738 // loop_body
            %v1005 = vld [vmem:[%s1003] sm:%s996]
            %1006 = vst [vmem:[%s1004] sm:%s996] %v1005
          $region744: #{tpu_custom_call.1} parent=738 // loop_footer
            %s1002 = sadd.s32 1, %s998
          $region745: #{tpu_custom_call.1} parent=738 // loop_footer_branch
            %997 = sbr.rel target = $region741
          $region746: #{tpu_custom_call.1} parent=738 // loop_exit
            _
        $region739: #{tpu_custom_call.1} parent=610 // pred_fallthru
          _
        // Predicated region
        $region758: #{tpu_custom_call.1} parent=610 // pred_check
          _
        $region759: #{tpu_custom_call.1} parent=610 // pred_check_branch
          %1023 = sbr.rel (0) target = $region761
        $region760: #{tpu_custom_call.1} parent=610 // pred_region
          %1024 = vsyncadd [#allocation3], 16
        $region761: #{tpu_custom_call.1} parent=610 // pred_fallthru
          _
        %s1025 = scalar_lea.vmem %s1, %s773
        %s1026 = scalar_lea.vmem [#allocation2], 21
        // Predicated region
        $region762: #{tpu_custom_call.1} parent=610 // pred_check
          _
        $region763: #{tpu_custom_call.1} parent=610 // pred_check_branch
          %1028 = sbr.rel target = $region765
        $region764: #{tpu_custom_call.1} parent=610 // pred_region
          // Predicated region
          $region777: #{tpu_custom_call.1} parent=764 // pred_check
            _
          $region778: #{tpu_custom_call.1} parent=764 // pred_check_branch
            %1044 = sbr.rel (0) target = $region780
          $region779: #{tpu_custom_call.1} parent=764 // pred_region
            %s1046 = ssub.s32 2, 1
            loop: start=0, step=1, limit=1
            $region781: #{tpu_custom_call.1} parent=779 // loop_pre_header
              _
            $region782: #{tpu_custom_call.1} parent=779 // loop_header
              %s1048 = sphi 0, %s1052
              %p1049 = scmp.ge.s32.totalorder %s1048, 1
              %s1053 = sphi %s1025, %s1025
              %s1054 = sphi %s1026, %s1026
            $region783: #{tpu_custom_call.1} parent=779 // loop_header_branch
              %1051 = sbr.rel (%p1049) target = $region787
            $region784: #{tpu_custom_call.1} parent=779 // loop_body
              %v1055 = vld [vmem:[%s1053] sm:%s1046]
              %1056 = vst [vmem:[%s1054] sm:%s1046] %v1055
            $region785: #{tpu_custom_call.1} parent=779 // loop_footer
              %s1052 = sadd.s32 1, %s1048
            $region786: #{tpu_custom_call.1} parent=779 // loop_footer_branch
              %1047 = sbr.rel target = $region782
            $region787: #{tpu_custom_call.1} parent=779 // loop_exit
              _
          $region780: #{tpu_custom_call.1} parent=764 // pred_fallthru
            _
        $region765: #{tpu_custom_call.1} parent=610 // pred_fallthru
          _
        // Predicated region
        $region766: #{tpu_custom_call.1} parent=610 // pred_check
          _
        $region767: #{tpu_custom_call.1} parent=610 // pred_check_branch
          %1030 = sbr.rel (0) target = $region769
        $region768: #{tpu_custom_call.1} parent=610 // pred_region
          %s1032 = ssub.s32 2, 1
          loop: start=0, step=1, limit=1
          $region770: #{tpu_custom_call.1} parent=768 // loop_pre_header
            _
          $region771: #{tpu_custom_call.1} parent=768 // loop_header
            %s1034 = sphi 0, %s1038
            %p1035 = scmp.ge.s32.totalorder %s1034, 1
            %s1039 = sphi %s1025, %s1025
            %s1040 = sphi %s1026, %s1026
          $region772: #{tpu_custom_call.1} parent=768 // loop_header_branch
            %1037 = sbr.rel (%p1035) target = $region776
          $region773: #{tpu_custom_call.1} parent=768 // loop_body
            %v1041 = vld [vmem:[%s1039] sm:%s1032]
            %1042 = vst [vmem:[%s1040] sm:%s1032] %v1041
          $region774: #{tpu_custom_call.1} parent=768 // loop_footer
            %s1038 = sadd.s32 1, %s1034
          $region775: #{tpu_custom_call.1} parent=768 // loop_footer_branch
            %1033 = sbr.rel target = $region771
          $region776: #{tpu_custom_call.1} parent=768 // loop_exit
            _
        $region769: #{tpu_custom_call.1} parent=610 // pred_fallthru
          _
        // Predicated region
        $region788: #{tpu_custom_call.1} parent=610 // pred_check
          _
        $region789: #{tpu_custom_call.1} parent=610 // pred_check_branch
          %1059 = sbr.rel (0) target = $region791
        $region790: #{tpu_custom_call.1} parent=610 // pred_region
          %1060 = vsyncadd [#allocation3], 16
        $region791: #{tpu_custom_call.1} parent=610 // pred_fallthru
          _
        %s1061 = scalar_lea.vmem %s1, %s775
        %s1062 = scalar_lea.vmem [#allocation2], 22
        // Predicated region
        $region792: #{tpu_custom_call.1} parent=610 // pred_check
          _
        $region793: #{tpu_custom_call.1} parent=610 // pred_check_branch
          %1064 = sbr.rel target = $region795
        $region794: #{tpu_custom_call.1} parent=610 // pred_region
          // Predicated region
          $region807: #{tpu_custom_call.1} parent=794 // pred_check
            _
          $region808: #{tpu_custom_call.1} parent=794 // pred_check_branch
            %1080 = sbr.rel (0) target = $region810
          $region809: #{tpu_custom_call.1} parent=794 // pred_region
            %s1082 = ssub.s32 2, 1
            loop: start=0, step=1, limit=1
            $region811: #{tpu_custom_call.1} parent=809 // loop_pre_header
              _
            $region812: #{tpu_custom_call.1} parent=809 // loop_header
              %s1084 = sphi 0, %s1088
              %p1085 = scmp.ge.s32.totalorder %s1084, 1
              %s1089 = sphi %s1061, %s1061
              %s1090 = sphi %s1062, %s1062
            $region813: #{tpu_custom_call.1} parent=809 // loop_header_branch
              %1087 = sbr.rel (%p1085) target = $region817
            $region814: #{tpu_custom_call.1} parent=809 // loop_body
              %v1091 = vld [vmem:[%s1089] sm:%s1082]
              %1092 = vst [vmem:[%s1090] sm:%s1082] %v1091
            $region815: #{tpu_custom_call.1} parent=809 // loop_footer
              %s1088 = sadd.s32 1, %s1084
            $region816: #{tpu_custom_call.1} parent=809 // loop_footer_branch
              %1083 = sbr.rel target = $region812
            $region817: #{tpu_custom_call.1} parent=809 // loop_exit
              _
          $region810: #{tpu_custom_call.1} parent=794 // pred_fallthru
            _
        $region795: #{tpu_custom_call.1} parent=610 // pred_fallthru
          _
        // Predicated region
        $region796: #{tpu_custom_call.1} parent=610 // pred_check
          _
        $region797: #{tpu_custom_call.1} parent=610 // pred_check_branch
          %1066 = sbr.rel (0) target = $region799
        $region798: #{tpu_custom_call.1} parent=610 // pred_region
          %s1068 = ssub.s32 2, 1
          loop: start=0, step=1, limit=1
          $region800: #{tpu_custom_call.1} parent=798 // loop_pre_header
            _
          $region801: #{tpu_custom_call.1} parent=798 // loop_header
            %s1070 = sphi 0, %s1074
            %p1071 = scmp.ge.s32.totalorder %s1070, 1
            %s1075 = sphi %s1061, %s1061
            %s1076 = sphi %s1062, %s1062
          $region802: #{tpu_custom_call.1} parent=798 // loop_header_branch
            %1073 = sbr.rel (%p1071) target = $region806
          $region803: #{tpu_custom_call.1} parent=798 // loop_body
            %v1077 = vld [vmem:[%s1075] sm:%s1068]
            %1078 = vst [vmem:[%s1076] sm:%s1068] %v1077
          $region804: #{tpu_custom_call.1} parent=798 // loop_footer
            %s1074 = sadd.s32 1, %s1070
          $region805: #{tpu_custom_call.1} parent=798 // loop_footer_branch
            %1069 = sbr.rel target = $region801
          $region806: #{tpu_custom_call.1} parent=798 // loop_exit
            _
        $region799: #{tpu_custom_call.1} parent=610 // pred_fallthru
          _
        // Predicated region
        $region818: #{tpu_custom_call.1} parent=610 // pred_check
          _
        $region819: #{tpu_custom_call.1} parent=610 // pred_check_branch
          %1095 = sbr.rel (0) target = $region821
        $region820: #{tpu_custom_call.1} parent=610 // pred_region
          %1096 = vsyncadd [#allocation3], 16
        $region821: #{tpu_custom_call.1} parent=610 // pred_fallthru
          _
        %s1097 = scalar_lea.vmem %s1, %s777
        %s1098 = scalar_lea.vmem [#allocation2], 23
        // Predicated region
        $region822: #{tpu_custom_call.1} parent=610 // pred_check
          _
        $region823: #{tpu_custom_call.1} parent=610 // pred_check_branch
          %1100 = sbr.rel target = $region825
        $region824: #{tpu_custom_call.1} parent=610 // pred_region
          // Predicated region
          $region837: #{tpu_custom_call.1} parent=824 // pred_check
            _
          $region838: #{tpu_custom_call.1} parent=824 // pred_check_branch
            %1116 = sbr.rel (0) target = $region840
          $region839: #{tpu_custom_call.1} parent=824 // pred_region
            %s1118 = ssub.s32 2, 1
            loop: start=0, step=1, limit=1
            $region841: #{tpu_custom_call.1} parent=839 // loop_pre_header
              _
            $region842: #{tpu_custom_call.1} parent=839 // loop_header
              %s1120 = sphi 0, %s1124
              %p1121 = scmp.ge.s32.totalorder %s1120, 1
              %s1125 = sphi %s1097, %s1097
              %s1126 = sphi %s1098, %s1098
            $region843: #{tpu_custom_call.1} parent=839 // loop_header_branch
              %1123 = sbr.rel (%p1121) target = $region847
            $region844: #{tpu_custom_call.1} parent=839 // loop_body
              %v1127 = vld [vmem:[%s1125] sm:%s1118]
              %1128 = vst [vmem:[%s1126] sm:%s1118] %v1127
            $region845: #{tpu_custom_call.1} parent=839 // loop_footer
              %s1124 = sadd.s32 1, %s1120
            $region846: #{tpu_custom_call.1} parent=839 // loop_footer_branch
              %1119 = sbr.rel target = $region842
            $region847: #{tpu_custom_call.1} parent=839 // loop_exit
              _
          $region840: #{tpu_custom_call.1} parent=824 // pred_fallthru
            _
        $region825: #{tpu_custom_call.1} parent=610 // pred_fallthru
          _
        // Predicated region
        $region826: #{tpu_custom_call.1} parent=610 // pred_check
          _
        $region827: #{tpu_custom_call.1} parent=610 // pred_check_branch
          %1102 = sbr.rel (0) target = $region829
        $region828: #{tpu_custom_call.1} parent=610 // pred_region
          %s1104 = ssub.s32 2, 1
          loop: start=0, step=1, limit=1
          $region830: #{tpu_custom_call.1} parent=828 // loop_pre_header
            _
          $region831: #{tpu_custom_call.1} parent=828 // loop_header
            %s1106 = sphi 0, %s1110
            %p1107 = scmp.ge.s32.totalorder %s1106, 1
            %s1111 = sphi %s1097, %s1097
            %s1112 = sphi %s1098, %s1098
          $region832: #{tpu_custom_call.1} parent=828 // loop_header_branch
            %1109 = sbr.rel (%p1107) target = $region836
          $region833: #{tpu_custom_call.1} parent=828 // loop_body
            %v1113 = vld [vmem:[%s1111] sm:%s1104]
            %1114 = vst [vmem:[%s1112] sm:%s1104] %v1113
          $region834: #{tpu_custom_call.1} parent=828 // loop_footer
            %s1110 = sadd.s32 1, %s1106
          $region835: #{tpu_custom_call.1} parent=828 // loop_footer_branch
            %1105 = sbr.rel target = $region831
          $region836: #{tpu_custom_call.1} parent=828 // loop_exit
            _
        $region829: #{tpu_custom_call.1} parent=610 // pred_fallthru
          _
        // Predicated region
        $region848: #{tpu_custom_call.1} parent=610 // pred_check
          _
        $region849: #{tpu_custom_call.1} parent=610 // pred_check_branch
          %1131 = sbr.rel (0) target = $region851
        $region850: #{tpu_custom_call.1} parent=610 // pred_region
          %1132 = vsyncadd [#allocation3], 16
        $region851: #{tpu_custom_call.1} parent=610 // pred_fallthru
          _
      $region611: #{tpu_custom_call.1} parent=4 // pred_fallthru
        _
      %s1133 = sadd.s32 %s22, 24
      %s1134 = sld [smem:[#allocation5 + %s1133]]
      %s1135 = sadd.s32 %s22, 25
      %s1136 = sld [smem:[#allocation5 + %s1135]]
      %s1137 = sadd.s32 %s22, 26
      %s1138 = sld [smem:[#allocation5 + %s1137]]
      %s1139 = sadd.s32 %s22, 27
      %s1140 = sld [smem:[#allocation5 + %s1139]]
      %s1141 = sadd.s32 %s22, 28
      %s1142 = sld [smem:[#allocation5 + %s1141]]
      %s1143 = sadd.s32 %s22, 29
      %s1144 = sld [smem:[#allocation5 + %s1143]]
      %s1145 = sadd.s32 %s22, 30
      %s1146 = sld [smem:[#allocation5 + %s1145]]
      %s1147 = sadd.s32 %s22, 31
      %s1148 = sld [smem:[#allocation5 + %s1147]]
      %s1149 = sadd.s32 %s1134, 1
      %p1150 = scmp.eq.s32.totalorder %s1136, %s1149
      %s1151 = sadd.s32 %s1134, 2
      %p1152 = scmp.eq.s32.totalorder %s1138, %s1151
      %p1153 = pnand %p1150, %p1152
      %p1154 = pneg %p1153
      %s1155 = sadd.s32 %s1134, 3
      %p1156 = scmp.eq.s32.totalorder %s1140, %s1155
      %p1157 = pnand %p1154, %p1156
      %p1158 = pneg %p1157
      %s1159 = sadd.s32 %s1134, 4
      %p1160 = scmp.eq.s32.totalorder %s1142, %s1159
      %p1161 = pnand %p1158, %p1160
      %p1162 = pneg %p1161
      %s1163 = sadd.s32 %s1134, 5
      %p1164 = scmp.eq.s32.totalorder %s1144, %s1163
      %p1165 = pnand %p1162, %p1164
      %p1166 = pneg %p1165
      %s1167 = sadd.s32 %s1134, 6
      %p1168 = scmp.eq.s32.totalorder %s1146, %s1167
      %p1169 = pnand %p1166, %p1168
      %p1170 = pneg %p1169
      %s1171 = sadd.s32 %s1134, 7
      %p1172 = scmp.eq.s32.totalorder %s1148, %s1171
      %p1173 = pnand %p1170, %p1172
      %p1174 = pneg %p1173
      // Predicated region
      $region852: #{tpu_custom_call.1} parent=4 // pred_check
        _
      $region853: #{tpu_custom_call.1} parent=4 // pred_check_branch
        %1176 = sbr.rel (%p1173) target = $region855
      $region854: #{tpu_custom_call.1} parent=4 // pred_region
        %s1177 = scalar_lea.vmem %s1, %s1134
        %s1178 = scalar_lea.vmem [#allocation2], 24
        // Predicated region
        $region856: #{tpu_custom_call.1} parent=854 // pred_check
          _
        $region857: #{tpu_custom_call.1} parent=854 // pred_check_branch
          %1180 = sbr.rel (0) target = $region859
        $region858: #{tpu_custom_call.1} parent=854 // pred_region
          // Predicated region
          $region871: #{tpu_custom_call.1} parent=858 // pred_check
            _
          $region872: #{tpu_custom_call.1} parent=858 // pred_check_branch
            %1196 = sbr.rel (0) target = $region874
          $region873: #{tpu_custom_call.1} parent=858 // pred_region
            loop: start=0, step=1, limit=1
            $region875: #{tpu_custom_call.1} parent=873 // loop_pre_header
              _
            $region876: #{tpu_custom_call.1} parent=873 // loop_header
              %s1198 = sphi 0, %s1202
              %p1199 = scmp.ge.s32.totalorder %s1198, 1
              %s1203 = sphi %s1177, %s1177
              %s1204 = sphi %s1178, %s1178
            $region877: #{tpu_custom_call.1} parent=873 // loop_header_branch
              %1201 = sbr.rel (%p1199) target = $region881
            $region878: #{tpu_custom_call.1} parent=873 // loop_body
              %v1205 = vld [vmem:[%s1203] sm:$0xff]
              %1206 = vst [vmem:[%s1204] sm:$0xff] %v1205
            $region879: #{tpu_custom_call.1} parent=873 // loop_footer
              %s1202 = sadd.s32 1, %s1198
            $region880: #{tpu_custom_call.1} parent=873 // loop_footer_branch
              %1197 = sbr.rel target = $region876
            $region881: #{tpu_custom_call.1} parent=873 // loop_exit
              _
          $region874: #{tpu_custom_call.1} parent=858 // pred_fallthru
            _
          // Predicated region
          $region882: #{tpu_custom_call.1} parent=858 // pred_check
            _
          $region883: #{tpu_custom_call.1} parent=858 // pred_check_branch
            %1208 = sbr.rel target = $region885
          $region884: #{tpu_custom_call.1} parent=858 // pred_region
            _
          $region885: #{tpu_custom_call.1} parent=858 // pred_fallthru
            _
        $region859: #{tpu_custom_call.1} parent=854 // pred_fallthru
          _
        // Predicated region
        $region860: #{tpu_custom_call.1} parent=854 // pred_check
          _
        $region861: #{tpu_custom_call.1} parent=854 // pred_check_branch
          %1182 = sbr.rel target = $region863
        $region862: #{tpu_custom_call.1} parent=854 // pred_region
          %s1184 = ssub.s32 256, 1
          loop: start=0, step=1, limit=1
          $region864: #{tpu_custom_call.1} parent=862 // loop_pre_header
            _
          $region865: #{tpu_custom_call.1} parent=862 // loop_header
            %s1186 = sphi 0, %s1190
            %p1187 = scmp.ge.s32.totalorder %s1186, 1
            %s1191 = sphi %s1177, %s1177
            %s1192 = sphi %s1178, %s1178
          $region866: #{tpu_custom_call.1} parent=862 // loop_header_branch
            %1189 = sbr.rel (%p1187) target = $region870
          $region867: #{tpu_custom_call.1} parent=862 // loop_body
            %v1193 = vld [vmem:[%s1191] sm:%s1184]
            %1194 = vst [vmem:[%s1192] sm:%s1184] %v1193
          $region868: #{tpu_custom_call.1} parent=862 // loop_footer
            %s1190 = sadd.s32 1, %s1186
          $region869: #{tpu_custom_call.1} parent=862 // loop_footer_branch
            %1185 = sbr.rel target = $region865
          $region870: #{tpu_custom_call.1} parent=862 // loop_exit
            _
        $region863: #{tpu_custom_call.1} parent=854 // pred_fallthru
          _
        // Predicated region
        $region886: #{tpu_custom_call.1} parent=854 // pred_check
          _
        $region887: #{tpu_custom_call.1} parent=854 // pred_check_branch
          %1211 = sbr.rel (0) target = $region889
        $region888: #{tpu_custom_call.1} parent=854 // pred_region
          %1212 = vsyncadd [#allocation3], 128
        $region889: #{tpu_custom_call.1} parent=854 // pred_fallthru
          _
      $region855: #{tpu_custom_call.1} parent=4 // pred_fallthru
        _
      %p1213 = pneg %p1174
      // Predicated region
      $region890: #{tpu_custom_call.1} parent=4 // pred_check
        _
      $region891: #{tpu_custom_call.1} parent=4 // pred_check_branch
        %1215 = sbr.rel (%p1174) target = $region893
      $region892: #{tpu_custom_call.1} parent=4 // pred_region
        %s1216 = scalar_lea.vmem %s1, %s1134
        %s1217 = scalar_lea.vmem [#allocation2], 24
        // Predicated region
        $region894: #{tpu_custom_call.1} parent=892 // pred_check
          _
        $region895: #{tpu_custom_call.1} parent=892 // pred_check_branch
          %1219 = sbr.rel target = $region897
        $region896: #{tpu_custom_call.1} parent=892 // pred_region
          // Predicated region
          $region909: #{tpu_custom_call.1} parent=896 // pred_check
            _
          $region910: #{tpu_custom_call.1} parent=896 // pred_check_branch
            %1235 = sbr.rel (0) target = $region912
          $region911: #{tpu_custom_call.1} parent=896 // pred_region
            %s1237 = ssub.s32 2, 1
            loop: start=0, step=1, limit=1
            $region913: #{tpu_custom_call.1} parent=911 // loop_pre_header
              _
            $region914: #{tpu_custom_call.1} parent=911 // loop_header
              %s1239 = sphi 0, %s1243
              %p1240 = scmp.ge.s32.totalorder %s1239, 1
              %s1244 = sphi %s1216, %s1216
              %s1245 = sphi %s1217, %s1217
            $region915: #{tpu_custom_call.1} parent=911 // loop_header_branch
              %1242 = sbr.rel (%p1240) target = $region919
            $region916: #{tpu_custom_call.1} parent=911 // loop_body
              %v1246 = vld [vmem:[%s1244] sm:%s1237]
              %1247 = vst [vmem:[%s1245] sm:%s1237] %v1246
            $region917: #{tpu_custom_call.1} parent=911 // loop_footer
              %s1243 = sadd.s32 1, %s1239
            $region918: #{tpu_custom_call.1} parent=911 // loop_footer_branch
              %1238 = sbr.rel target = $region914
            $region919: #{tpu_custom_call.1} parent=911 // loop_exit
              _
          $region912: #{tpu_custom_call.1} parent=896 // pred_fallthru
            _
        $region897: #{tpu_custom_call.1} parent=892 // pred_fallthru
          _
        // Predicated region
        $region898: #{tpu_custom_call.1} parent=892 // pred_check
          _
        $region899: #{tpu_custom_call.1} parent=892 // pred_check_branch
          %1221 = sbr.rel (0) target = $region901
        $region900: #{tpu_custom_call.1} parent=892 // pred_region
          %s1223 = ssub.s32 2, 1
          loop: start=0, step=1, limit=1
          $region902: #{tpu_custom_call.1} parent=900 // loop_pre_header
            _
          $region903: #{tpu_custom_call.1} parent=900 // loop_header
            %s1225 = sphi 0, %s1229
            %p1226 = scmp.ge.s32.totalorder %s1225, 1
            %s1230 = sphi %s1216, %s1216
            %s1231 = sphi %s1217, %s1217
          $region904: #{tpu_custom_call.1} parent=900 // loop_header_branch
            %1228 = sbr.rel (%p1226) target = $region908
          $region905: #{tpu_custom_call.1} parent=900 // loop_body
            %v1232 = vld [vmem:[%s1230] sm:%s1223]
            %1233 = vst [vmem:[%s1231] sm:%s1223] %v1232
          $region906: #{tpu_custom_call.1} parent=900 // loop_footer
            %s1229 = sadd.s32 1, %s1225
          $region907: #{tpu_custom_call.1} parent=900 // loop_footer_branch
            %1224 = sbr.rel target = $region903
          $region908: #{tpu_custom_call.1} parent=900 // loop_exit
            _
        $region901: #{tpu_custom_call.1} parent=892 // pred_fallthru
          _
        // Predicated region
        $region920: #{tpu_custom_call.1} parent=892 // pred_check
          _
        $region921: #{tpu_custom_call.1} parent=892 // pred_check_branch
          %1250 = sbr.rel (0) target = $region923
        $region922: #{tpu_custom_call.1} parent=892 // pred_region
          %1251 = vsyncadd [#allocation3], 16
        $region923: #{tpu_custom_call.1} parent=892 // pred_fallthru
          _
        %s1252 = scalar_lea.vmem %s1, %s1136
        %s1253 = scalar_lea.vmem [#allocation2], 25
        // Predicated region
        $region924: #{tpu_custom_call.1} parent=892 // pred_check
          _
        $region925: #{tpu_custom_call.1} parent=892 // pred_check_branch
          %1255 = sbr.rel target = $region927
        $region926: #{tpu_custom_call.1} parent=892 // pred_region
          // Predicated region
          $region939: #{tpu_custom_call.1} parent=926 // pred_check
            _
          $region940: #{tpu_custom_call.1} parent=926 // pred_check_branch
            %1271 = sbr.rel (0) target = $region942
          $region941: #{tpu_custom_call.1} parent=926 // pred_region
            %s1273 = ssub.s32 2, 1
            loop: start=0, step=1, limit=1
            $region943: #{tpu_custom_call.1} parent=941 // loop_pre_header
              _
            $region944: #{tpu_custom_call.1} parent=941 // loop_header
              %s1275 = sphi 0, %s1279
              %p1276 = scmp.ge.s32.totalorder %s1275, 1
              %s1280 = sphi %s1252, %s1252
              %s1281 = sphi %s1253, %s1253
            $region945: #{tpu_custom_call.1} parent=941 // loop_header_branch
              %1278 = sbr.rel (%p1276) target = $region949
            $region946: #{tpu_custom_call.1} parent=941 // loop_body
              %v1282 = vld [vmem:[%s1280] sm:%s1273]
              %1283 = vst [vmem:[%s1281] sm:%s1273] %v1282
            $region947: #{tpu_custom_call.1} parent=941 // loop_footer
              %s1279 = sadd.s32 1, %s1275
            $region948: #{tpu_custom_call.1} parent=941 // loop_footer_branch
              %1274 = sbr.rel target = $region944
            $region949: #{tpu_custom_call.1} parent=941 // loop_exit
              _
          $region942: #{tpu_custom_call.1} parent=926 // pred_fallthru
            _
        $region927: #{tpu_custom_call.1} parent=892 // pred_fallthru
          _
        // Predicated region
        $region928: #{tpu_custom_call.1} parent=892 // pred_check
          _
        $region929: #{tpu_custom_call.1} parent=892 // pred_check_branch
          %1257 = sbr.rel (0) target = $region931
        $region930: #{tpu_custom_call.1} parent=892 // pred_region
          %s1259 = ssub.s32 2, 1
          loop: start=0, step=1, limit=1
          $region932: #{tpu_custom_call.1} parent=930 // loop_pre_header
            _
          $region933: #{tpu_custom_call.1} parent=930 // loop_header
            %s1261 = sphi 0, %s1265
            %p1262 = scmp.ge.s32.totalorder %s1261, 1
            %s1266 = sphi %s1252, %s1252
            %s1267 = sphi %s1253, %s1253
          $region934: #{tpu_custom_call.1} parent=930 // loop_header_branch
            %1264 = sbr.rel (%p1262) target = $region938
          $region935: #{tpu_custom_call.1} parent=930 // loop_body
            %v1268 = vld [vmem:[%s1266] sm:%s1259]
            %1269 = vst [vmem:[%s1267] sm:%s1259] %v1268
          $region936: #{tpu_custom_call.1} parent=930 // loop_footer
            %s1265 = sadd.s32 1, %s1261
          $region937: #{tpu_custom_call.1} parent=930 // loop_footer_branch
            %1260 = sbr.rel target = $region933
          $region938: #{tpu_custom_call.1} parent=930 // loop_exit
            _
        $region931: #{tpu_custom_call.1} parent=892 // pred_fallthru
          _
        // Predicated region
        $region950: #{tpu_custom_call.1} parent=892 // pred_check
          _
        $region951: #{tpu_custom_call.1} parent=892 // pred_check_branch
          %1286 = sbr.rel (0) target = $region953
        $region952: #{tpu_custom_call.1} parent=892 // pred_region
          %1287 = vsyncadd [#allocation3], 16
        $region953: #{tpu_custom_call.1} parent=892 // pred_fallthru
          _
        %s1288 = scalar_lea.vmem %s1, %s1138
        %s1289 = scalar_lea.vmem [#allocation2], 26
        // Predicated region
        $region954: #{tpu_custom_call.1} parent=892 // pred_check
          _
        $region955: #{tpu_custom_call.1} parent=892 // pred_check_branch
          %1291 = sbr.rel target = $region957
        $region956: #{tpu_custom_call.1} parent=892 // pred_region
          // Predicated region
          $region969: #{tpu_custom_call.1} parent=956 // pred_check
            _
          $region970: #{tpu_custom_call.1} parent=956 // pred_check_branch
            %1307 = sbr.rel (0) target = $region972
          $region971: #{tpu_custom_call.1} parent=956 // pred_region
            %s1309 = ssub.s32 2, 1
            loop: start=0, step=1, limit=1
            $region973: #{tpu_custom_call.1} parent=971 // loop_pre_header
              _
            $region974: #{tpu_custom_call.1} parent=971 // loop_header
              %s1311 = sphi 0, %s1315
              %p1312 = scmp.ge.s32.totalorder %s1311, 1
              %s1316 = sphi %s1288, %s1288
              %s1317 = sphi %s1289, %s1289
            $region975: #{tpu_custom_call.1} parent=971 // loop_header_branch
              %1314 = sbr.rel (%p1312) target = $region979
            $region976: #{tpu_custom_call.1} parent=971 // loop_body
              %v1318 = vld [vmem:[%s1316] sm:%s1309]
              %1319 = vst [vmem:[%s1317] sm:%s1309] %v1318
            $region977: #{tpu_custom_call.1} parent=971 // loop_footer
              %s1315 = sadd.s32 1, %s1311
            $region978: #{tpu_custom_call.1} parent=971 // loop_footer_branch
              %1310 = sbr.rel target = $region974
            $region979: #{tpu_custom_call.1} parent=971 // loop_exit
              _
          $region972: #{tpu_custom_call.1} parent=956 // pred_fallthru
            _
        $region957: #{tpu_custom_call.1} parent=892 // pred_fallthru
          _
        // Predicated region
        $region958: #{tpu_custom_call.1} parent=892 // pred_check
          _
        $region959: #{tpu_custom_call.1} parent=892 // pred_check_branch
          %1293 = sbr.rel (0) target = $region961
        $region960: #{tpu_custom_call.1} parent=892 // pred_region
          %s1295 = ssub.s32 2, 1
          loop: start=0, step=1, limit=1
          $region962: #{tpu_custom_call.1} parent=960 // loop_pre_header
            _
          $region963: #{tpu_custom_call.1} parent=960 // loop_header
            %s1297 = sphi 0, %s1301
            %p1298 = scmp.ge.s32.totalorder %s1297, 1
            %s1302 = sphi %s1288, %s1288
            %s1303 = sphi %s1289, %s1289
          $region964: #{tpu_custom_call.1} parent=960 // loop_header_branch
            %1300 = sbr.rel (%p1298) target = $region968
          $region965: #{tpu_custom_call.1} parent=960 // loop_body
            %v1304 = vld [vmem:[%s1302] sm:%s1295]
            %1305 = vst [vmem:[%s1303] sm:%s1295] %v1304
          $region966: #{tpu_custom_call.1} parent=960 // loop_footer
            %s1301 = sadd.s32 1, %s1297
          $region967: #{tpu_custom_call.1} parent=960 // loop_footer_branch
            %1296 = sbr.rel target = $region963
          $region968: #{tpu_custom_call.1} parent=960 // loop_exit
            _
        $region961: #{tpu_custom_call.1} parent=892 // pred_fallthru
          _
        // Predicated region
        $region980: #{tpu_custom_call.1} parent=892 // pred_check
          _
        $region981: #{tpu_custom_call.1} parent=892 // pred_check_branch
          %1322 = sbr.rel (0) target = $region983
        $region982: #{tpu_custom_call.1} parent=892 // pred_region
          %1323 = vsyncadd [#allocation3], 16
        $region983: #{tpu_custom_call.1} parent=892 // pred_fallthru
          _
        %s1324 = scalar_lea.vmem %s1, %s1140
        %s1325 = scalar_lea.vmem [#allocation2], 27
        // Predicated region
        $region984: #{tpu_custom_call.1} parent=892 // pred_check
          _
        $region985: #{tpu_custom_call.1} parent=892 // pred_check_branch
          %1327 = sbr.rel target = $region987
        $region986: #{tpu_custom_call.1} parent=892 // pred_region
          // Predicated region
          $region999: #{tpu_custom_call.1} parent=986 // pred_check
            _
          $region1000: #{tpu_custom_call.1} parent=986 // pred_check_branch
            %1343 = sbr.rel (0) target = $region1002
          $region1001: #{tpu_custom_call.1} parent=986 // pred_region
            %s1345 = ssub.s32 2, 1
            loop: start=0, step=1, limit=1
            $region1003: #{tpu_custom_call.1} parent=1001 // loop_pre_header
              _
            $region1004: #{tpu_custom_call.1} parent=1001 // loop_header
              %s1347 = sphi 0, %s1351
              %p1348 = scmp.ge.s32.totalorder %s1347, 1
              %s1352 = sphi %s1324, %s1324
              %s1353 = sphi %s1325, %s1325
            $region1005: #{tpu_custom_call.1} parent=1001 // loop_header_branch
              %1350 = sbr.rel (%p1348) target = $region1009
            $region1006: #{tpu_custom_call.1} parent=1001 // loop_body
              %v1354 = vld [vmem:[%s1352] sm:%s1345]
              %1355 = vst [vmem:[%s1353] sm:%s1345] %v1354
            $region1007: #{tpu_custom_call.1} parent=1001 // loop_footer
              %s1351 = sadd.s32 1, %s1347
            $region1008: #{tpu_custom_call.1} parent=1001 // loop_footer_branch
              %1346 = sbr.rel target = $region1004
            $region1009: #{tpu_custom_call.1} parent=1001 // loop_exit
              _
          $region1002: #{tpu_custom_call.1} parent=986 // pred_fallthru
            _
        $region987: #{tpu_custom_call.1} parent=892 // pred_fallthru
          _
        // Predicated region
        $region988: #{tpu_custom_call.1} parent=892 // pred_check
          _
        $region989: #{tpu_custom_call.1} parent=892 // pred_check_branch
          %1329 = sbr.rel (0) target = $region991
        $region990: #{tpu_custom_call.1} parent=892 // pred_region
          %s1331 = ssub.s32 2, 1
          loop: start=0, step=1, limit=1
          $region992: #{tpu_custom_call.1} parent=990 // loop_pre_header
            _
          $region993: #{tpu_custom_call.1} parent=990 // loop_header
            %s1333 = sphi 0, %s1337
            %p1334 = scmp.ge.s32.totalorder %s1333, 1
            %s1338 = sphi %s1324, %s1324
            %s1339 = sphi %s1325, %s1325
          $region994: #{tpu_custom_call.1} parent=990 // loop_header_branch
            %1336 = sbr.rel (%p1334) target = $region998
          $region995: #{tpu_custom_call.1} parent=990 // loop_body
            %v1340 = vld [vmem:[%s1338] sm:%s1331]
            %1341 = vst [vmem:[%s1339] sm:%s1331] %v1340
          $region996: #{tpu_custom_call.1} parent=990 // loop_footer
            %s1337 = sadd.s32 1, %s1333
          $region997: #{tpu_custom_call.1} parent=990 // loop_footer_branch
            %1332 = sbr.rel target = $region993
          $region998: #{tpu_custom_call.1} parent=990 // loop_exit
            _
        $region991: #{tpu_custom_call.1} parent=892 // pred_fallthru
          _
        // Predicated region
        $region1010: #{tpu_custom_call.1} parent=892 // pred_check
          _
        $region1011: #{tpu_custom_call.1} parent=892 // pred_check_branch
          %1358 = sbr.rel (0) target = $region1013
        $region1012: #{tpu_custom_call.1} parent=892 // pred_region
          %1359 = vsyncadd [#allocation3], 16
        $region1013: #{tpu_custom_call.1} parent=892 // pred_fallthru
          _
        %s1360 = scalar_lea.vmem %s1, %s1142
        %s1361 = scalar_lea.vmem [#allocation2], 28
        // Predicated region
        $region1014: #{tpu_custom_call.1} parent=892 // pred_check
          _
        $region1015: #{tpu_custom_call.1} parent=892 // pred_check_branch
          %1363 = sbr.rel target = $region1017
        $region1016: #{tpu_custom_call.1} parent=892 // pred_region
          // Predicated region
          $region1029: #{tpu_custom_call.1} parent=1016 // pred_check
            _
          $region1030: #{tpu_custom_call.1} parent=1016 // pred_check_branch
            %1379 = sbr.rel (0) target = $region1032
          $region1031: #{tpu_custom_call.1} parent=1016 // pred_region
            %s1381 = ssub.s32 2, 1
            loop: start=0, step=1, limit=1
            $region1033: #{tpu_custom_call.1} parent=1031 // loop_pre_header
              _
            $region1034: #{tpu_custom_call.1} parent=1031 // loop_header
              %s1383 = sphi 0, %s1387
              %p1384 = scmp.ge.s32.totalorder %s1383, 1
              %s1388 = sphi %s1360, %s1360
              %s1389 = sphi %s1361, %s1361
            $region1035: #{tpu_custom_call.1} parent=1031 // loop_header_branch
              %1386 = sbr.rel (%p1384) target = $region1039
            $region1036: #{tpu_custom_call.1} parent=1031 // loop_body
              %v1390 = vld [vmem:[%s1388] sm:%s1381]
              %1391 = vst [vmem:[%s1389] sm:%s1381] %v1390
            $region1037: #{tpu_custom_call.1} parent=1031 // loop_footer
              %s1387 = sadd.s32 1, %s1383
            $region1038: #{tpu_custom_call.1} parent=1031 // loop_footer_branch
              %1382 = sbr.rel target = $region1034
            $region1039: #{tpu_custom_call.1} parent=1031 // loop_exit
              _
          $region1032: #{tpu_custom_call.1} parent=1016 // pred_fallthru
            _
        $region1017: #{tpu_custom_call.1} parent=892 // pred_fallthru
          _
        // Predicated region
        $region1018: #{tpu_custom_call.1} parent=892 // pred_check
          _
        $region1019: #{tpu_custom_call.1} parent=892 // pred_check_branch
          %1365 = sbr.rel (0) target = $region1021
        $region1020: #{tpu_custom_call.1} parent=892 // pred_region
          %s1367 = ssub.s32 2, 1
          loop: start=0, step=1, limit=1
          $region1022: #{tpu_custom_call.1} parent=1020 // loop_pre_header
            _
          $region1023: #{tpu_custom_call.1} parent=1020 // loop_header
            %s1369 = sphi 0, %s1373
            %p1370 = scmp.ge.s32.totalorder %s1369, 1
            %s1374 = sphi %s1360, %s1360
            %s1375 = sphi %s1361, %s1361
          $region1024: #{tpu_custom_call.1} parent=1020 // loop_header_branch
            %1372 = sbr.rel (%p1370) target = $region1028
          $region1025: #{tpu_custom_call.1} parent=1020 // loop_body
            %v1376 = vld [vmem:[%s1374] sm:%s1367]
            %1377 = vst [vmem:[%s1375] sm:%s1367] %v1376
          $region1026: #{tpu_custom_call.1} parent=1020 // loop_footer
            %s1373 = sadd.s32 1, %s1369
          $region1027: #{tpu_custom_call.1} parent=1020 // loop_footer_branch
            %1368 = sbr.rel target = $region1023
          $region1028: #{tpu_custom_call.1} parent=1020 // loop_exit
            _
        $region1021: #{tpu_custom_call.1} parent=892 // pred_fallthru
          _
        // Predicated region
        $region1040: #{tpu_custom_call.1} parent=892 // pred_check
          _
        $region1041: #{tpu_custom_call.1} parent=892 // pred_check_branch
          %1394 = sbr.rel (0) target = $region1043
        $region1042: #{tpu_custom_call.1} parent=892 // pred_region
          %1395 = vsyncadd [#allocation3], 16
        $region1043: #{tpu_custom_call.1} parent=892 // pred_fallthru
          _
        %s1396 = scalar_lea.vmem %s1, %s1144
        %s1397 = scalar_lea.vmem [#allocation2], 29
        // Predicated region
        $region1044: #{tpu_custom_call.1} parent=892 // pred_check
          _
        $region1045: #{tpu_custom_call.1} parent=892 // pred_check_branch
          %1399 = sbr.rel target = $region1047
        $region1046: #{tpu_custom_call.1} parent=892 // pred_region
          // Predicated region
          $region1059: #{tpu_custom_call.1} parent=1046 // pred_check
            _
          $region1060: #{tpu_custom_call.1} parent=1046 // pred_check_branch
            %1415 = sbr.rel (0) target = $region1062
          $region1061: #{tpu_custom_call.1} parent=1046 // pred_region
            %s1417 = ssub.s32 2, 1
            loop: start=0, step=1, limit=1
            $region1063: #{tpu_custom_call.1} parent=1061 // loop_pre_header
              _
            $region1064: #{tpu_custom_call.1} parent=1061 // loop_header
              %s1419 = sphi 0, %s1423
              %p1420 = scmp.ge.s32.totalorder %s1419, 1
              %s1424 = sphi %s1396, %s1396
              %s1425 = sphi %s1397, %s1397
            $region1065: #{tpu_custom_call.1} parent=1061 // loop_header_branch
              %1422 = sbr.rel (%p1420) target = $region1069
            $region1066: #{tpu_custom_call.1} parent=1061 // loop_body
              %v1426 = vld [vmem:[%s1424] sm:%s1417]
              %1427 = vst [vmem:[%s1425] sm:%s1417] %v1426
            $region1067: #{tpu_custom_call.1} parent=1061 // loop_footer
              %s1423 = sadd.s32 1, %s1419
            $region1068: #{tpu_custom_call.1} parent=1061 // loop_footer_branch
              %1418 = sbr.rel target = $region1064
            $region1069: #{tpu_custom_call.1} parent=1061 // loop_exit
              _
          $region1062: #{tpu_custom_call.1} parent=1046 // pred_fallthru
            _
        $region1047: #{tpu_custom_call.1} parent=892 // pred_fallthru
          _
        // Predicated region
        $region1048: #{tpu_custom_call.1} parent=892 // pred_check
          _
        $region1049: #{tpu_custom_call.1} parent=892 // pred_check_branch
          %1401 = sbr.rel (0) target = $region1051
        $region1050: #{tpu_custom_call.1} parent=892 // pred_region
          %s1403 = ssub.s32 2, 1
          loop: start=0, step=1, limit=1
          $region1052: #{tpu_custom_call.1} parent=1050 // loop_pre_header
            _
          $region1053: #{tpu_custom_call.1} parent=1050 // loop_header
            %s1405 = sphi 0, %s1409
            %p1406 = scmp.ge.s32.totalorder %s1405, 1
            %s1410 = sphi %s1396, %s1396
            %s1411 = sphi %s1397, %s1397
          $region1054: #{tpu_custom_call.1} parent=1050 // loop_header_branch
            %1408 = sbr.rel (%p1406) target = $region1058
          $region1055: #{tpu_custom_call.1} parent=1050 // loop_body
            %v1412 = vld [vmem:[%s1410] sm:%s1403]
            %1413 = vst [vmem:[%s1411] sm:%s1403] %v1412
          $region1056: #{tpu_custom_call.1} parent=1050 // loop_footer
            %s1409 = sadd.s32 1, %s1405
          $region1057: #{tpu_custom_call.1} parent=1050 // loop_footer_branch
            %1404 = sbr.rel target = $region1053
          $region1058: #{tpu_custom_call.1} parent=1050 // loop_exit
            _
        $region1051: #{tpu_custom_call.1} parent=892 // pred_fallthru
          _
        // Predicated region
        $region1070: #{tpu_custom_call.1} parent=892 // pred_check
          _
        $region1071: #{tpu_custom_call.1} parent=892 // pred_check_branch
          %1430 = sbr.rel (0) target = $region1073
        $region1072: #{tpu_custom_call.1} parent=892 // pred_region
          %1431 = vsyncadd [#allocation3], 16
        $region1073: #{tpu_custom_call.1} parent=892 // pred_fallthru
          _
        %s1432 = scalar_lea.vmem %s1, %s1146
        %s1433 = scalar_lea.vmem [#allocation2], 30
        // Predicated region
        $region1074: #{tpu_custom_call.1} parent=892 // pred_check
          _
        $region1075: #{tpu_custom_call.1} parent=892 // pred_check_branch
          %1435 = sbr.rel target = $region1077
        $region1076: #{tpu_custom_call.1} parent=892 // pred_region
          // Predicated region
          $region1089: #{tpu_custom_call.1} parent=1076 // pred_check
            _
          $region1090: #{tpu_custom_call.1} parent=1076 // pred_check_branch
            %1451 = sbr.rel (0) target = $region1092
          $region1091: #{tpu_custom_call.1} parent=1076 // pred_region
            %s1453 = ssub.s32 2, 1
            loop: start=0, step=1, limit=1
            $region1093: #{tpu_custom_call.1} parent=1091 // loop_pre_header
              _
            $region1094: #{tpu_custom_call.1} parent=1091 // loop_header
              %s1455 = sphi 0, %s1459
              %p1456 = scmp.ge.s32.totalorder %s1455, 1
              %s1460 = sphi %s1432, %s1432
              %s1461 = sphi %s1433, %s1433
            $region1095: #{tpu_custom_call.1} parent=1091 // loop_header_branch
              %1458 = sbr.rel (%p1456) target = $region1099
            $region1096: #{tpu_custom_call.1} parent=1091 // loop_body
              %v1462 = vld [vmem:[%s1460] sm:%s1453]
              %1463 = vst [vmem:[%s1461] sm:%s1453] %v1462
            $region1097: #{tpu_custom_call.1} parent=1091 // loop_footer
              %s1459 = sadd.s32 1, %s1455
            $region1098: #{tpu_custom_call.1} parent=1091 // loop_footer_branch
              %1454 = sbr.rel target = $region1094
            $region1099: #{tpu_custom_call.1} parent=1091 // loop_exit
              _
          $region1092: #{tpu_custom_call.1} parent=1076 // pred_fallthru
            _
        $region1077: #{tpu_custom_call.1} parent=892 // pred_fallthru
          _
        // Predicated region
        $region1078: #{tpu_custom_call.1} parent=892 // pred_check
          _
        $region1079: #{tpu_custom_call.1} parent=892 // pred_check_branch
          %1437 = sbr.rel (0) target = $region1081
        $region1080: #{tpu_custom_call.1} parent=892 // pred_region
          %s1439 = ssub.s32 2, 1
          loop: start=0, step=1, limit=1
          $region1082: #{tpu_custom_call.1} parent=1080 // loop_pre_header
            _
          $region1083: #{tpu_custom_call.1} parent=1080 // loop_header
            %s1441 = sphi 0, %s1445
            %p1442 = scmp.ge.s32.totalorder %s1441, 1
            %s1446 = sphi %s1432, %s1432
            %s1447 = sphi %s1433, %s1433
          $region1084: #{tpu_custom_call.1} parent=1080 // loop_header_branch
            %1444 = sbr.rel (%p1442) target = $region1088
          $region1085: #{tpu_custom_call.1} parent=1080 // loop_body
            %v1448 = vld [vmem:[%s1446] sm:%s1439]
            %1449 = vst [vmem:[%s1447] sm:%s1439] %v1448
          $region1086: #{tpu_custom_call.1} parent=1080 // loop_footer
            %s1445 = sadd.s32 1, %s1441
          $region1087: #{tpu_custom_call.1} parent=1080 // loop_footer_branch
            %1440 = sbr.rel target = $region1083
          $region1088: #{tpu_custom_call.1} parent=1080 // loop_exit
            _
        $region1081: #{tpu_custom_call.1} parent=892 // pred_fallthru
          _
        // Predicated region
        $region1100: #{tpu_custom_call.1} parent=892 // pred_check
          _
        $region1101: #{tpu_custom_call.1} parent=892 // pred_check_branch
          %1466 = sbr.rel (0) target = $region1103
        $region1102: #{tpu_custom_call.1} parent=892 // pred_region
          %1467 = vsyncadd [#allocation3], 16
        $region1103: #{tpu_custom_call.1} parent=892 // pred_fallthru
          _
        %s1468 = scalar_lea.vmem %s1, %s1148
        %s1469 = scalar_lea.vmem [#allocation2], 31
        // Predicated region
        $region1104: #{tpu_custom_call.1} parent=892 // pred_check
          _
        $region1105: #{tpu_custom_call.1} parent=892 // pred_check_branch
          %1471 = sbr.rel target = $region1107
        $region1106: #{tpu_custom_call.1} parent=892 // pred_region
          // Predicated region
          $region1119: #{tpu_custom_call.1} parent=1106 // pred_check
            _
          $region1120: #{tpu_custom_call.1} parent=1106 // pred_check_branch
            %1487 = sbr.rel (0) target = $region1122
          $region1121: #{tpu_custom_call.1} parent=1106 // pred_region
            %s1489 = ssub.s32 2, 1
            loop: start=0, step=1, limit=1
            $region1123: #{tpu_custom_call.1} parent=1121 // loop_pre_header
              _
            $region1124: #{tpu_custom_call.1} parent=1121 // loop_header
              %s1491 = sphi 0, %s1495
              %p1492 = scmp.ge.s32.totalorder %s1491, 1
              %s1496 = sphi %s1468, %s1468
              %s1497 = sphi %s1469, %s1469
            $region1125: #{tpu_custom_call.1} parent=1121 // loop_header_branch
              %1494 = sbr.rel (%p1492) target = $region1129
            $region1126: #{tpu_custom_call.1} parent=1121 // loop_body
              %v1498 = vld [vmem:[%s1496] sm:%s1489]
              %1499 = vst [vmem:[%s1497] sm:%s1489] %v1498
            $region1127: #{tpu_custom_call.1} parent=1121 // loop_footer
              %s1495 = sadd.s32 1, %s1491
            $region1128: #{tpu_custom_call.1} parent=1121 // loop_footer_branch
              %1490 = sbr.rel target = $region1124
            $region1129: #{tpu_custom_call.1} parent=1121 // loop_exit
              _
          $region1122: #{tpu_custom_call.1} parent=1106 // pred_fallthru
            _
        $region1107: #{tpu_custom_call.1} parent=892 // pred_fallthru
          _
        // Predicated region
        $region1108: #{tpu_custom_call.1} parent=892 // pred_check
          _
        $region1109: #{tpu_custom_call.1} parent=892 // pred_check_branch
          %1473 = sbr.rel (0) target = $region1111
        $region1110: #{tpu_custom_call.1} parent=892 // pred_region
          %s1475 = ssub.s32 2, 1
          loop: start=0, step=1, limit=1
          $region1112: #{tpu_custom_call.1} parent=1110 // loop_pre_header
            _
          $region1113: #{tpu_custom_call.1} parent=1110 // loop_header
            %s1477 = sphi 0, %s1481
            %p1478 = scmp.ge.s32.totalorder %s1477, 1
            %s1482 = sphi %s1468, %s1468
            %s1483 = sphi %s1469, %s1469
          $region1114: #{tpu_custom_call.1} parent=1110 // loop_header_branch
            %1480 = sbr.rel (%p1478) target = $region1118
          $region1115: #{tpu_custom_call.1} parent=1110 // loop_body
            %v1484 = vld [vmem:[%s1482] sm:%s1475]
            %1485 = vst [vmem:[%s1483] sm:%s1475] %v1484
          $region1116: #{tpu_custom_call.1} parent=1110 // loop_footer
            %s1481 = sadd.s32 1, %s1477
          $region1117: #{tpu_custom_call.1} parent=1110 // loop_footer_branch
            %1476 = sbr.rel target = $region1113
          $region1118: #{tpu_custom_call.1} parent=1110 // loop_exit
            _
        $region1111: #{tpu_custom_call.1} parent=892 // pred_fallthru
          _
        // Predicated region
        $region1130: #{tpu_custom_call.1} parent=892 // pred_check
          _
        $region1131: #{tpu_custom_call.1} parent=892 // pred_check_branch
          %1502 = sbr.rel (0) target = $region1133
        $region1132: #{tpu_custom_call.1} parent=892 // pred_region
          %1503 = vsyncadd [#allocation3], 16
        $region1133: #{tpu_custom_call.1} parent=892 // pred_fallthru
          _
      $region893: #{tpu_custom_call.1} parent=4 // pred_fallthru
        _
    $region5: #{tpu_custom_call.1} parent=1 // pred_fallthru
      _
    %s1504 = ssub.s32 0, 0
    %s1505 = ssub.s32 0, 0
    %p1506 = scmp.ne.s32.totalorder 0, 0
    %p1507 = scmp.lt.s32.totalorder 0, 0
    %p1508 = pnand %p1507, %p1506
    %p1509 = pneg %p1508
    %s1510 = sadd.s32 0, 3
    %s1511 = scalar_select %p1509, %s1510, 0
    %s1512 = smul.u32 %s1511, 32
    %s1513 = scalar_lea.sflag [#allocation3], %s1511
    %s1514 = smul.u32 32, 1
    %s1515 = sshll.u32 %s1514, 4
    %1516 = dma.done %s1513, %s1515
    %s1517 = scalar_lea.vmem [#allocation2], %s1512
    %v1518 = vld [vmem:[%s1517] sm:$0xff]
    %v1519 = vld [vmem:[%s1517 + $0x8] sm:$0xff]
    %v1520 = vld [vmem:[%s1517 + $0x10] sm:$0xff]
    %v1521 = vld [vmem:[%s1517 + $0x18] sm:$0xff]
    %vm1522 = vcmask 261120
    %1523 = vst.msk [vmem:[#allocation6] sm:$0xff] %vm1522, %v1518
    %1524 = vst.msk [vmem:[#allocation6 + $0x8] sm:$0xff] %vm1522, %v1519
    %1525 = vst.msk [vmem:[#allocation6 + $0x10] sm:$0xff] %vm1522, %v1520
    %1526 = vst.msk [vmem:[#allocation6 + $0x18] sm:$0xff] %vm1522, %v1521
    // Predicated region
    $region1134: #{tpu_custom_call.1} parent=1 // pred_check
      _
    $region1135: #{tpu_custom_call.1} parent=1 // pred_check_branch
      %1528 = sbr.rel (0) target = $region1137
    $region1136: #{tpu_custom_call.1} parent=1 // pred_region
      %s1529 = sadd.s32 0, 0
      %s1530 = smul.u32 4, %s1529
      %1532 = vsyncadd [#allocation7], 0
      %s1533 = smul.addr %s1530, 8
      %s1534 = scalar_lea.hbm %s2, %s1533
      %s1535 = sshll.u32 [#allocation6], 4
      %s1536 = int_to_ptr.vmem [resolvable:$true] %s1535
      %s1537 = sshll.u32 %s1534, 4
      %s1538 = int_to_ptr.hbm [resolvable:$true] %s1537
      %1543 = dma.vmem_to_hbm [thread:$0]  %s1536, 512, %s1538, [#allocation7], 128, 128, 8
    $region1137: #{tpu_custom_call.1} parent=1 // pred_fallthru
      _
    // Predicated region
    $region1138: #{tpu_custom_call.1} parent=1 // pred_check
      _
    $region1139: #{tpu_custom_call.1} parent=1 // pred_check_branch
      %1545 = sbr.rel (0) target = $region1141
    $region1140: #{tpu_custom_call.1} parent=1 // pred_region
      %1547 = dma.done [#allocation7], 512
    $region1141: #{tpu_custom_call.1} parent=1 // pred_fallthru
      _
    %1548 = vsyncpa [#allocation7], 1
  %1549 = vsyncmov [#allocation3]
  %s1550 = vpop.sfrf %1549
  %p1551 = scmp.eq.s32.totalorder %s1550, 0
  %p1552 = pneg %p1551
  %1554 = shalt.err (%p1552)
  %s1555 = scalar_lea.sflag [#allocation3], 1
  %1556 = vsyncmov %s1555
  %s1557 = vpop.sfrf %1556
  %p1558 = scmp.eq.s32.totalorder %s1557, 0
  %p1559 = pneg %p1558
  %1561 = shalt.err (%p1559)
  %s1562 = scalar_lea.sflag [#allocation3], 2
  %1563 = vsyncmov %s1562
  %s1564 = vpop.sfrf %1563
  %p1565 = scmp.eq.s32.totalorder %s1564, 0
  %p1566 = pneg %p1565
  %1568 = shalt.err (%p1566)

</llo_original>
